<compile_context>
chip_gen: v6e
topology: v6e:2x2x1
jax: 0.10.0
libtpu: 0.0.40
codegen_flags: <defaults>
</compile_context>

<pallas_src>
import numpy as np
import jax
import jax.numpy as jnp
from jax.experimental import pallas as pl
from jax.experimental.pallas import tpu as pltpu

# ----- scaled-down configuration (reference values in comments) -----
N = 2                 # batch
CIN = 3               # image channels
CIN_PAD = 8           # padded channels for the backbone-stub contraction
H = W = 12            # image spatial size (backbone stub keeps spatial size)
P = H * W
DIM = 32              # backbone output channels   (2048 for resnet50)
HID = 32              # projection hidden dim      (2048 in reference)
OUT = 16              # feature_dim                (128 in reference)
S = 3                 # num_grid
G = S * S
NG = N * G
NP = N * P
K = 512               # queue length               (65536 in reference); K % N == 0
KT = 128              # K tile; reference scale: v7x ~2048-4096, v6e/v5e ~8192-16384
KSTEPS = K // KT
T = 0.07
M_MOM = 0.999
LOSS_LAMBDA = 0.5
EPS = 1e-12           # F.normalize eps

# Per-generation VMEM budget: keep <= ~48 MiB so it is safe on v7x (64 MiB
# physical); on v6e/v5e (128 MiB physical) raise toward 64-96 MiB and use the
# larger K tiles noted above.
VMEM_LIMIT_BYTES = 48 * 1024 * 1024


# =====================================================================
# Fused kernel: both encoders + K-tiled online-logsumexp InfoNCE losses
# =====================================================================
def _densecl_kernel(*refs):
    f32 = jnp.float32
    bf16 = jnp.bfloat16
    inv_t = 1.0 / T

    imgq_ref, imgk_ref, pm_ref = refs[0:3]
    pq = refs[3:13]
    pk = refs[13:23]
    queue_ref, qdense_ref = refs[23:25]
    stats_ref, keys_ref = refs[25:27]
    (q_s, qg_s, k_s, k2_s, pos_g_s, pos_d_s,
     m_g_s, s_g_s, m_d_s, s_d_s) = refs[27:37]

    kstep = pl.program_id(0)
    dn_last = (((1,), (1,)), ((), ()))         # contract both operands' last dim

    def l2norm_rows(x):                        # F.normalize(., dim=channel), eps=1e-12
        ss = jnp.sum(x * x, axis=1, keepdims=True)
        return x * jax.lax.rsqrt(jnp.maximum(ss, EPS * EPS))   # EUP rsqrt

    def encode(img_ref, prm):
        wb, bb, w1, b1, w2, b2, wc1, bc1, wc2, bc2 = [r[...] for r in prm]
        # backbone stub: 1x1 conv + ReLU over all N*P positions at once.
        feat = jnp.maximum(
            jnp.dot(img_ref[...], wb, preferred_element_type=f32) + bb, 0.0)  # (NP, DIM)

        pm = pm_ref[...]                                                       # (G, P)
        pooled_rows, gvec_rows = [], []
        for n in range(N):                    # per-sample pooling: no O(N^2) constants
            feat_n = feat[n * P:(n + 1) * P, :]                                # (P, DIM)
            pooled_n = jnp.dot(pm, feat_n, preferred_element_type=f32)         # (G, DIM)
            pooled_rows.append(pooled_n)
            # global (1,1) avg pool == mean over the SxS cells (they partition P)
            gvec_rows.append(jnp.mean(pooled_n, axis=0, keepdims=True))        # (1, DIM)
        pooled = jnp.concatenate(pooled_rows, axis=0)                          # (NG, DIM)
        gvec = jnp.concatenate(gvec_rows, axis=0)                              # (N, DIM)

        # global branch: fc - relu - fc
        h = jnp.maximum(jnp.dot(gvec, w1, preferred_element_type=f32) + b1, 0.0)
        x1 = jnp.dot(h, w2, preferred_element_type=f32) + b2                   # (N, OUT)
        # dense branch: conv1x1 - relu - conv1x1 over all N*G grid cells
        hc = jnp.maximum(jnp.dot(pooled, wc1, preferred_element_type=f32) + bc1, 0.0)
        x2 = jnp.dot(hc, wc2, preferred_element_type=f32) + bc2                # (NG, OUT)

        # x3: AdaptiveAvgPool2d((1,1)) on the 3-D (N, OUT, G) view of x2 pools
        # over (channel, grid) -> one scalar per sample (literal spec semantics).
        x3_rows = []
        for n in range(N):
            x2_n = x2[n * G:(n + 1) * G, :]
            x3_rows.append(jnp.mean(jnp.mean(x2_n, axis=1, keepdims=True),
                                    axis=0, keepdims=True))                    # (1, 1)
        x3 = jnp.concatenate(x3_rows, axis=0)                                  # (N, 1)

        q1 = l2norm_rows(x1)                                                   # (N, OUT)
        qg = l2norm_rows(x2)                                                   # (NG, OUT)
        q2 = x3 * jax.lax.rsqrt(jnp.maximum(x3 * x3, EPS * EPS))               # == x3/max(|x3|,eps)
        return q1, qg, q2

    # ---- step 0: run both encoders once, init the online-logsumexp state ----
    @pl.when(kstep == 0)
    def _():
        q, q_grid, _ = encode(imgq_ref, pq)
        kv, k_grid, k2 = encode(imgk_ref, pk)

        pos_g = jnp.sum(q * kv, axis=1, keepdims=True) * inv_t                 # (N, 1)

        # dense positives: per-sample row-max of q_grid . k_grid^T (projected
        # features, exactly as in the spec code).
        pos_rows = []
        for n in range(N):
            qg_n = q_grid[n * G:(n + 1) * G, :]                                # (G, OUT)
            kg_n = k_grid[n * G:(n + 1) * G, :]                                # (G, OUT)
            sim_n = jax.lax.dot_general(qg_n, kg_n, dn_last,
                                        preferred_element_type=f32)            # (G, G)
            pos_rows.append(jnp.max(sim_n, axis=1, keepdims=True))             # (G, 1)
        pos_d = jnp.concatenate(pos_rows, axis=0) * inv_t                      # (NG, 1)

        q_s[...] = q
        qg_s[...] = q_grid
        k_s[...] = kv
        k2_s[...] = k2
        pos_g_s[...] = pos_g
        pos_d_s[...] = pos_d
        m_g_s[...] = pos_g                     # running max initialised with the positive
        s_g_s[...] = jnp.ones_like(pos_g)      # exp(pos - m) == 1
        m_d_s[...] = pos_d
        s_d_s[...] = jnp.ones_like(pos_d)

    # ---- every step: fold one (OUT, KT) bf16 queue tile into the online lse ----
    def online_update(m_ref, s_ref, neg):
        m_prev = m_ref[...]
        m_new = jnp.maximum(m_prev, jnp.max(neg, axis=1, keepdims=True))
        s_ref[...] = (s_ref[...] * jnp.exp(m_prev - m_new)
                      + jnp.sum(jnp.exp(neg - m_new), axis=1, keepdims=True))
        m_ref[...] = m_new

    neg_g = jnp.dot(q_s[...].astype(bf16), queue_ref[...],
                    preferred_element_type=f32) * inv_t                        # (N, KT)
    online_update(m_g_s, s_g_s, neg_g)
    neg_d = jnp.dot(qg_s[...].astype(bf16), qdense_ref[...],
                    preferred_element_type=f32) * inv_t                        # (NG, KT)
    online_update(m_d_s, s_d_s, neg_d)

    # ---- last step: finalise losses and pack lane-dense outputs ----
    @pl.when(kstep == pl.num_programs(0) - 1)
    def _():
        lse_g = m_g_s[...] + jnp.log(s_g_s[...])                               # (N, 1)
        loss_single = jnp.sum(lse_g - pos_g_s[...], axis=0, keepdims=True) * (1.0 / N)
        lse_d = m_d_s[...] + jnp.log(s_d_s[...])                               # (NG, 1)
        loss_dense = jnp.sum(lse_d - pos_d_s[...], axis=0, keepdims=True) * (1.0 / NG)
        loss = (1.0 - LOSS_LAMBDA) * loss_single + LOSS_LAMBDA * loss_dense    # (1, 1)

        # lane-dense loss slab: [loss, loss_single, loss_dense, 0, ...]
        lane = jax.lax.broadcasted_iota(jnp.int32, (1, 128), 1)
        stats_ref[...] = (jnp.where(lane == 0, loss, 0.0)
                          + jnp.where(lane == 1, loss_single, 0.0)
                          + jnp.where(lane == 2, loss_dense, 0.0))

        # key slab (OUT, 128): cols [0, N) = k.T ; cols [N, 2N) = broadcast(k2.T).
        # Transposes of the tiny (N, OUT)/(N, 1) values are done on the MXU via
        # an identity dot_general to avoid sub-tile XLU transposes.
        f32_ = jnp.float32
        eye = (jax.lax.broadcasted_iota(jnp.int32, (OUT, OUT), 0) ==
               jax.lax.broadcasted_iota(jnp.int32, (OUT, OUT), 1)).astype(f32_)
        kT = jax.lax.dot_general(eye, k_s[...], dn_last,
                                 preferred_element_type=f32_)                  # (OUT, N) == k.T
        k2_rep = jnp.broadcast_to(k2_s[...], (N, OUT))                         # row n == k2[n]
        k2b = jax.lax.dot_general(eye, k2_rep, dn_last,
                                  preferred_element_type=f32_)                 # (OUT, N)
        keys_ref[...] = jnp.zeros((OUT, 128), f32_)
        keys_ref[:, 0:N] = kT
        keys_ref[:, N:2 * N] = k2b


def densecl_fused_call(img_q_flat, img_k_flat, pm, params_q, params_k,
                       queue, queue_dense):
    const2d = lambda shape: pl.BlockSpec(shape, lambda k: (0, 0))
    in_specs = ([const2d(img_q_flat.shape), const2d(img_k_flat.shape), const2d(pm.shape)]
                + [const2d(p.shape) for p in params_q]
                + [const2d(p.shape) for p in params_k]
                + [pl.BlockSpec((OUT, KT), lambda k: (0, k)),    # queue tiles (bf16)
                   pl.BlockSpec((OUT, KT), lambda k: (0, k))])   # queue_dense tiles (bf16)

    grid_spec = pltpu.PrefetchScalarGridSpec(
        num_scalar_prefetch=0,
        grid=(KSTEPS,),                        # reduction over queue tiles
        in_specs=in_specs,
        out_specs=[pl.BlockSpec((1, 128), lambda k: (0, 0)),      # losses (lane-dense)
                   pl.BlockSpec((OUT, 128), lambda k: (0, 0))],   # k.T / k2 slab
        scratch_shapes=[
            pltpu.VMEM((N, OUT), jnp.float32),     # q
            pltpu.VMEM((NG, OUT), jnp.float32),    # q_grid
            pltpu.VMEM((N, OUT), jnp.float32),     # k
            pltpu.VMEM((N, 1), jnp.float32),       # k2
            pltpu.VMEM((N, 1), jnp.float32),       # pos / T   (global)
            pltpu.VMEM((NG, 1), jnp.float32),      # pos / T   (dense)
            pltpu.VMEM((N, 1), jnp.float32),       # running max (global)
            pltpu.VMEM((N, 1), jnp.float32),       # running sum (global)
            pltpu.VMEM((NG, 1), jnp.float32),      # running max (dense)
            pltpu.VMEM((NG, 1), jnp.float32),      # running sum (dense)
        ])

    stats, keys = pl.pallas_call(
        _densecl_kernel,
        out_shape=(jax.ShapeDtypeStruct((1, 128), jnp.float32),
                   jax.ShapeDtypeStruct((OUT, 128), jnp.float32)),
        grid_spec=grid_spec,
        compiler_params=pltpu.CompilerParams(
            dimension_semantics=("arbitrary",),     # K is a reduction axis
            vmem_limit_bytes=VMEM_LIMIT_BYTES),
    )(img_q_flat, img_k_flat, pm, *params_q, *params_k, queue, queue_dense)
    return stats, keys


# =====================================================================
# DenseCL forward (glue: layout, EMA, queue updates)
# =====================================================================
def densecl_forward(img_q, img_k, params_q, params_k, queue, queue_dense,
                    queue_ptr, queue_dense_ptr, pm):
    def flatten_img(x):
        # NCHW -> (N*H*W, CIN), then zero-pad channels to CIN_PAD so the
        # backbone-stub matmul is not a Kc=3 contraction.
        x = jnp.transpose(x, (0, 2, 3, 1)).reshape(NP, CIN)
        return jnp.pad(x, ((0, 0), (0, CIN_PAD - CIN)))

    # momentum (EMA) update of the key encoder; params_k is donated by jit.
    # TODO(synk): fuse into the kernel via input_output_aliases at reference scale.
    params_k = tuple(M_MOM * pk + (1.0 - M_MOM) * pq
                     for pq, pk in zip(params_q, params_k))

    stats, keys = densecl_fused_call(flatten_img(img_q), flatten_img(img_k), pm,
                                     params_q, params_k, queue, queue_dense)

    loss = stats[0, 0]
    loss_s = stats[0, 1]
    loss_d = stats[0, 2]

    # _dequeue_and_enqueue: the key slab already holds k.T and broadcast(k2.T).
    kT = keys[:, :N].astype(queue.dtype)                  # (OUT, N)
    k2b = keys[:, N:2 * N].astype(queue_dense.dtype)      # (OUT, N)
    new_queue = jax.lax.dynamic_update_slice(queue, kT, (jnp.int32(0), queue_ptr))
    new_ptr = (queue_ptr + N) % K
    new_queue_dense = jax.lax.dynamic_update_slice(
        queue_dense, k2b, (jnp.int32(0), queue_dense_ptr))
    new_dense_ptr = (queue_dense_ptr + N) % K

    out = {'loss': loss,
           'loss_contra_single': loss_s,
           'loss_contra_dense': loss_d}
    state = (params_k, new_queue, new_queue_dense, new_ptr, new_dense_ptr)
    return out, state


# =====================================================================
# Deterministic parameter / constant construction
# =====================================================================
def make_pool_constant():
    """Single per-sample (G, P) adaptive avg-pool matrix (S x S cells)."""
    bh, bw = H // S, W // S
    pm = np.zeros((G, P), np.float32)
    for gi in range(S):
        for gj in range(S):
            g = gi * S + gj
            for hh in range(gi * bh, (gi + 1) * bh):
                for ww in range(gj * bw, (gj + 1) * bw):
                    pm[g, hh * W + ww] = 1.0 / (bh * bw)
    return jnp.asarray(pm)


def init_params(key):
    ks = jax.random.split(key, 10)
    nrm = lambda k, shape, s=0.1: (s * jax.random.normal(k, shape)).astype(jnp.float32)
    # backbone-stub weight is allocated at the padded channel count; the padded
    # image channels are zero so the extra rows are inert.
    return (nrm(ks[0], (CIN_PAD, DIM)), nrm(ks[1], (1, DIM), 0.01),   # backbone stub
            nrm(ks[2], (DIM, HID)), nrm(ks[3], (1, HID), 0.01),       # mlp fc1
            nrm(ks[4], (HID, OUT)), nrm(ks[5], (1, OUT), 0.01),       # mlp fc2
            nrm(ks[6], (DIM, HID)), nrm(ks[7], (1, HID), 0.01),       # mlp_conv 1x1 #1
            nrm(ks[8], (HID, OUT)), nrm(ks[9], (1, OUT), 0.01))       # mlp_conv 1x1 #2


if __name__ == "__main__":
    assert H % S == 0 and W % S == 0 and K % N == 0 and K % KT == 0

    root = jax.random.PRNGKey(0)
    k_imgq, k_imgk, k_par, k_q1, k_q2 = jax.random.split(root, 5)

    img_q = jax.random.normal(k_imgq, (N, CIN, H, W), jnp.float32)   # NCHW, as in PyTorch
    img_k = jax.random.normal(k_imgk, (N, CIN, H, W), jnp.float32)

    params_q = init_params(k_par)
    # param_k.data.copy_(param_q.data) (distinct buffers so they can be donated)
    params_k = tuple(jnp.array(p, copy=True) for p in params_q)

    def norm_cols(x):
        return x / jnp.maximum(jnp.linalg.norm(x, axis=0, keepdims=True), EPS)

    # queues stored in bf16 (halves HBM->VMEM traffic; MXU operands are bf16).
    queue = norm_cols(jax.random.normal(k_q1, (OUT, K), jnp.float32)).astype(jnp.bfloat16)
    queue_dense = norm_cols(jax.random.normal(k_q2, (OUT, K), jnp.float32)).astype(jnp.bfloat16)

    pm = make_pool_constant()

    # donate params_k / queue / queue_dense -> EMA and queue writes are in place
    fwd = jax.jit(densecl_forward, donate_argnums=(3, 4, 5))
    out, state = fwd(img_q, img_k, params_q, params_k, queue, queue_dense,
                     jnp.int32(0), jnp.int32(0), pm)
    jax.block_until_ready(out['loss'])
    assert bool(jnp.isfinite(out['loss']))
    print("KERNEL_OK")
</pallas_src>

<mosaic_0001>
module attributes {stable_mosaic.version = 11 : i64} {
  func.func @_densecl_kernel(%arg0: i32, %arg1: memref<288x8xf32, #tpu.memory_space<vmem>>, %arg2: memref<288x8xf32, #tpu.memory_space<vmem>>, %arg3: memref<9x144xf32, #tpu.memory_space<vmem>>, %arg4: memref<8x32xf32, #tpu.memory_space<vmem>>, %arg5: memref<1x32xf32, #tpu.memory_space<vmem>>, %arg6: memref<32x32xf32, #tpu.memory_space<vmem>>, %arg7: memref<1x32xf32, #tpu.memory_space<vmem>>, %arg8: memref<32x16xf32, #tpu.memory_space<vmem>>, %arg9: memref<1x16xf32, #tpu.memory_space<vmem>>, %arg10: memref<32x32xf32, #tpu.memory_space<vmem>>, %arg11: memref<1x32xf32, #tpu.memory_space<vmem>>, %arg12: memref<32x16xf32, #tpu.memory_space<vmem>>, %arg13: memref<1x16xf32, #tpu.memory_space<vmem>>, %arg14: memref<8x32xf32, #tpu.memory_space<vmem>>, %arg15: memref<1x32xf32, #tpu.memory_space<vmem>>, %arg16: memref<32x32xf32, #tpu.memory_space<vmem>>, %arg17: memref<1x32xf32, #tpu.memory_space<vmem>>, %arg18: memref<32x16xf32, #tpu.memory_space<vmem>>, %arg19: memref<1x16xf32, #tpu.memory_space<vmem>>, %arg20: memref<32x32xf32, #tpu.memory_space<vmem>>, %arg21: memref<1x32xf32, #tpu.memory_space<vmem>>, %arg22: memref<32x16xf32, #tpu.memory_space<vmem>>, %arg23: memref<1x16xf32, #tpu.memory_space<vmem>>, %arg24: memref<16x128xbf16, #tpu.memory_space<vmem>>, %arg25: memref<16x128xbf16, #tpu.memory_space<vmem>>, %arg26: memref<1x128xf32, #tpu.memory_space<vmem>>, %arg27: memref<16x128xf32, #tpu.memory_space<vmem>>, %arg28: memref<2x16xf32, #tpu.memory_space<vmem>>, %arg29: memref<18x16xf32, #tpu.memory_space<vmem>>, %arg30: memref<2x16xf32, #tpu.memory_space<vmem>>, %arg31: memref<2x1xf32, #tpu.memory_space<vmem>>, %arg32: memref<2x1xf32, #tpu.memory_space<vmem>>, %arg33: memref<18x1xf32, #tpu.memory_space<vmem>>, %arg34: memref<2x1xf32, #tpu.memory_space<vmem>>, %arg35: memref<2x1xf32, #tpu.memory_space<vmem>>, %arg36: memref<18x1xf32, #tpu.memory_space<vmem>>, %arg37: memref<18x1xf32, #tpu.memory_space<vmem>>) attributes {dimension_semantics = [#tpu.dimension_semantics<arbitrary>], iteration_bounds = array<i64: 4>, scalar_prefetch = 0 : i64, scratch_operands = 10 : i64, tpu.core_type = #tpu.core_type<tc>, window_params = [{pipeline_mode = #tpu.pipeline_mode<synchronous>, transform_indices = @transform_0, window_bounds = array<i64: 288, 8>}, {pipeline_mode = #tpu.pipeline_mode<synchronous>, transform_indices = @transform_1, window_bounds = array<i64: 288, 8>}, {pipeline_mode = #tpu.pipeline_mode<synchronous>, transform_indices = @transform_2, window_bounds = array<i64: 9, 144>}, {pipeline_mode = #tpu.pipeline_mode<synchronous>, transform_indices = @transform_3, window_bounds = array<i64: 8, 32>}, {pipeline_mode = #tpu.pipeline_mode<synchronous>, transform_indices = @transform_4, window_bounds = array<i64: 1, 32>}, {pipeline_mode = #tpu.pipeline_mode<synchronous>, transform_indices = @transform_5, window_bounds = array<i64: 32, 32>}, {pipeline_mode = #tpu.pipeline_mode<synchronous>, transform_indices = @transform_6, window_bounds = array<i64: 1, 32>}, {pipeline_mode = #tpu.pipeline_mode<synchronous>, transform_indices = @transform_7, window_bounds = array<i64: 32, 16>}, {pipeline_mode = #tpu.pipeline_mode<synchronous>, transform_indices = @transform_8, window_bounds = array<i64: 1, 16>}, {pipeline_mode = #tpu.pipeline_mode<synchronous>, transform_indices = @transform_9, window_bounds = array<i64: 32, 32>}, {pipeline_mode = #tpu.pipeline_mode<synchronous>, transform_indices = @transform_10, window_bounds = array<i64: 1, 32>}, {pipeline_mode = #tpu.pipeline_mode<synchronous>, transform_indices = @transform_11, window_bounds = array<i64: 32, 16>}, {pipeline_mode = #tpu.pipeline_mode<synchronous>, transform_indices = @transform_12, window_bounds = array<i64: 1, 16>}, {pipeline_mode = #tpu.pipeline_mode<synchronous>, transform_indices = @transform_13, window_bounds = array<i64: 8, 32>}, {pipeline_mode = #tpu.pipeline_mode<synchronous>, transform_indices = @transform_14, window_bounds = array<i64: 1, 32>}, {pipeline_mode = #tpu.pipeline_mode<synchronous>, transform_indices = @transform_15, window_bounds = array<i64: 32, 32>}, {pipeline_mode = #tpu.pipeline_mode<synchronous>, transform_indices = @transform_16, window_bounds = array<i64: 1, 32>}, {pipeline_mode = #tpu.pipeline_mode<synchronous>, transform_indices = @transform_17, window_bounds = array<i64: 32, 16>}, {pipeline_mode = #tpu.pipeline_mode<synchronous>, transform_indices = @transform_18, window_bounds = array<i64: 1, 16>}, {pipeline_mode = #tpu.pipeline_mode<synchronous>, transform_indices = @transform_19, window_bounds = array<i64: 32, 32>}, {pipeline_mode = #tpu.pipeline_mode<synchronous>, transform_indices = @transform_20, window_bounds = array<i64: 1, 32>}, {pipeline_mode = #tpu.pipeline_mode<synchronous>, transform_indices = @transform_21, window_bounds = array<i64: 32, 16>}, {pipeline_mode = #tpu.pipeline_mode<synchronous>, transform_indices = @transform_22, window_bounds = array<i64: 1, 16>}, {transform_indices = @transform_23, window_bounds = array<i64: 16, 128>}, {transform_indices = @transform_24, window_bounds = array<i64: 16, 128>}, {pipeline_mode = #tpu.pipeline_mode<synchronous>, transform_indices = @transform_25, window_bounds = array<i64: 1, 128>}, {pipeline_mode = #tpu.pipeline_mode<synchronous>, transform_indices = @transform_26, window_bounds = array<i64: 16, 128>}]} {
    %c0_i32 = arith.constant 0 : i32
    %0 = arith.cmpi eq, %arg0, %c0_i32 : i32
    %1 = arith.extui %0 : i1 to i32
    %c0_i32_0 = arith.constant 0 : i32
    %2 = arith.cmpi ne, %1, %c0_i32_0 : i32
    scf.if %2 {
      %c0_32 = arith.constant 0 : index
      %c0_33 = arith.constant 0 : index
      %50 = vector.load %arg4[%c0_32, %c0_33] : memref<8x32xf32, #tpu.memory_space<vmem>>, vector<8x32xf32>
      %c0_34 = arith.constant 0 : index
      %c0_35 = arith.constant 0 : index
      %51 = vector.load %arg5[%c0_34, %c0_35] : memref<1x32xf32, #tpu.memory_space<vmem>>, vector<1x32xf32>
      %c0_36 = arith.constant 0 : index
      %c0_37 = arith.constant 0 : index
      %52 = vector.load %arg6[%c0_36, %c0_37] : memref<32x32xf32, #tpu.memory_space<vmem>>, vector<32x32xf32>
      %c0_38 = arith.constant 0 : index
      %c0_39 = arith.constant 0 : index
      %53 = vector.load %arg7[%c0_38, %c0_39] : memref<1x32xf32, #tpu.memory_space<vmem>>, vector<1x32xf32>
      %c0_40 = arith.constant 0 : index
      %c0_41 = arith.constant 0 : index
      %54 = vector.load %arg8[%c0_40, %c0_41] : memref<32x16xf32, #tpu.memory_space<vmem>>, vector<32x16xf32>
      %c0_42 = arith.constant 0 : index
      %c0_43 = arith.constant 0 : index
      %55 = vector.load %arg9[%c0_42, %c0_43] : memref<1x16xf32, #tpu.memory_space<vmem>>, vector<1x16xf32>
      %c0_44 = arith.constant 0 : index
      %c0_45 = arith.constant 0 : index
      %56 = vector.load %arg10[%c0_44, %c0_45] : memref<32x32xf32, #tpu.memory_space<vmem>>, vector<32x32xf32>
      %c0_46 = arith.constant 0 : index
      %c0_47 = arith.constant 0 : index
      %57 = vector.load %arg11[%c0_46, %c0_47] : memref<1x32xf32, #tpu.memory_space<vmem>>, vector<1x32xf32>
      %c0_48 = arith.constant 0 : index
      %c0_49 = arith.constant 0 : index
      %58 = vector.load %arg12[%c0_48, %c0_49] : memref<32x16xf32, #tpu.memory_space<vmem>>, vector<32x16xf32>
      %c0_50 = arith.constant 0 : index
      %c0_51 = arith.constant 0 : index
      %59 = vector.load %arg13[%c0_50, %c0_51] : memref<1x16xf32, #tpu.memory_space<vmem>>, vector<1x16xf32>
      %c0_52 = arith.constant 0 : index
      %c0_53 = arith.constant 0 : index
      %60 = vector.load %arg1[%c0_52, %c0_53] : memref<288x8xf32, #tpu.memory_space<vmem>>, vector<288x8xf32>
      %cst_54 = arith.constant dense<0.000000e+00> : vector<288x32xf32>
      %61 = tpu.matmul %60, %50, %cst_54 {dimension_numbers = #tpu.dot_dimension_numbers<[1], [0], [0], [1], [0, 0, 1, 1], [], []>} : vector<288x8xf32>, vector<8x32xf32>, vector<288x32xf32> -> vector<288x32xf32>
      %62 = vector.broadcast %51 : vector<1x32xf32> to vector<288x32xf32>
      %63 = arith.addf %61, %62 : vector<288x32xf32>
      %cst_55 = arith.constant 0.000000e+00 : f32
      %64 = vector.broadcast %cst_55 : f32 to vector<288x32xf32>
      %65 = arith.maximumf %63, %64 : vector<288x32xf32>
      %c0_56 = arith.constant 0 : index
      %c0_57 = arith.constant 0 : index
      %66 = vector.load %arg3[%c0_56, %c0_57] : memref<9x144xf32, #tpu.memory_space<vmem>>, vector<9x144xf32>
      %67 = vector.extract_strided_slice %65 {offsets = [0, 0], sizes = [144, 32], strides = [1, 1]} : vector<288x32xf32> to vector<144x32xf32>
      %cst_58 = arith.constant dense<0.000000e+00> : vector<9x32xf32>
      %68 = tpu.matmul %66, %67, %cst_58 {dimension_numbers = #tpu.dot_dimension_numbers<[1], [0], [0], [1], [0, 0, 1, 1], [], []>} : vector<9x144xf32>, vector<144x32xf32>, vector<9x32xf32> -> vector<9x32xf32>
      %cst_59 = arith.constant dense<0.000000e+00> : vector<32xf32>
      %69 = vector.multi_reduction <add>, %68, %cst_59 [0] : vector<9x32xf32> to vector<32xf32>
      %70 = vector.shape_cast %69 : vector<32xf32> to vector<1x32xf32>
      %cst_60 = arith.constant 9.000000e+00 : f32
      %71 = vector.broadcast %cst_60 : f32 to vector<1x32xf32>
      %72 = arith.divf %70, %71 : vector<1x32xf32>
      %73 = vector.extract_strided_slice %65 {offsets = [144, 0], sizes = [144, 32], strides = [1, 1]} : vector<288x32xf32> to vector<144x32xf32>
      %cst_61 = arith.constant dense<0.000000e+00> : vector<9x32xf32>
      %74 = tpu.matmul %66, %73, %cst_61 {dimension_numbers = #tpu.dot_dimension_numbers<[1], [0], [0], [1], [0, 0, 1, 1], [], []>} : vector<9x144xf32>, vector<144x32xf32>, vector<9x32xf32> -> vector<9x32xf32>
      %cst_62 = arith.constant dense<0.000000e+00> : vector<32xf32>
      %75 = vector.multi_reduction <add>, %74, %cst_62 [0] : vector<9x32xf32> to vector<32xf32>
      %76 = vector.shape_cast %75 : vector<32xf32> to vector<1x32xf32>
      %cst_63 = arith.constant 9.000000e+00 : f32
      %77 = vector.broadcast %cst_63 : f32 to vector<1x32xf32>
      %78 = arith.divf %76, %77 : vector<1x32xf32>
      %79 = tpu.concatenate %68, %74 in 0 : vector<9x32xf32>, vector<9x32xf32> -> vector<18x32xf32>
      %80 = tpu.concatenate %72, %78 in 0 : vector<1x32xf32>, vector<1x32xf32> -> vector<2x32xf32>
      %cst_64 = arith.constant dense<0.000000e+00> : vector<2x32xf32>
      %81 = tpu.matmul %80, %52, %cst_64 {dimension_numbers = #tpu.dot_dimension_numbers<[1], [0], [0], [1], [0, 0, 1, 1], [], []>} : vector<2x32xf32>, vector<32x32xf32>, vector<2x32xf32> -> vector<2x32xf32>
      %82 = vector.broadcast %53 : vector<1x32xf32> to vector<2x32xf32>
      %83 = arith.addf %81, %82 : vector<2x32xf32>
      %cst_65 = arith.constant 0.000000e+00 : f32
      %84 = vector.broadcast %cst_65 : f32 to vector<2x32xf32>
      %85 = arith.maximumf %83, %84 : vector<2x32xf32>
      %cst_66 = arith.constant dense<0.000000e+00> : vector<2x16xf32>
      %86 = tpu.matmul %85, %54, %cst_66 {dimension_numbers = #tpu.dot_dimension_numbers<[1], [0], [0], [1], [0, 0, 1, 1], [], []>} : vector<2x32xf32>, vector<32x16xf32>, vector<2x16xf32> -> vector<2x16xf32>
      %87 = vector.broadcast %55 : vector<1x16xf32> to vector<2x16xf32>
      %88 = arith.addf %86, %87 : vector<2x16xf32>
      %cst_67 = arith.constant dense<0.000000e+00> : vector<18x32xf32>
      %89 = tpu.matmul %79, %56, %cst_67 {dimension_numbers = #tpu.dot_dimension_numbers<[1], [0], [0], [1], [0, 0, 1, 1], [], []>} : vector<18x32xf32>, vector<32x32xf32>, vector<18x32xf32> -> vector<18x32xf32>
      %90 = vector.broadcast %57 : vector<1x32xf32> to vector<18x32xf32>
      %91 = arith.addf %89, %90 : vector<18x32xf32>
      %cst_68 = arith.constant 0.000000e+00 : f32
      %92 = vector.broadcast %cst_68 : f32 to vector<18x32xf32>
      %93 = arith.maximumf %91, %92 : vector<18x32xf32>
      %cst_69 = arith.constant dense<0.000000e+00> : vector<18x16xf32>
      %94 = tpu.matmul %93, %58, %cst_69 {dimension_numbers = #tpu.dot_dimension_numbers<[1], [0], [0], [1], [0, 0, 1, 1], [], []>} : vector<18x32xf32>, vector<32x16xf32>, vector<18x16xf32> -> vector<18x16xf32>
      %95 = vector.broadcast %59 : vector<1x16xf32> to vector<18x16xf32>
      %96 = arith.addf %94, %95 : vector<18x16xf32>
      %97 = arith.mulf %88, %88 : vector<2x16xf32>
      %cst_70 = arith.constant dense<0.000000e+00> : vector<2xf32>
      %98 = vector.multi_reduction <add>, %97, %cst_70 [1] : vector<2x16xf32> to vector<2xf32>
      %99 = vector.shape_cast %98 : vector<2xf32> to vector<2x1xf32>
      %cst_71 = arith.constant 1.000000e-24 : f32
      %100 = vector.broadcast %cst_71 : f32 to vector<2x1xf32>
      %101 = arith.maximumf %99, %100 : vector<2x1xf32>
      %102 = math.rsqrt %101 : vector<2x1xf32>
      %103 = vector.broadcast %102 : vector<2x1xf32> to vector<2x16xf32>
      %104 = arith.mulf %88, %103 : vector<2x16xf32>
      %105 = arith.mulf %96, %96 : vector<18x16xf32>
      %cst_72 = arith.constant dense<0.000000e+00> : vector<18xf32>
      %106 = vector.multi_reduction <add>, %105, %cst_72 [1] : vector<18x16xf32> to vector<18xf32>
      %107 = vector.shape_cast %106 : vector<18xf32> to vector<18x1xf32>
      %cst_73 = arith.constant 1.000000e-24 : f32
      %108 = vector.broadcast %cst_73 : f32 to vector<18x1xf32>
      %109 = arith.maximumf %107, %108 : vector<18x1xf32>
      %110 = math.rsqrt %109 : vector<18x1xf32>
      %111 = vector.broadcast %110 : vector<18x1xf32> to vector<18x16xf32>
      %112 = arith.mulf %96, %111 : vector<18x16xf32>
      %c0_74 = arith.constant 0 : index
      %c0_75 = arith.constant 0 : index
      %113 = vector.load %arg14[%c0_74, %c0_75] : memref<8x32xf32, #tpu.memory_space<vmem>>, vector<8x32xf32>
      %c0_76 = arith.constant 0 : index
      %c0_77 = arith.constant 0 : index
      %114 = vector.load %arg15[%c0_76, %c0_77] : memref<1x32xf32, #tpu.memory_space<vmem>>, vector<1x32xf32>
      %c0_78 = arith.constant 0 : index
      %c0_79 = arith.constant 0 : index
      %115 = vector.load %arg16[%c0_78, %c0_79] : memref<32x32xf32, #tpu.memory_space<vmem>>, vector<32x32xf32>
      %c0_80 = arith.constant 0 : index
      %c0_81 = arith.constant 0 : index
      %116 = vector.load %arg17[%c0_80, %c0_81] : memref<1x32xf32, #tpu.memory_space<vmem>>, vector<1x32xf32>
      %c0_82 = arith.constant 0 : index
      %c0_83 = arith.constant 0 : index
      %117 = vector.load %arg18[%c0_82, %c0_83] : memref<32x16xf32, #tpu.memory_space<vmem>>, vector<32x16xf32>
      %c0_84 = arith.constant 0 : index
      %c0_85 = arith.constant 0 : index
      %118 = vector.load %arg19[%c0_84, %c0_85] : memref<1x16xf32, #tpu.memory_space<vmem>>, vector<1x16xf32>
      %c0_86 = arith.constant 0 : index
      %c0_87 = arith.constant 0 : index
      %119 = vector.load %arg20[%c0_86, %c0_87] : memref<32x32xf32, #tpu.memory_space<vmem>>, vector<32x32xf32>
      %c0_88 = arith.constant 0 : index
      %c0_89 = arith.constant 0 : index
      %120 = vector.load %arg21[%c0_88, %c0_89] : memref<1x32xf32, #tpu.memory_space<vmem>>, vector<1x32xf32>
      %c0_90 = arith.constant 0 : index
      %c0_91 = arith.constant 0 : index
      %121 = vector.load %arg22[%c0_90, %c0_91] : memref<32x16xf32, #tpu.memory_space<vmem>>, vector<32x16xf32>
      %c0_92 = arith.constant 0 : index
      %c0_93 = arith.constant 0 : index
      %122 = vector.load %arg23[%c0_92, %c0_93] : memref<1x16xf32, #tpu.memory_space<vmem>>, vector<1x16xf32>
      %c0_94 = arith.constant 0 : index
      %c0_95 = arith.constant 0 : index
      %123 = vector.load %arg2[%c0_94, %c0_95] : memref<288x8xf32, #tpu.memory_space<vmem>>, vector<288x8xf32>
      %cst_96 = arith.constant dense<0.000000e+00> : vector<288x32xf32>
      %124 = tpu.matmul %123, %113, %cst_96 {dimension_numbers = #tpu.dot_dimension_numbers<[1], [0], [0], [1], [0, 0, 1, 1], [], []>} : vector<288x8xf32>, vector<8x32xf32>, vector<288x32xf32> -> vector<288x32xf32>
      %125 = vector.broadcast %114 : vector<1x32xf32> to vector<288x32xf32>
      %126 = arith.addf %124, %125 : vector<288x32xf32>
      %cst_97 = arith.constant 0.000000e+00 : f32
      %127 = vector.broadcast %cst_97 : f32 to vector<288x32xf32>
      %128 = arith.maximumf %126, %127 : vector<288x32xf32>
      %c0_98 = arith.constant 0 : index
      %c0_99 = arith.constant 0 : index
      %129 = vector.load %arg3[%c0_98, %c0_99] : memref<9x144xf32, #tpu.memory_space<vmem>>, vector<9x144xf32>
      %130 = vector.extract_strided_slice %128 {offsets = [0, 0], sizes = [144, 32], strides = [1, 1]} : vector<288x32xf32> to vector<144x32xf32>
      %cst_100 = arith.constant dense<0.000000e+00> : vector<9x32xf32>
      %131 = tpu.matmul %129, %130, %cst_100 {dimension_numbers = #tpu.dot_dimension_numbers<[1], [0], [0], [1], [0, 0, 1, 1], [], []>} : vector<9x144xf32>, vector<144x32xf32>, vector<9x32xf32> -> vector<9x32xf32>
      %cst_101 = arith.constant dense<0.000000e+00> : vector<32xf32>
      %132 = vector.multi_reduction <add>, %131, %cst_101 [0] : vector<9x32xf32> to vector<32xf32>
      %133 = vector.shape_cast %132 : vector<32xf32> to vector<1x32xf32>
      %cst_102 = arith.constant 9.000000e+00 : f32
      %134 = vector.broadcast %cst_102 : f32 to vector<1x32xf32>
      %135 = arith.divf %133, %134 : vector<1x32xf32>
      %136 = vector.extract_strided_slice %128 {offsets = [144, 0], sizes = [144, 32], strides = [1, 1]} : vector<288x32xf32> to vector<144x32xf32>
      %cst_103 = arith.constant dense<0.000000e+00> : vector<9x32xf32>
      %137 = tpu.matmul %129, %136, %cst_103 {dimension_numbers = #tpu.dot_dimension_numbers<[1], [0], [0], [1], [0, 0, 1, 1], [], []>} : vector<9x144xf32>, vector<144x32xf32>, vector<9x32xf32> -> vector<9x32xf32>
      %cst_104 = arith.constant dense<0.000000e+00> : vector<32xf32>
      %138 = vector.multi_reduction <add>, %137, %cst_104 [0] : vector<9x32xf32> to vector<32xf32>
      %139 = vector.shape_cast %138 : vector<32xf32> to vector<1x32xf32>
      %cst_105 = arith.constant 9.000000e+00 : f32
      %140 = vector.broadcast %cst_105 : f32 to vector<1x32xf32>
      %141 = arith.divf %139, %140 : vector<1x32xf32>
      %142 = tpu.concatenate %131, %137 in 0 : vector<9x32xf32>, vector<9x32xf32> -> vector<18x32xf32>
      %143 = tpu.concatenate %135, %141 in 0 : vector<1x32xf32>, vector<1x32xf32> -> vector<2x32xf32>
      %cst_106 = arith.constant dense<0.000000e+00> : vector<2x32xf32>
      %144 = tpu.matmul %143, %115, %cst_106 {dimension_numbers = #tpu.dot_dimension_numbers<[1], [0], [0], [1], [0, 0, 1, 1], [], []>} : vector<2x32xf32>, vector<32x32xf32>, vector<2x32xf32> -> vector<2x32xf32>
      %145 = vector.broadcast %116 : vector<1x32xf32> to vector<2x32xf32>
      %146 = arith.addf %144, %145 : vector<2x32xf32>
      %cst_107 = arith.constant 0.000000e+00 : f32
      %147 = vector.broadcast %cst_107 : f32 to vector<2x32xf32>
      %148 = arith.maximumf %146, %147 : vector<2x32xf32>
      %cst_108 = arith.constant dense<0.000000e+00> : vector<2x16xf32>
      %149 = tpu.matmul %148, %117, %cst_108 {dimension_numbers = #tpu.dot_dimension_numbers<[1], [0], [0], [1], [0, 0, 1, 1], [], []>} : vector<2x32xf32>, vector<32x16xf32>, vector<2x16xf32> -> vector<2x16xf32>
      %150 = vector.broadcast %118 : vector<1x16xf32> to vector<2x16xf32>
      %151 = arith.addf %149, %150 : vector<2x16xf32>
      %cst_109 = arith.constant dense<0.000000e+00> : vector<18x32xf32>
      %152 = tpu.matmul %142, %119, %cst_109 {dimension_numbers = #tpu.dot_dimension_numbers<[1], [0], [0], [1], [0, 0, 1, 1], [], []>} : vector<18x32xf32>, vector<32x32xf32>, vector<18x32xf32> -> vector<18x32xf32>
      %153 = vector.broadcast %120 : vector<1x32xf32> to vector<18x32xf32>
      %154 = arith.addf %152, %153 : vector<18x32xf32>
      %cst_110 = arith.constant 0.000000e+00 : f32
      %155 = vector.broadcast %cst_110 : f32 to vector<18x32xf32>
      %156 = arith.maximumf %154, %155 : vector<18x32xf32>
      %cst_111 = arith.constant dense<0.000000e+00> : vector<18x16xf32>
      %157 = tpu.matmul %156, %121, %cst_111 {dimension_numbers = #tpu.dot_dimension_numbers<[1], [0], [0], [1], [0, 0, 1, 1], [], []>} : vector<18x32xf32>, vector<32x16xf32>, vector<18x16xf32> -> vector<18x16xf32>
      %158 = vector.broadcast %122 : vector<1x16xf32> to vector<18x16xf32>
      %159 = arith.addf %157, %158 : vector<18x16xf32>
      %160 = vector.extract_strided_slice %159 {offsets = [0, 0], sizes = [9, 16], strides = [1, 1]} : vector<18x16xf32> to vector<9x16xf32>
      %cst_112 = arith.constant dense<0.000000e+00> : vector<9xf32>
      %161 = vector.multi_reduction <add>, %160, %cst_112 [1] : vector<9x16xf32> to vector<9xf32>
      %162 = vector.shape_cast %161 : vector<9xf32> to vector<9x1xf32>
      %cst_113 = arith.constant 1.600000e+01 : f32
      %163 = vector.broadcast %cst_113 : f32 to vector<9x1xf32>
      %164 = arith.divf %162, %163 : vector<9x1xf32>
      %cst_114 = arith.constant dense<0.000000e+00> : vector<1xf32>
      %165 = vector.multi_reduction <add>, %164, %cst_114 [0] : vector<9x1xf32> to vector<1xf32>
      %166 = vector.shape_cast %165 : vector<1xf32> to vector<1x1xf32>
      %cst_115 = arith.constant 9.000000e+00 : f32
      %167 = vector.broadcast %cst_115 : f32 to vector<1x1xf32>
      %168 = arith.divf %166, %167 : vector<1x1xf32>
      %169 = vector.extract_strided_slice %159 {offsets = [9, 0], sizes = [9, 16], strides = [1, 1]} : vector<18x16xf32> to vector<9x16xf32>
      %cst_116 = arith.constant dense<0.000000e+00> : vector<9xf32>
      %170 = vector.multi_reduction <add>, %169, %cst_116 [1] : vector<9x16xf32> to vector<9xf32>
      %171 = vector.shape_cast %170 : vector<9xf32> to vector<9x1xf32>
      %cst_117 = arith.constant 1.600000e+01 : f32
      %172 = vector.broadcast %cst_117 : f32 to vector<9x1xf32>
      %173 = arith.divf %171, %172 : vector<9x1xf32>
      %cst_118 = arith.constant dense<0.000000e+00> : vector<1xf32>
      %174 = vector.multi_reduction <add>, %173, %cst_118 [0] : vector<9x1xf32> to vector<1xf32>
      %175 = vector.shape_cast %174 : vector<1xf32> to vector<1x1xf32>
      %cst_119 = arith.constant 9.000000e+00 : f32
      %176 = vector.broadcast %cst_119 : f32 to vector<1x1xf32>
      %177 = arith.divf %175, %176 : vector<1x1xf32>
      %178 = tpu.concatenate %168, %177 in 0 : vector<1x1xf32>, vector<1x1xf32> -> vector<2x1xf32>
      %179 = arith.mulf %151, %151 : vector<2x16xf32>
      %cst_120 = arith.constant dense<0.000000e+00> : vector<2xf32>
      %180 = vector.multi_reduction <add>, %179, %cst_120 [1] : vector<2x16xf32> to vector<2xf32>
      %181 = vector.shape_cast %180 : vector<2xf32> to vector<2x1xf32>
      %cst_121 = arith.constant 1.000000e-24 : f32
      %182 = vector.broadcast %cst_121 : f32 to vector<2x1xf32>
      %183 = arith.maximumf %181, %182 : vector<2x1xf32>
      %184 = math.rsqrt %183 : vector<2x1xf32>
      %185 = vector.broadcast %184 : vector<2x1xf32> to vector<2x16xf32>
      %186 = arith.mulf %151, %185 : vector<2x16xf32>
      %187 = arith.mulf %159, %159 : vector<18x16xf32>
      %cst_122 = arith.constant dense<0.000000e+00> : vector<18xf32>
      %188 = vector.multi_reduction <add>, %187, %cst_122 [1] : vector<18x16xf32> to vector<18xf32>
      %189 = vector.shape_cast %188 : vector<18xf32> to vector<18x1xf32>
      %cst_123 = arith.constant 1.000000e-24 : f32
      %190 = vector.broadcast %cst_123 : f32 to vector<18x1xf32>
      %191 = arith.maximumf %189, %190 : vector<18x1xf32>
      %192 = math.rsqrt %191 : vector<18x1xf32>
      %193 = vector.broadcast %192 : vector<18x1xf32> to vector<18x16xf32>
      %194 = arith.mulf %159, %193 : vector<18x16xf32>
      %195 = arith.mulf %178, %178 : vector<2x1xf32>
      %cst_124 = arith.constant 1.000000e-24 : f32
      %196 = vector.broadcast %cst_124 : f32 to vector<2x1xf32>
      %197 = arith.maximumf %195, %196 : vector<2x1xf32>
      %198 = math.rsqrt %197 : vector<2x1xf32>
      %199 = arith.mulf %178, %198 : vector<2x1xf32>
      %200 = arith.mulf %104, %186 : vector<2x16xf32>
      %cst_125 = arith.constant dense<0.000000e+00> : vector<2xf32>
      %201 = vector.multi_reduction <add>, %200, %cst_125 [1] : vector<2x16xf32> to vector<2xf32>
      %202 = vector.shape_cast %201 : vector<2xf32> to vector<2x1xf32>
      %cst_126 = arith.constant 14.2857141 : f32
      %203 = vector.broadcast %cst_126 : f32 to vector<2x1xf32>
      %204 = arith.mulf %202, %203 : vector<2x1xf32>
      %205 = vector.extract_strided_slice %112 {offsets = [0, 0], sizes = [9, 16], strides = [1, 1]} : vector<18x16xf32> to vector<9x16xf32>
      %206 = vector.extract_strided_slice %194 {offsets = [0, 0], sizes = [9, 16], strides = [1, 1]} : vector<18x16xf32> to vector<9x16xf32>
      %cst_127 = arith.constant dense<0.000000e+00> : vector<9x9xf32>
      %207 = tpu.matmul %205, %206, %cst_127 {dimension_numbers = #tpu.dot_dimension_numbers<[1], [1], [0], [0], [0, 0, 1, 0], [], []>} : vector<9x16xf32>, vector<9x16xf32>, vector<9x9xf32> -> vector<9x9xf32>
      %cst_128 = arith.constant dense<0xFF800000> : vector<9xf32>
      %208 = vector.multi_reduction <maximumf>, %207, %cst_128 [1] : vector<9x9xf32> to vector<9xf32>
      %209 = vector.shape_cast %208 : vector<9xf32> to vector<9x1xf32>
      %210 = vector.extract_strided_slice %112 {offsets = [9, 0], sizes = [9, 16], strides = [1, 1]} : vector<18x16xf32> to vector<9x16xf32>
      %211 = vector.extract_strided_slice %194 {offsets = [9, 0], sizes = [9, 16], strides = [1, 1]} : vector<18x16xf32> to vector<9x16xf32>
      %cst_129 = arith.constant dense<0.000000e+00> : vector<9x9xf32>
      %212 = tpu.matmul %210, %211, %cst_129 {dimension_numbers = #tpu.dot_dimension_numbers<[1], [1], [0], [0], [0, 0, 1, 0], [], []>} : vector<9x16xf32>, vector<9x16xf32>, vector<9x9xf32> -> vector<9x9xf32>
      %cst_130 = arith.constant dense<0xFF800000> : vector<9xf32>
      %213 = vector.multi_reduction <maximumf>, %212, %cst_130 [1] : vector<9x9xf32> to vector<9xf32>
      %214 = vector.shape_cast %213 : vector<9xf32> to vector<9x1xf32>
      %215 = tpu.concatenate %209, %214 in 0 : vector<9x1xf32>, vector<9x1xf32> -> vector<18x1xf32>
      %cst_131 = arith.constant 14.2857141 : f32
      %216 = vector.broadcast %cst_131 : f32 to vector<18x1xf32>
      %217 = arith.mulf %215, %216 : vector<18x1xf32>
      %c0_132 = arith.constant 0 : index
      %c0_133 = arith.constant 0 : index
      %218 = vector.load %arg28[%c0_132, %c0_133] : memref<2x16xf32, #tpu.memory_space<vmem>>, vector<2x16xf32>
      tpu.vector_store %arg28[%c0_132, %c0_133], %104 {strides = array<i32>} : memref<2x16xf32, #tpu.memory_space<vmem>>, vector<2x16xf32>,
      %c0_134 = arith.constant 0 : index
      %c0_135 = arith.constant 0 : index
      %219 = vector.load %arg29[%c0_134, %c0_135] : memref<18x16xf32, #tpu.memory_space<vmem>>, vector<18x16xf32>
      tpu.vector_store %arg29[%c0_134, %c0_135], %112 {strides = array<i32>} : memref<18x16xf32, #tpu.memory_space<vmem>>, vector<18x16xf32>,
      %c0_136 = arith.constant 0 : index
      %c0_137 = arith.constant 0 : index
      %220 = vector.load %arg30[%c0_136, %c0_137] : memref<2x16xf32, #tpu.memory_space<vmem>>, vector<2x16xf32>
      tpu.vector_store %arg30[%c0_136, %c0_137], %186 {strides = array<i32>} : memref<2x16xf32, #tpu.memory_space<vmem>>, vector<2x16xf32>,
      %c0_138 = arith.constant 0 : index
      %c0_139 = arith.constant 0 : index
      %221 = vector.load %arg31[%c0_138, %c0_139] : memref<2x1xf32, #tpu.memory_space<vmem>>, vector<2x1xf32>
      tpu.vector_store %arg31[%c0_138, %c0_139], %199 {strides = array<i32>} : memref<2x1xf32, #tpu.memory_space<vmem>>, vector<2x1xf32>,
      %c0_140 = arith.constant 0 : index
      %c0_141 = arith.constant 0 : index
      %222 = vector.load %arg32[%c0_140, %c0_141] : memref<2x1xf32, #tpu.memory_space<vmem>>, vector<2x1xf32>
      tpu.vector_store %arg32[%c0_140, %c0_141], %204 {strides = array<i32>} : memref<2x1xf32, #tpu.memory_space<vmem>>, vector<2x1xf32>,
      %c0_142 = arith.constant 0 : index
      %c0_143 = arith.constant 0 : index
      %223 = vector.load %arg33[%c0_142, %c0_143] : memref<18x1xf32, #tpu.memory_space<vmem>>, vector<18x1xf32>
      tpu.vector_store %arg33[%c0_142, %c0_143], %217 {strides = array<i32>} : memref<18x1xf32, #tpu.memory_space<vmem>>, vector<18x1xf32>,
      %c0_144 = arith.constant 0 : index
      %c0_145 = arith.constant 0 : index
      %224 = vector.load %arg34[%c0_144, %c0_145] : memref<2x1xf32, #tpu.memory_space<vmem>>, vector<2x1xf32>
      tpu.vector_store %arg34[%c0_144, %c0_145], %204 {strides = array<i32>} : memref<2x1xf32, #tpu.memory_space<vmem>>, vector<2x1xf32>,
      %cst_146 = arith.constant 1.000000e+00 : f32
      %225 = vector.broadcast %cst_146 : f32 to vector<2x1xf32>
      %c0_147 = arith.constant 0 : index
      %c0_148 = arith.constant 0 : index
      %226 = vector.load %arg35[%c0_147, %c0_148] : memref<2x1xf32, #tpu.memory_space<vmem>>, vector<2x1xf32>
      tpu.vector_store %arg35[%c0_147, %c0_148], %225 {strides = array<i32>} : memref<2x1xf32, #tpu.memory_space<vmem>>, vector<2x1xf32>,
      %c0_149 = arith.constant 0 : index
      %c0_150 = arith.constant 0 : index
      %227 = vector.load %arg36[%c0_149, %c0_150] : memref<18x1xf32, #tpu.memory_space<vmem>>, vector<18x1xf32>
      tpu.vector_store %arg36[%c0_149, %c0_150], %217 {strides = array<i32>} : memref<18x1xf32, #tpu.memory_space<vmem>>, vector<18x1xf32>,
      %cst_151 = arith.constant 1.000000e+00 : f32
      %228 = vector.broadcast %cst_151 : f32 to vector<18x1xf32>
      %c0_152 = arith.constant 0 : index
      %c0_153 = arith.constant 0 : index
      %229 = vector.load %arg37[%c0_152, %c0_153] : memref<18x1xf32, #tpu.memory_space<vmem>>, vector<18x1xf32>
      tpu.vector_store %arg37[%c0_152, %c0_153], %228 {strides = array<i32>} : memref<18x1xf32, #tpu.memory_space<vmem>>, vector<18x1xf32>,
    } else {
    }
    %c0 = arith.constant 0 : index
    %c0_1 = arith.constant 0 : index
    %3 = vector.load %arg28[%c0, %c0_1] : memref<2x16xf32, #tpu.memory_space<vmem>>, vector<2x16xf32>
    %4 = arith.truncf %3 : vector<2x16xf32> to vector<2x16xbf16>
    %c0_2 = arith.constant 0 : index
    %c0_3 = arith.constant 0 : index
    %5 = vector.load %arg24[%c0_2, %c0_3] : memref<16x128xbf16, #tpu.memory_space<vmem>>, vector<16x128xbf16>
    %cst = arith.constant dense<0.000000e+00> : vector<2x128xf32>
    %6 = tpu.matmul %4, %5, %cst {dimension_numbers = #tpu.dot_dimension_numbers<[1], [0], [0], [1], [0, 0, 1, 1], [], []>} : vector<2x16xbf16>, vector<16x128xbf16>, vector<2x128xf32> -> vector<2x128xf32>
    %cst_4 = arith.constant 14.2857141 : f32
    %7 = vector.broadcast %cst_4 : f32 to vector<2x128xf32>
    %8 = arith.mulf %6, %7 : vector<2x128xf32>
    %c0_5 = arith.constant 0 : index
    %c0_6 = arith.constant 0 : index
    %9 = vector.load %arg34[%c0_5, %c0_6] : memref<2x1xf32, #tpu.memory_space<vmem>>, vector<2x1xf32>
    %cst_7 = arith.constant dense<0xFF800000> : vector<2xf32>
    %10 = vector.multi_reduction <maximumf>, %8, %cst_7 [1] : vector<2x128xf32> to vector<2xf32>
    %11 = vector.shape_cast %10 : vector<2xf32> to vector<2x1xf32>
    %12 = arith.maximumf %9, %11 : vector<2x1xf32>
    %c0_8 = arith.constant 0 : index
    %c0_9 = arith.constant 0 : index
    %13 = vector.load %arg35[%c0_8, %c0_9] : memref<2x1xf32, #tpu.memory_space<vmem>>, vector<2x1xf32>
    %14 = arith.subf %9, %12 : vector<2x1xf32>
    %15 = math.exp %14 : vector<2x1xf32>
    %16 = arith.mulf %13, %15 : vector<2x1xf32>
    %17 = vector.broadcast %12 : vector<2x1xf32> to vector<2x128xf32>
    %18 = arith.subf %8, %17 : vector<2x128xf32>
    %19 = math.exp %18 : vector<2x128xf32>
    %cst_10 = arith.constant dense<0.000000e+00> : vector<2xf32>
    %20 = vector.multi_reduction <add>, %19, %cst_10 [1] : vector<2x128xf32> to vector<2xf32>
    %21 = vector.shape_cast %20 : vector<2xf32> to vector<2x1xf32>
    %22 = arith.addf %16, %21 : vector<2x1xf32>
    %c0_11 = arith.constant 0 : index
    %c0_12 = arith.constant 0 : index
    %23 = vector.load %arg35[%c0_11, %c0_12] : memref<2x1xf32, #tpu.memory_space<vmem>>, vector<2x1xf32>
    tpu.vector_store %arg35[%c0_11, %c0_12], %22 {strides = array<i32>} : memref<2x1xf32, #tpu.memory_space<vmem>>, vector<2x1xf32>,
    %c0_13 = arith.constant 0 : index
    %c0_14 = arith.constant 0 : index
    %24 = vector.load %arg34[%c0_13, %c0_14] : memref<2x1xf32, #tpu.memory_space<vmem>>, vector<2x1xf32>
    tpu.vector_store %arg34[%c0_13, %c0_14], %12 {strides = array<i32>} : memref<2x1xf32, #tpu.memory_space<vmem>>, vector<2x1xf32>,
    %c0_15 = arith.constant 0 : index
    %c0_16 = arith.constant 0 : index
    %25 = vector.load %arg29[%c0_15, %c0_16] : memref<18x16xf32, #tpu.memory_space<vmem>>, vector<18x16xf32>
    %26 = arith.truncf %25 : vector<18x16xf32> to vector<18x16xbf16>
    %c0_17 = arith.constant 0 : index
    %c0_18 = arith.constant 0 : index
    %27 = vector.load %arg25[%c0_17, %c0_18] : memref<16x128xbf16, #tpu.memory_space<vmem>>, vector<16x128xbf16>
    %cst_19 = arith.constant dense<0.000000e+00> : vector<18x128xf32>
    %28 = tpu.matmul %26, %27, %cst_19 {dimension_numbers = #tpu.dot_dimension_numbers<[1], [0], [0], [1], [0, 0, 1, 1], [], []>} : vector<18x16xbf16>, vector<16x128xbf16>, vector<18x128xf32> -> vector<18x128xf32>
    %cst_20 = arith.constant 14.2857141 : f32
    %29 = vector.broadcast %cst_20 : f32 to vector<18x128xf32>
    %30 = arith.mulf %28, %29 : vector<18x128xf32>
    %c0_21 = arith.constant 0 : index
    %c0_22 = arith.constant 0 : index
    %31 = vector.load %arg36[%c0_21, %c0_22] : memref<18x1xf32, #tpu.memory_space<vmem>>, vector<18x1xf32>
    %cst_23 = arith.constant dense<0xFF800000> : vector<18xf32>
    %32 = vector.multi_reduction <maximumf>, %30, %cst_23 [1] : vector<18x128xf32> to vector<18xf32>
    %33 = vector.shape_cast %32 : vector<18xf32> to vector<18x1xf32>
    %34 = arith.maximumf %31, %33 : vector<18x1xf32>
    %c0_24 = arith.constant 0 : index
    %c0_25 = arith.constant 0 : index
    %35 = vector.load %arg37[%c0_24, %c0_25] : memref<18x1xf32, #tpu.memory_space<vmem>>, vector<18x1xf32>
    %36 = arith.subf %31, %34 : vector<18x1xf32>
    %37 = math.exp %36 : vector<18x1xf32>
    %38 = arith.mulf %35, %37 : vector<18x1xf32>
    %39 = vector.broadcast %34 : vector<18x1xf32> to vector<18x128xf32>
    %40 = arith.subf %30, %39 : vector<18x128xf32>
    %41 = math.exp %40 : vector<18x128xf32>
    %cst_26 = arith.constant dense<0.000000e+00> : vector<18xf32>
    %42 = vector.multi_reduction <add>, %41, %cst_26 [1] : vector<18x128xf32> to vector<18xf32>
    %43 = vector.shape_cast %42 : vector<18xf32> to vector<18x1xf32>
    %44 = arith.addf %38, %43 : vector<18x1xf32>
    %c0_27 = arith.constant 0 : index
    %c0_28 = arith.constant 0 : index
    %45 = vector.load %arg37[%c0_27, %c0_28] : memref<18x1xf32, #tpu.memory_space<vmem>>, vector<18x1xf32>
    tpu.vector_store %arg37[%c0_27, %c0_28], %44 {strides = array<i32>} : memref<18x1xf32, #tpu.memory_space<vmem>>, vector<18x1xf32>,
    %c0_29 = arith.constant 0 : index
    %c0_30 = arith.constant 0 : index
    %46 = vector.load %arg36[%c0_29, %c0_30] : memref<18x1xf32, #tpu.memory_space<vmem>>, vector<18x1xf32>
    tpu.vector_store %arg36[%c0_29, %c0_30], %34 {strides = array<i32>} : memref<18x1xf32, #tpu.memory_space<vmem>>, vector<18x1xf32>,
    %c3_i32 = arith.constant 3 : i32
    %47 = arith.cmpi eq, %arg0, %c3_i32 : i32
    %48 = arith.extui %47 : i1 to i32
    %c0_i32_31 = arith.constant 0 : i32
    %49 = arith.cmpi ne, %48, %c0_i32_31 : i32
    scf.if %49 {
      %c0_32 = arith.constant 0 : index
      %c0_33 = arith.constant 0 : index
      %50 = vector.load %arg34[%c0_32, %c0_33] : memref<2x1xf32, #tpu.memory_space<vmem>>, vector<2x1xf32>
      %c0_34 = arith.constant 0 : index
      %c0_35 = arith.constant 0 : index
      %51 = vector.load %arg35[%c0_34, %c0_35] : memref<2x1xf32, #tpu.memory_space<vmem>>, vector<2x1xf32>
      %52 = math.log %51 : vector<2x1xf32>
      %53 = arith.addf %50, %52 : vector<2x1xf32>
      %c0_36 = arith.constant 0 : index
      %c0_37 = arith.constant 0 : index
      %54 = vector.load %arg32[%c0_36, %c0_37] : memref<2x1xf32, #tpu.memory_space<vmem>>, vector<2x1xf32>
      %55 = arith.subf %53, %54 : vector<2x1xf32>
      %cst_38 = arith.constant dense<0.000000e+00> : vector<1xf32>
      %56 = vector.multi_reduction <add>, %55, %cst_38 [0] : vector<2x1xf32> to vector<1xf32>
      %57 = vector.shape_cast %56 : vector<1xf32> to vector<1x1xf32>
      %cst_39 = arith.constant 5.000000e-01 : f32
      %58 = vector.broadcast %cst_39 : f32 to vector<1x1xf32>
      %59 = arith.mulf %57, %58 : vector<1x1xf32>
      %c0_40 = arith.constant 0 : index
      %c0_41 = arith.constant 0 : index
      %60 = vector.load %arg36[%c0_40, %c0_41] : memref<18x1xf32, #tpu.memory_space<vmem>>, vector<18x1xf32>
      %c0_42 = arith.constant 0 : index
      %c0_43 = arith.constant 0 : index
      %61 = vector.load %arg37[%c0_42, %c0_43] : memref<18x1xf32, #tpu.memory_space<vmem>>, vector<18x1xf32>
      %62 = math.log %61 : vector<18x1xf32>
      %63 = arith.addf %60, %62 : vector<18x1xf32>
      %c0_44 = arith.constant 0 : index
      %c0_45 = arith.constant 0 : index
      %64 = vector.load %arg33[%c0_44, %c0_45] : memref<18x1xf32, #tpu.memory_space<vmem>>, vector<18x1xf32>
      %65 = arith.subf %63, %64 : vector<18x1xf32>
      %cst_46 = arith.constant dense<0.000000e+00> : vector<1xf32>
      %66 = vector.multi_reduction <add>, %65, %cst_46 [0] : vector<18x1xf32> to vector<1xf32>
      %67 = vector.shape_cast %66 : vector<1xf32> to vector<1x1xf32>
      %cst_47 = arith.constant 0.055555556 : f32
      %68 = vector.broadcast %cst_47 : f32 to vector<1x1xf32>
      %69 = arith.mulf %67, %68 : vector<1x1xf32>
      %cst_48 = arith.constant 5.000000e-01 : f32
      %70 = vector.broadcast %cst_48 : f32 to vector<1x1xf32>
      %71 = arith.mulf %70, %59 : vector<1x1xf32>
      %cst_49 = arith.constant 5.000000e-01 : f32
      %72 = vector.broadcast %cst_49 : f32 to vector<1x1xf32>
      %73 = arith.mulf %72, %69 : vector<1x1xf32>
      %74 = arith.addf %71, %73 : vector<1x1xf32>
      %75 = tpu.iota {dimensions = array<i32: 1>} : vector<1x128xi32>
      %c0_i32_50 = arith.constant 0 : i32
      %76 = vector.broadcast %c0_i32_50 : i32 to vector<1x128xi32>
      %77 = arith.cmpi eq, %75, %76 : vector<1x128xi32>
      %cst_51 = arith.constant 0.000000e+00 : f32
      %78 = vector.shape_cast %74 : vector<1x1xf32> to vector<1x1xf32>
      %79 = vector.broadcast %78 : vector<1x1xf32> to vector<1x128xf32>
      %80 = vector.broadcast %cst_51 : f32 to vector<1x128xf32>
      %81 = arith.select %77, %79, %80 : vector<1x128xi1>, vector<1x128xf32>
      %c1_i32 = arith.constant 1 : i32
      %82 = vector.broadcast %c1_i32 : i32 to vector<1x128xi32>
      %83 = arith.cmpi eq, %75, %82 : vector<1x128xi32>
      %cst_52 = arith.constant 0.000000e+00 : f32
      %84 = vector.shape_cast %59 : vector<1x1xf32> to vector<1x1xf32>
      %85 = vector.broadcast %84 : vector<1x1xf32> to vector<1x128xf32>
      %86 = vector.broadcast %cst_52 : f32 to vector<1x128xf32>
      %87 = arith.select %83, %85, %86 : vector<1x128xi1>, vector<1x128xf32>
      %88 = arith.addf %81, %87 : vector<1x128xf32>
      %c2_i32 = arith.constant 2 : i32
      %89 = vector.broadcast %c2_i32 : i32 to vector<1x128xi32>
      %90 = arith.cmpi eq, %75, %89 : vector<1x128xi32>
      %cst_53 = arith.constant 0.000000e+00 : f32
      %91 = vector.shape_cast %69 : vector<1x1xf32> to vector<1x1xf32>
      %92 = vector.broadcast %91 : vector<1x1xf32> to vector<1x128xf32>
      %93 = vector.broadcast %cst_53 : f32 to vector<1x128xf32>
      %94 = arith.select %90, %92, %93 : vector<1x128xi1>, vector<1x128xf32>
      %95 = arith.addf %88, %94 : vector<1x128xf32>
      %c0_54 = arith.constant 0 : index
      %c0_55 = arith.constant 0 : index
      %96 = vector.load %arg26[%c0_54, %c0_55] : memref<1x128xf32, #tpu.memory_space<vmem>>, vector<1x128xf32>
      tpu.vector_store %arg26[%c0_54, %c0_55], %95 {strides = array<i32>} : memref<1x128xf32, #tpu.memory_space<vmem>>, vector<1x128xf32>,
      %97 = tpu.iota {dimensions = array<i32: 0>} : vector<16x16xi32>
      %98 = tpu.iota {dimensions = array<i32: 1>} : vector<16x16xi32>
      %99 = arith.cmpi eq, %97, %98 : vector<16x16xi32>
      %100 = arith.extui %99 : vector<16x16xi1> to vector<16x16xi32>
      %101 = arith.sitofp %100 : vector<16x16xi32> to vector<16x16xf32>
      %c0_56 = arith.constant 0 : index
      %c0_57 = arith.constant 0 : index
      %102 = vector.load %arg30[%c0_56, %c0_57] : memref<2x16xf32, #tpu.memory_space<vmem>>, vector<2x16xf32>
      %cst_58 = arith.constant dense<0.000000e+00> : vector<16x2xf32>
      %103 = tpu.matmul %101, %102, %cst_58 {dimension_numbers = #tpu.dot_dimension_numbers<[1], [1], [0], [0], [0, 0, 1, 0], [], []>} : vector<16x16xf32>, vector<2x16xf32>, vector<16x2xf32> -> vector<16x2xf32>
      %c0_59 = arith.constant 0 : index
      %c0_60 = arith.constant 0 : index
      %104 = vector.load %arg31[%c0_59, %c0_60] : memref<2x1xf32, #tpu.memory_space<vmem>>, vector<2x1xf32>
      %105 = vector.shape_cast %104 : vector<2x1xf32> to vector<2x1xf32>
      %106 = vector.broadcast %105 : vector<2x1xf32> to vector<2x16xf32>
      %cst_61 = arith.constant dense<0.000000e+00> : vector<16x2xf32>
      %107 = tpu.matmul %101, %106, %cst_61 {dimension_numbers = #tpu.dot_dimension_numbers<[1], [1], [0], [0], [0, 0, 1, 0], [], []>} : vector<16x16xf32>, vector<2x16xf32>, vector<16x2xf32> -> vector<16x2xf32>
      %cst_62 = arith.constant 0.000000e+00 : f32
      %108 = vector.broadcast %cst_62 : f32 to vector<16x128xf32>
      %c0_63 = arith.constant 0 : index
      %c0_64 = arith.constant 0 : index
      %109 = vector.load %arg27[%c0_63, %c0_64] : memref<16x128xf32, #tpu.memory_space<vmem>>, vector<16x128xf32>
      tpu.vector_store %arg27[%c0_63, %c0_64], %108 {strides = array<i32>} : memref<16x128xf32, #tpu.memory_space<vmem>>, vector<16x128xf32>,
      %c0_65 = arith.constant 0 : index
      %c0_66 = arith.constant 0 : index
      %110 = vector.load %arg27[%c0_65, %c0_66] : memref<16x128xf32, #tpu.memory_space<vmem>>, vector<16x2xf32>
      tpu.vector_store %arg27[%c0_65, %c0_66], %103 {strides = array<i32>} : memref<16x128xf32, #tpu.memory_space<vmem>>, vector<16x2xf32>,
      %c0_67 = arith.constant 0 : index
      %c2 = arith.constant 2 : index
      %111 = vector.load %arg27[%c0_67, %c2] : memref<16x128xf32, #tpu.memory_space<vmem>>, vector<16x2xf32>
      tpu.vector_store %arg27[%c0_67, %c2], %107 {strides = array<i32>} : memref<16x128xf32, #tpu.memory_space<vmem>>, vector<16x2xf32>,
    } else {
    }
    return
  }
  func.func @transform_0(%arg0: i32) -> (i32, i32) {
    %c0_i32 = arith.constant 0 : i32
    %c0_i32_0 = arith.constant 0 : i32
    %c0_i32_1 = arith.constant 0 : i32
    return %c0_i32, %c0_i32_0 : i32, i32
  }
  func.func @transform_1(%arg0: i32) -> (i32, i32) {
    %c0_i32 = arith.constant 0 : i32
    %c0_i32_0 = arith.constant 0 : i32
    %c0_i32_1 = arith.constant 0 : i32
    return %c0_i32, %c0_i32_0 : i32, i32
  }
  func.func @transform_2(%arg0: i32) -> (i32, i32) {
    %c0_i32 = arith.constant 0 : i32
    %c0_i32_0 = arith.constant 0 : i32
    %c0_i32_1 = arith.constant 0 : i32
    return %c0_i32, %c0_i32_0 : i32, i32
  }
  func.func @transform_3(%arg0: i32) -> (i32, i32) {
    %c0_i32 = arith.constant 0 : i32
    %c0_i32_0 = arith.constant 0 : i32
    %c0_i32_1 = arith.constant 0 : i32
    return %c0_i32, %c0_i32_0 : i32, i32
  }
  func.func @transform_4(%arg0: i32) -> (i32, i32) {
    %c0_i32 = arith.constant 0 : i32
    %c0_i32_0 = arith.constant 0 : i32
    %c0_i32_1 = arith.constant 0 : i32
    return %c0_i32, %c0_i32_0 : i32, i32
  }
  func.func @transform_5(%arg0: i32) -> (i32, i32) {
    %c0_i32 = arith.constant 0 : i32
    %c0_i32_0 = arith.constant 0 : i32
    %c0_i32_1 = arith.constant 0 : i32
    return %c0_i32, %c0_i32_0 : i32, i32
  }
  func.func @transform_6(%arg0: i32) -> (i32, i32) {
    %c0_i32 = arith.constant 0 : i32
    %c0_i32_0 = arith.constant 0 : i32
    %c0_i32_1 = arith.constant 0 : i32
    return %c0_i32, %c0_i32_0 : i32, i32
  }
  func.func @transform_7(%arg0: i32) -> (i32, i32) {
    %c0_i32 = arith.constant 0 : i32
    %c0_i32_0 = arith.constant 0 : i32
    %c0_i32_1 = arith.constant 0 : i32
    return %c0_i32, %c0_i32_0 : i32, i32
  }
  func.func @transform_8(%arg0: i32) -> (i32, i32) {
    %c0_i32 = arith.constant 0 : i32
    %c0_i32_0 = arith.constant 0 : i32
    %c0_i32_1 = arith.constant 0 : i32
    return %c0_i32, %c0_i32_0 : i32, i32
  }
  func.func @transform_9(%arg0: i32) -> (i32, i32) {
    %c0_i32 = arith.constant 0 : i32
    %c0_i32_0 = arith.constant 0 : i32
    %c0_i32_1 = arith.constant 0 : i32
    return %c0_i32, %c0_i32_0 : i32, i32
  }
  func.func @transform_10(%arg0: i32) -> (i32, i32) {
    %c0_i32 = arith.constant 0 : i32
    %c0_i32_0 = arith.constant 0 : i32
    %c0_i32_1 = arith.constant 0 : i32
    return %c0_i32, %c0_i32_0 : i32, i32
  }
  func.func @transform_11(%arg0: i32) -> (i32, i32) {
    %c0_i32 = arith.constant 0 : i32
    %c0_i32_0 = arith.constant 0 : i32
    %c0_i32_1 = arith.constant 0 : i32
    return %c0_i32, %c0_i32_0 : i32, i32
  }
  func.func @transform_12(%arg0: i32) -> (i32, i32) {
    %c0_i32 = arith.constant 0 : i32
    %c0_i32_0 = arith.constant 0 : i32
    %c0_i32_1 = arith.constant 0 : i32
    return %c0_i32, %c0_i32_0 : i32, i32
  }
  func.func @transform_13(%arg0: i32) -> (i32, i32) {
    %c0_i32 = arith.constant 0 : i32
    %c0_i32_0 = arith.constant 0 : i32
    %c0_i32_1 = arith.constant 0 : i32
    return %c0_i32, %c0_i32_0 : i32, i32
  }
  func.func @transform_14(%arg0: i32) -> (i32, i32) {
    %c0_i32 = arith.constant 0 : i32
    %c0_i32_0 = arith.constant 0 : i32
    %c0_i32_1 = arith.constant 0 : i32
    return %c0_i32, %c0_i32_0 : i32, i32
  }
  func.func @transform_15(%arg0: i32) -> (i32, i32) {
    %c0_i32 = arith.constant 0 : i32
    %c0_i32_0 = arith.constant 0 : i32
    %c0_i32_1 = arith.constant 0 : i32
    return %c0_i32, %c0_i32_0 : i32, i32
  }
  func.func @transform_16(%arg0: i32) -> (i32, i32) {
    %c0_i32 = arith.constant 0 : i32
    %c0_i32_0 = arith.constant 0 : i32
    %c0_i32_1 = arith.constant 0 : i32
    return %c0_i32, %c0_i32_0 : i32, i32
  }
  func.func @transform_17(%arg0: i32) -> (i32, i32) {
    %c0_i32 = arith.constant 0 : i32
    %c0_i32_0 = arith.constant 0 : i32
    %c0_i32_1 = arith.constant 0 : i32
    return %c0_i32, %c0_i32_0 : i32, i32
  }
  func.func @transform_18(%arg0: i32) -> (i32, i32) {
    %c0_i32 = arith.constant 0 : i32
    %c0_i32_0 = arith.constant 0 : i32
    %c0_i32_1 = arith.constant 0 : i32
    return %c0_i32, %c0_i32_0 : i32, i32
  }
  func.func @transform_19(%arg0: i32) -> (i32, i32) {
    %c0_i32 = arith.constant 0 : i32
    %c0_i32_0 = arith.constant 0 : i32
    %c0_i32_1 = arith.constant 0 : i32
    return %c0_i32, %c0_i32_0 : i32, i32
  }
  func.func @transform_20(%arg0: i32) -> (i32, i32) {
    %c0_i32 = arith.constant 0 : i32
    %c0_i32_0 = arith.constant 0 : i32
    %c0_i32_1 = arith.constant 0 : i32
    return %c0_i32, %c0_i32_0 : i32, i32
  }
  func.func @transform_21(%arg0: i32) -> (i32, i32) {
    %c0_i32 = arith.constant 0 : i32
    %c0_i32_0 = arith.constant 0 : i32
    %c0_i32_1 = arith.constant 0 : i32
    return %c0_i32, %c0_i32_0 : i32, i32
  }
  func.func @transform_22(%arg0: i32) -> (i32, i32) {
    %c0_i32 = arith.constant 0 : i32
    %c0_i32_0 = arith.constant 0 : i32
    %c0_i32_1 = arith.constant 0 : i32
    return %c0_i32, %c0_i32_0 : i32, i32
  }
  func.func @transform_23(%arg0: i32) -> (i32, i32) {
    %c0_i32 = arith.constant 0 : i32
    %c0_i32_0 = arith.constant 0 : i32
    return %c0_i32, %arg0 : i32, i32
  }
  func.func @transform_24(%arg0: i32) -> (i32, i32) {
    %c0_i32 = arith.constant 0 : i32
    %c0_i32_0 = arith.constant 0 : i32
    return %c0_i32, %arg0 : i32, i32
  }
  func.func @transform_25(%arg0: i32) -> (i32, i32) {
    %c0_i32 = arith.constant 0 : i32
    %c0_i32_0 = arith.constant 0 : i32
    %c0_i32_1 = arith.constant 0 : i32
    return %c0_i32, %c0_i32_0 : i32, i32
  }
  func.func @transform_26(%arg0: i32) -> (i32, i32) {
    %c0_i32 = arith.constant 0 : i32
    %c0_i32_0 = arith.constant 0 : i32
    %c0_i32_1 = arith.constant 0 : i32
    return %c0_i32, %c0_i32_0 : i32, i32
  }
}

</mosaic_0001>

<llo_original>
// kernel: densecl_forward.1
$region0: #{densecl_forward.1}
  #allocation0 [shape = 'u32[]', space=smem, size = 0x4, offset = 0x4, fixed_abs, tag = 'smem constant byte address 0x4 - core index']
  #allocation1 [shape = 'u32[144,128]{1,0:T(1,128)}', space=vmem, size = 0x12000, scoped, tag = 'internal scratch']
  #allocation2 [shape = 'f32[2,16]{1,0:T(2,128)}', space=vmem, size = 0x400, scoped, tag = 'scratch operand']
  #allocation3 [shape = 'f32[18,16]{1,0:T(8,128)}', space=vmem, size = 0x3000, scoped, tag = 'scratch operand']
  #allocation4 [shape = 'f32[2,16]{1,0:T(2,128)}', space=vmem, size = 0x400, scoped, tag = 'scratch operand']
  #allocation5 [shape = 'f32[2,1]{1,0:T(2,128)}', space=vmem, size = 0x400, scoped, tag = 'scratch operand']
  #allocation6 [shape = 'f32[2,1]{1,0:T(2,128)}', space=vmem, size = 0x400, scoped, tag = 'scratch operand']
  #allocation7 [shape = 'f32[18,1]{1,0:T(8,128)}', space=vmem, size = 0x3000, scoped, tag = 'scratch operand']
  #allocation8 [shape = 'f32[2,1]{1,0:T(2,128)}', space=vmem, size = 0x400, scoped, tag = 'scratch operand']
  #allocation9 [shape = 'f32[2,1]{1,0:T(2,128)}', space=vmem, size = 0x400, scoped, tag = 'scratch operand']
  #allocation10 [shape = 'f32[18,1]{1,0:T(8,128)}', space=vmem, size = 0x3000, scoped, tag = 'scratch operand']
  #allocation11 [shape = 'f32[18,1]{1,0:T(8,128)}', space=vmem, size = 0x3000, scoped, tag = 'scratch operand']
  %s0 = inlined_call_operand.vmem [shape: f32[288,8], index: 0, kind: input, shape index: {}]
  %s1 = inlined_call_operand.vmem [shape: f32[288,8], index: 1, kind: input, shape index: {}]
  %s2 = inlined_call_operand.vmem [shape: f32[9,144], index: 2, kind: input, shape index: {}]
  %s3 = inlined_call_operand.vmem [shape: f32[8,32], index: 3, kind: input, shape index: {}]
  %s4 = inlined_call_operand.vmem [shape: f32[1,32], index: 4, kind: input, shape index: {}]
  %s5 = inlined_call_operand.vmem [shape: f32[32,32], index: 5, kind: input, shape index: {}]
  %s6 = inlined_call_operand.vmem [shape: f32[1,32], index: 6, kind: input, shape index: {}]
  %s7 = inlined_call_operand.vmem [shape: f32[32,16], index: 7, kind: input, shape index: {}]
  %s8 = inlined_call_operand.vmem [shape: f32[1,16], index: 8, kind: input, shape index: {}]
  %s9 = inlined_call_operand.vmem [shape: f32[32,32], index: 9, kind: input, shape index: {}]
  %s10 = inlined_call_operand.vmem [shape: f32[1,32], index: 10, kind: input, shape index: {}]
  %s11 = inlined_call_operand.vmem [shape: f32[32,16], index: 11, kind: input, shape index: {}]
  %s12 = inlined_call_operand.vmem [shape: f32[1,16], index: 12, kind: input, shape index: {}]
  %s13 = inlined_call_operand.vmem [shape: f32[8,32], index: 13, kind: input, shape index: {}]
  %s14 = inlined_call_operand.vmem [shape: f32[1,32], index: 14, kind: input, shape index: {}]
  %s15 = inlined_call_operand.vmem [shape: f32[32,32], index: 15, kind: input, shape index: {}]
  %s16 = inlined_call_operand.vmem [shape: f32[1,32], index: 16, kind: input, shape index: {}]
  %s17 = inlined_call_operand.vmem [shape: f32[32,16], index: 17, kind: input, shape index: {}]
  %s18 = inlined_call_operand.vmem [shape: f32[1,16], index: 18, kind: input, shape index: {}]
  %s19 = inlined_call_operand.vmem [shape: f32[32,32], index: 19, kind: input, shape index: {}]
  %s20 = inlined_call_operand.vmem [shape: f32[1,32], index: 20, kind: input, shape index: {}]
  %s21 = inlined_call_operand.vmem [shape: f32[32,16], index: 21, kind: input, shape index: {}]
  %s22 = inlined_call_operand.vmem [shape: f32[1,16], index: 22, kind: input, shape index: {}]
  %s23 = inlined_call_operand.vmem [shape: bf16[16,512], index: 23, kind: input, shape index: {}]
  %s24 = inlined_call_operand.vmem [shape: bf16[16,512], index: 24, kind: input, shape index: {}]
  %s25 = inlined_call_operand.vmem [shape: f32[1,128], index: 25, kind: output, shape index: {0}]
  %s26 = inlined_call_operand.vmem [shape: f32[16,128], index: 26, kind: output, shape index: {1}]
  %27 = xla_tuple %s25, %s26
  %s28 = sld [smem:[#allocation0]]
  $region231: #{densecl_forward.1} parent=0
    _
  %s30 = ssub.s32 1, %s28
  %s31 = scalar_select 0, %s30, %s28
  $region1: #{densecl_forward.1} parent=0
    #allocation12 [shape = 'u8[8192]{0}', space=vmem, size = 0x2000, scoped, tag = 'input window, operand 23']
    #allocation13 [shape = 'u8[8192]{0}', space=vmem, size = 0x2000, scoped, tag = 'input window, operand 24']
    loop: start=0, step=1, limit=6
    $region2: #{densecl_forward.1} parent=1 // loop_pre_header
      _
    $region3: #{densecl_forward.1} parent=1 // loop_header
      %s33 = sphi 0, %s37
      %p34 = scmp.ge.s32.totalorder %s33, 6
      %s41 = sphi 0, %s41
      %s43 = sphi 0, %s41
      %s44 = sphi 0, %s43
      %s58 = sphi 0, %s44
      %s62 = sphi 0, %s62
      %s64 = sphi 0, %s62
      %s65 = sphi 0, %s64
      %s79 = sphi 0, %s65
      %s83 = sphi 0, %s83
      %s85 = sphi 0, %s83
      %s86 = sphi 0, %s85
      %s100 = sphi 0, %s86
      %s104 = sphi 0, %s104
      %s106 = sphi 0, %s104
      %s107 = sphi 0, %s106
      %s121 = sphi 0, %s107
      %s125 = sphi 0, %s125
      %s127 = sphi 0, %s125
      %s128 = sphi 0, %s127
      %s142 = sphi 0, %s128
      %s146 = sphi 0, %s146
      %s148 = sphi 0, %s146
      %s149 = sphi 0, %s148
      %s163 = sphi 0, %s149
      %s167 = sphi 0, %s167
      %s169 = sphi 0, %s167
      %s170 = sphi 0, %s169
      %s184 = sphi 0, %s170
      %s188 = sphi 0, %s188
      %s190 = sphi 0, %s188
      %s191 = sphi 0, %s190
      %s205 = sphi 0, %s191
      %s209 = sphi 0, %s209
      %s211 = sphi 0, %s209
      %s212 = sphi 0, %s211
      %s226 = sphi 0, %s212
      %s230 = sphi 0, %s230
      %s232 = sphi 0, %s230
      %s233 = sphi 0, %s232
      %s247 = sphi 0, %s233
      %s251 = sphi 0, %s251
      %s253 = sphi 0, %s251
      %s254 = sphi 0, %s253
      %s268 = sphi 0, %s254
      %s272 = sphi 0, %s272
      %s274 = sphi 0, %s272
      %s275 = sphi 0, %s274
      %s289 = sphi 0, %s275
      %s293 = sphi 0, %s293
      %s295 = sphi 0, %s293
      %s296 = sphi 0, %s295
      %s310 = sphi 0, %s296
      %s314 = sphi 0, %s314
      %s316 = sphi 0, %s314
      %s317 = sphi 0, %s316
      %s331 = sphi 0, %s317
      %s335 = sphi 0, %s335
      %s337 = sphi 0, %s335
      %s338 = sphi 0, %s337
      %s352 = sphi 0, %s338
      %s356 = sphi 0, %s356
      %s358 = sphi 0, %s356
      %s359 = sphi 0, %s358
      %s373 = sphi 0, %s359
      %s377 = sphi 0, %s377
      %s379 = sphi 0, %s377
      %s380 = sphi 0, %s379
      %s394 = sphi 0, %s380
      %s398 = sphi 0, %s398
      %s400 = sphi 0, %s398
      %s401 = sphi 0, %s400
      %s415 = sphi 0, %s401
      %s419 = sphi 0, %s419
      %s421 = sphi 0, %s419
      %s422 = sphi 0, %s421
      %s436 = sphi 0, %s422
      %s440 = sphi 0, %s440
      %s442 = sphi 0, %s440
      %s443 = sphi 0, %s442
      %s457 = sphi 0, %s443
      %s461 = sphi 0, %s461
      %s463 = sphi 0, %s461
      %s464 = sphi 0, %s463
      %s478 = sphi 0, %s464
      %s482 = sphi 0, %s482
      %s484 = sphi 0, %s482
      %s485 = sphi 0, %s484
      %s499 = sphi 0, %s485
      %s503 = sphi 0, %s503
      %s505 = sphi 0, %s503
      %s506 = sphi 0, %s505
      %s520 = sphi 0, %s506
      %s526 = sphi 0, %s528
      %s529 = sphi 0, %s526
      %s530 = sphi 0, %s529
      %s546 = sphi 0, %s530
      %s552 = sphi 0, %s554
      %s555 = sphi 0, %s552
      %s556 = sphi 0, %s555
      %s572 = sphi 0, %s556
      %s576 = sphi 0, %s576
      %s578 = sphi 0, %s576
      %s579 = sphi 0, %s578
      %s593 = sphi 0, %s579
      %s597 = sphi 0, %s597
      %s599 = sphi 0, %s597
      %s600 = sphi 0, %s599
      %s614 = sphi 0, %s600
    $region4: #{densecl_forward.1} parent=1 // loop_header_branch
      %36 = sbr.rel (%p34) target = $region8
    $region5: #{densecl_forward.1} parent=1 // loop_body
      %s38 = ssub.s32 %s33, 1
      %s39 = ssub.s32 %s33, 2
      %s40 = sadd.s32 %s33, 1
      %s42 = sadd.s32 %s41, 1
      %p45 = scmp.eq.s32.totalorder %s33, 3
      %p46 = scmp.ne.s32.totalorder %s41, %s43
      %p47 = scmp.eq.s32.totalorder %s33, 0
      %p48 = por %p46, %p47
      %p49 = scmp.ne.s32.totalorder %s41, %s43
      %p50 = scmp.eq.s32.totalorder %s38, 3
      %p51 = por %p49, %p50
      %p52 = scmp.ne.s32.totalorder %s43, %s44
      %p53 = scmp.eq.s32.totalorder %s38, 0
      %p54 = por %p52, %p53
      %p55 = scmp.ne.s32.totalorder %s43, %s44
      %p56 = scmp.eq.s32.totalorder %s39, 3
      %p57 = por %p55, %p56
      %p59 = scmp.ne.s32.totalorder %s44, %s58
      %p60 = scmp.eq.s32.totalorder %s39, 0
      %p61 = por %p59, %p60
      %s63 = sadd.s32 %s62, 1
      %p66 = scmp.eq.s32.totalorder %s33, 3
      %p67 = scmp.ne.s32.totalorder %s62, %s64
      %p68 = scmp.eq.s32.totalorder %s33, 0
      %p69 = por %p67, %p68
      %p70 = scmp.ne.s32.totalorder %s62, %s64
      %p71 = scmp.eq.s32.totalorder %s38, 3
      %p72 = por %p70, %p71
      %p73 = scmp.ne.s32.totalorder %s64, %s65
      %p74 = scmp.eq.s32.totalorder %s38, 0
      %p75 = por %p73, %p74
      %p76 = scmp.ne.s32.totalorder %s64, %s65
      %p77 = scmp.eq.s32.totalorder %s39, 3
      %p78 = por %p76, %p77
      %p80 = scmp.ne.s32.totalorder %s65, %s79
      %p81 = scmp.eq.s32.totalorder %s39, 0
      %p82 = por %p80, %p81
      %s84 = sadd.s32 %s83, 1
      %p87 = scmp.eq.s32.totalorder %s33, 3
      %p88 = scmp.ne.s32.totalorder %s83, %s85
      %p89 = scmp.eq.s32.totalorder %s33, 0
      %p90 = por %p88, %p89
      %p91 = scmp.ne.s32.totalorder %s83, %s85
      %p92 = scmp.eq.s32.totalorder %s38, 3
      %p93 = por %p91, %p92
      %p94 = scmp.ne.s32.totalorder %s85, %s86
      %p95 = scmp.eq.s32.totalorder %s38, 0
      %p96 = por %p94, %p95
      %p97 = scmp.ne.s32.totalorder %s85, %s86
      %p98 = scmp.eq.s32.totalorder %s39, 3
      %p99 = por %p97, %p98
      %p101 = scmp.ne.s32.totalorder %s86, %s100
      %p102 = scmp.eq.s32.totalorder %s39, 0
      %p103 = por %p101, %p102
      %s105 = sadd.s32 %s104, 1
      %p108 = scmp.eq.s32.totalorder %s33, 3
      %p109 = scmp.ne.s32.totalorder %s104, %s106
      %p110 = scmp.eq.s32.totalorder %s33, 0
      %p111 = por %p109, %p110
      %p112 = scmp.ne.s32.totalorder %s104, %s106
      %p113 = scmp.eq.s32.totalorder %s38, 3
      %p114 = por %p112, %p113
      %p115 = scmp.ne.s32.totalorder %s106, %s107
      %p116 = scmp.eq.s32.totalorder %s38, 0
      %p117 = por %p115, %p116
      %p118 = scmp.ne.s32.totalorder %s106, %s107
      %p119 = scmp.eq.s32.totalorder %s39, 3
      %p120 = por %p118, %p119
      %p122 = scmp.ne.s32.totalorder %s107, %s121
      %p123 = scmp.eq.s32.totalorder %s39, 0
      %p124 = por %p122, %p123
      %s126 = sadd.s32 %s125, 1
      %p129 = scmp.eq.s32.totalorder %s33, 3
      %p130 = scmp.ne.s32.totalorder %s125, %s127
      %p131 = scmp.eq.s32.totalorder %s33, 0
      %p132 = por %p130, %p131
      %p133 = scmp.ne.s32.totalorder %s125, %s127
      %p134 = scmp.eq.s32.totalorder %s38, 3
      %p135 = por %p133, %p134
      %p136 = scmp.ne.s32.totalorder %s127, %s128
      %p137 = scmp.eq.s32.totalorder %s38, 0
      %p138 = por %p136, %p137
      %p139 = scmp.ne.s32.totalorder %s127, %s128
      %p140 = scmp.eq.s32.totalorder %s39, 3
      %p141 = por %p139, %p140
      %p143 = scmp.ne.s32.totalorder %s128, %s142
      %p144 = scmp.eq.s32.totalorder %s39, 0
      %p145 = por %p143, %p144
      %s147 = sadd.s32 %s146, 1
      %p150 = scmp.eq.s32.totalorder %s33, 3
      %p151 = scmp.ne.s32.totalorder %s146, %s148
      %p152 = scmp.eq.s32.totalorder %s33, 0
      %p153 = por %p151, %p152
      %p154 = scmp.ne.s32.totalorder %s146, %s148
      %p155 = scmp.eq.s32.totalorder %s38, 3
      %p156 = por %p154, %p155
      %p157 = scmp.ne.s32.totalorder %s148, %s149
      %p158 = scmp.eq.s32.totalorder %s38, 0
      %p159 = por %p157, %p158
      %p160 = scmp.ne.s32.totalorder %s148, %s149
      %p161 = scmp.eq.s32.totalorder %s39, 3
      %p162 = por %p160, %p161
      %p164 = scmp.ne.s32.totalorder %s149, %s163
      %p165 = scmp.eq.s32.totalorder %s39, 0
      %p166 = por %p164, %p165
      %s168 = sadd.s32 %s167, 1
      %p171 = scmp.eq.s32.totalorder %s33, 3
      %p172 = scmp.ne.s32.totalorder %s167, %s169
      %p173 = scmp.eq.s32.totalorder %s33, 0
      %p174 = por %p172, %p173
      %p175 = scmp.ne.s32.totalorder %s167, %s169
      %p176 = scmp.eq.s32.totalorder %s38, 3
      %p177 = por %p175, %p176
      %p178 = scmp.ne.s32.totalorder %s169, %s170
      %p179 = scmp.eq.s32.totalorder %s38, 0
      %p180 = por %p178, %p179
      %p181 = scmp.ne.s32.totalorder %s169, %s170
      %p182 = scmp.eq.s32.totalorder %s39, 3
      %p183 = por %p181, %p182
      %p185 = scmp.ne.s32.totalorder %s170, %s184
      %p186 = scmp.eq.s32.totalorder %s39, 0
      %p187 = por %p185, %p186
      %s189 = sadd.s32 %s188, 1
      %p192 = scmp.eq.s32.totalorder %s33, 3
      %p193 = scmp.ne.s32.totalorder %s188, %s190
      %p194 = scmp.eq.s32.totalorder %s33, 0
      %p195 = por %p193, %p194
      %p196 = scmp.ne.s32.totalorder %s188, %s190
      %p197 = scmp.eq.s32.totalorder %s38, 3
      %p198 = por %p196, %p197
      %p199 = scmp.ne.s32.totalorder %s190, %s191
      %p200 = scmp.eq.s32.totalorder %s38, 0
      %p201 = por %p199, %p200
      %p202 = scmp.ne.s32.totalorder %s190, %s191
      %p203 = scmp.eq.s32.totalorder %s39, 3
      %p204 = por %p202, %p203
      %p206 = scmp.ne.s32.totalorder %s191, %s205
      %p207 = scmp.eq.s32.totalorder %s39, 0
      %p208 = por %p206, %p207
      %s210 = sadd.s32 %s209, 1
      %p213 = scmp.eq.s32.totalorder %s33, 3
      %p214 = scmp.ne.s32.totalorder %s209, %s211
      %p215 = scmp.eq.s32.totalorder %s33, 0
      %p216 = por %p214, %p215
      %p217 = scmp.ne.s32.totalorder %s209, %s211
      %p218 = scmp.eq.s32.totalorder %s38, 3
      %p219 = por %p217, %p218
      %p220 = scmp.ne.s32.totalorder %s211, %s212
      %p221 = scmp.eq.s32.totalorder %s38, 0
      %p222 = por %p220, %p221
      %p223 = scmp.ne.s32.totalorder %s211, %s212
      %p224 = scmp.eq.s32.totalorder %s39, 3
      %p225 = por %p223, %p224
      %p227 = scmp.ne.s32.totalorder %s212, %s226
      %p228 = scmp.eq.s32.totalorder %s39, 0
      %p229 = por %p227, %p228
      %s231 = sadd.s32 %s230, 1
      %p234 = scmp.eq.s32.totalorder %s33, 3
      %p235 = scmp.ne.s32.totalorder %s230, %s232
      %p236 = scmp.eq.s32.totalorder %s33, 0
      %p237 = por %p235, %p236
      %p238 = scmp.ne.s32.totalorder %s230, %s232
      %p239 = scmp.eq.s32.totalorder %s38, 3
      %p240 = por %p238, %p239
      %p241 = scmp.ne.s32.totalorder %s232, %s233
      %p242 = scmp.eq.s32.totalorder %s38, 0
      %p243 = por %p241, %p242
      %p244 = scmp.ne.s32.totalorder %s232, %s233
      %p245 = scmp.eq.s32.totalorder %s39, 3
      %p246 = por %p244, %p245
      %p248 = scmp.ne.s32.totalorder %s233, %s247
      %p249 = scmp.eq.s32.totalorder %s39, 0
      %p250 = por %p248, %p249
      %s252 = sadd.s32 %s251, 1
      %p255 = scmp.eq.s32.totalorder %s33, 3
      %p256 = scmp.ne.s32.totalorder %s251, %s253
      %p257 = scmp.eq.s32.totalorder %s33, 0
      %p258 = por %p256, %p257
      %p259 = scmp.ne.s32.totalorder %s251, %s253
      %p260 = scmp.eq.s32.totalorder %s38, 3
      %p261 = por %p259, %p260
      %p262 = scmp.ne.s32.totalorder %s253, %s254
      %p263 = scmp.eq.s32.totalorder %s38, 0
      %p264 = por %p262, %p263
      %p265 = scmp.ne.s32.totalorder %s253, %s254
      %p266 = scmp.eq.s32.totalorder %s39, 3
      %p267 = por %p265, %p266
      %p269 = scmp.ne.s32.totalorder %s254, %s268
      %p270 = scmp.eq.s32.totalorder %s39, 0
      %p271 = por %p269, %p270
      %s273 = sadd.s32 %s272, 1
      %p276 = scmp.eq.s32.totalorder %s33, 3
      %p277 = scmp.ne.s32.totalorder %s272, %s274
      %p278 = scmp.eq.s32.totalorder %s33, 0
      %p279 = por %p277, %p278
      %p280 = scmp.ne.s32.totalorder %s272, %s274
      %p281 = scmp.eq.s32.totalorder %s38, 3
      %p282 = por %p280, %p281
      %p283 = scmp.ne.s32.totalorder %s274, %s275
      %p284 = scmp.eq.s32.totalorder %s38, 0
      %p285 = por %p283, %p284
      %p286 = scmp.ne.s32.totalorder %s274, %s275
      %p287 = scmp.eq.s32.totalorder %s39, 3
      %p288 = por %p286, %p287
      %p290 = scmp.ne.s32.totalorder %s275, %s289
      %p291 = scmp.eq.s32.totalorder %s39, 0
      %p292 = por %p290, %p291
      %s294 = sadd.s32 %s293, 1
      %p297 = scmp.eq.s32.totalorder %s33, 3
      %p298 = scmp.ne.s32.totalorder %s293, %s295
      %p299 = scmp.eq.s32.totalorder %s33, 0
      %p300 = por %p298, %p299
      %p301 = scmp.ne.s32.totalorder %s293, %s295
      %p302 = scmp.eq.s32.totalorder %s38, 3
      %p303 = por %p301, %p302
      %p304 = scmp.ne.s32.totalorder %s295, %s296
      %p305 = scmp.eq.s32.totalorder %s38, 0
      %p306 = por %p304, %p305
      %p307 = scmp.ne.s32.totalorder %s295, %s296
      %p308 = scmp.eq.s32.totalorder %s39, 3
      %p309 = por %p307, %p308
      %p311 = scmp.ne.s32.totalorder %s296, %s310
      %p312 = scmp.eq.s32.totalorder %s39, 0
      %p313 = por %p311, %p312
      %s315 = sadd.s32 %s314, 1
      %p318 = scmp.eq.s32.totalorder %s33, 3
      %p319 = scmp.ne.s32.totalorder %s314, %s316
      %p320 = scmp.eq.s32.totalorder %s33, 0
      %p321 = por %p319, %p320
      %p322 = scmp.ne.s32.totalorder %s314, %s316
      %p323 = scmp.eq.s32.totalorder %s38, 3
      %p324 = por %p322, %p323
      %p325 = scmp.ne.s32.totalorder %s316, %s317
      %p326 = scmp.eq.s32.totalorder %s38, 0
      %p327 = por %p325, %p326
      %p328 = scmp.ne.s32.totalorder %s316, %s317
      %p329 = scmp.eq.s32.totalorder %s39, 3
      %p330 = por %p328, %p329
      %p332 = scmp.ne.s32.totalorder %s317, %s331
      %p333 = scmp.eq.s32.totalorder %s39, 0
      %p334 = por %p332, %p333
      %s336 = sadd.s32 %s335, 1
      %p339 = scmp.eq.s32.totalorder %s33, 3
      %p340 = scmp.ne.s32.totalorder %s335, %s337
      %p341 = scmp.eq.s32.totalorder %s33, 0
      %p342 = por %p340, %p341
      %p343 = scmp.ne.s32.totalorder %s335, %s337
      %p344 = scmp.eq.s32.totalorder %s38, 3
      %p345 = por %p343, %p344
      %p346 = scmp.ne.s32.totalorder %s337, %s338
      %p347 = scmp.eq.s32.totalorder %s38, 0
      %p348 = por %p346, %p347
      %p349 = scmp.ne.s32.totalorder %s337, %s338
      %p350 = scmp.eq.s32.totalorder %s39, 3
      %p351 = por %p349, %p350
      %p353 = scmp.ne.s32.totalorder %s338, %s352
      %p354 = scmp.eq.s32.totalorder %s39, 0
      %p355 = por %p353, %p354
      %s357 = sadd.s32 %s356, 1
      %p360 = scmp.eq.s32.totalorder %s33, 3
      %p361 = scmp.ne.s32.totalorder %s356, %s358
      %p362 = scmp.eq.s32.totalorder %s33, 0
      %p363 = por %p361, %p362
      %p364 = scmp.ne.s32.totalorder %s356, %s358
      %p365 = scmp.eq.s32.totalorder %s38, 3
      %p366 = por %p364, %p365
      %p367 = scmp.ne.s32.totalorder %s358, %s359
      %p368 = scmp.eq.s32.totalorder %s38, 0
      %p369 = por %p367, %p368
      %p370 = scmp.ne.s32.totalorder %s358, %s359
      %p371 = scmp.eq.s32.totalorder %s39, 3
      %p372 = por %p370, %p371
      %p374 = scmp.ne.s32.totalorder %s359, %s373
      %p375 = scmp.eq.s32.totalorder %s39, 0
      %p376 = por %p374, %p375
      %s378 = sadd.s32 %s377, 1
      %p381 = scmp.eq.s32.totalorder %s33, 3
      %p382 = scmp.ne.s32.totalorder %s377, %s379
      %p383 = scmp.eq.s32.totalorder %s33, 0
      %p384 = por %p382, %p383
      %p385 = scmp.ne.s32.totalorder %s377, %s379
      %p386 = scmp.eq.s32.totalorder %s38, 3
      %p387 = por %p385, %p386
      %p388 = scmp.ne.s32.totalorder %s379, %s380
      %p389 = scmp.eq.s32.totalorder %s38, 0
      %p390 = por %p388, %p389
      %p391 = scmp.ne.s32.totalorder %s379, %s380
      %p392 = scmp.eq.s32.totalorder %s39, 3
      %p393 = por %p391, %p392
      %p395 = scmp.ne.s32.totalorder %s380, %s394
      %p396 = scmp.eq.s32.totalorder %s39, 0
      %p397 = por %p395, %p396
      %s399 = sadd.s32 %s398, 1
      %p402 = scmp.eq.s32.totalorder %s33, 3
      %p403 = scmp.ne.s32.totalorder %s398, %s400
      %p404 = scmp.eq.s32.totalorder %s33, 0
      %p405 = por %p403, %p404
      %p406 = scmp.ne.s32.totalorder %s398, %s400
      %p407 = scmp.eq.s32.totalorder %s38, 3
      %p408 = por %p406, %p407
      %p409 = scmp.ne.s32.totalorder %s400, %s401
      %p410 = scmp.eq.s32.totalorder %s38, 0
      %p411 = por %p409, %p410
      %p412 = scmp.ne.s32.totalorder %s400, %s401
      %p413 = scmp.eq.s32.totalorder %s39, 3
      %p414 = por %p412, %p413
      %p416 = scmp.ne.s32.totalorder %s401, %s415
      %p417 = scmp.eq.s32.totalorder %s39, 0
      %p418 = por %p416, %p417
      %s420 = sadd.s32 %s419, 1
      %p423 = scmp.eq.s32.totalorder %s33, 3
      %p424 = scmp.ne.s32.totalorder %s419, %s421
      %p425 = scmp.eq.s32.totalorder %s33, 0
      %p426 = por %p424, %p425
      %p427 = scmp.ne.s32.totalorder %s419, %s421
      %p428 = scmp.eq.s32.totalorder %s38, 3
      %p429 = por %p427, %p428
      %p430 = scmp.ne.s32.totalorder %s421, %s422
      %p431 = scmp.eq.s32.totalorder %s38, 0
      %p432 = por %p430, %p431
      %p433 = scmp.ne.s32.totalorder %s421, %s422
      %p434 = scmp.eq.s32.totalorder %s39, 3
      %p435 = por %p433, %p434
      %p437 = scmp.ne.s32.totalorder %s422, %s436
      %p438 = scmp.eq.s32.totalorder %s39, 0
      %p439 = por %p437, %p438
      %s441 = sadd.s32 %s440, 1
      %p444 = scmp.eq.s32.totalorder %s33, 3
      %p445 = scmp.ne.s32.totalorder %s440, %s442
      %p446 = scmp.eq.s32.totalorder %s33, 0
      %p447 = por %p445, %p446
      %p448 = scmp.ne.s32.totalorder %s440, %s442
      %p449 = scmp.eq.s32.totalorder %s38, 3
      %p450 = por %p448, %p449
      %p451 = scmp.ne.s32.totalorder %s442, %s443
      %p452 = scmp.eq.s32.totalorder %s38, 0
      %p453 = por %p451, %p452
      %p454 = scmp.ne.s32.totalorder %s442, %s443
      %p455 = scmp.eq.s32.totalorder %s39, 3
      %p456 = por %p454, %p455
      %p458 = scmp.ne.s32.totalorder %s443, %s457
      %p459 = scmp.eq.s32.totalorder %s39, 0
      %p460 = por %p458, %p459
      %s462 = sadd.s32 %s461, 1
      %p465 = scmp.eq.s32.totalorder %s33, 3
      %p466 = scmp.ne.s32.totalorder %s461, %s463
      %p467 = scmp.eq.s32.totalorder %s33, 0
      %p468 = por %p466, %p467
      %p469 = scmp.ne.s32.totalorder %s461, %s463
      %p470 = scmp.eq.s32.totalorder %s38, 3
      %p471 = por %p469, %p470
      %p472 = scmp.ne.s32.totalorder %s463, %s464
      %p473 = scmp.eq.s32.totalorder %s38, 0
      %p474 = por %p472, %p473
      %p475 = scmp.ne.s32.totalorder %s463, %s464
      %p476 = scmp.eq.s32.totalorder %s39, 3
      %p477 = por %p475, %p476
      %p479 = scmp.ne.s32.totalorder %s464, %s478
      %p480 = scmp.eq.s32.totalorder %s39, 0
      %p481 = por %p479, %p480
      %s483 = sadd.s32 %s482, 1
      %p486 = scmp.eq.s32.totalorder %s33, 3
      %p487 = scmp.ne.s32.totalorder %s482, %s484
      %p488 = scmp.eq.s32.totalorder %s33, 0
      %p489 = por %p487, %p488
      %p490 = scmp.ne.s32.totalorder %s482, %s484
      %p491 = scmp.eq.s32.totalorder %s38, 3
      %p492 = por %p490, %p491
      %p493 = scmp.ne.s32.totalorder %s484, %s485
      %p494 = scmp.eq.s32.totalorder %s38, 0
      %p495 = por %p493, %p494
      %p496 = scmp.ne.s32.totalorder %s484, %s485
      %p497 = scmp.eq.s32.totalorder %s39, 3
      %p498 = por %p496, %p497
      %p500 = scmp.ne.s32.totalorder %s485, %s499
      %p501 = scmp.eq.s32.totalorder %s39, 0
      %p502 = por %p500, %p501
      %s504 = sadd.s32 %s503, 1
      %p507 = scmp.eq.s32.totalorder %s33, 3
      %p508 = scmp.ne.s32.totalorder %s503, %s505
      %p509 = scmp.eq.s32.totalorder %s33, 0
      %p510 = por %p508, %p509
      %p511 = scmp.ne.s32.totalorder %s503, %s505
      %p512 = scmp.eq.s32.totalorder %s38, 3
      %p513 = por %p511, %p512
      %p514 = scmp.ne.s32.totalorder %s505, %s506
      %p515 = scmp.eq.s32.totalorder %s38, 0
      %p516 = por %p514, %p515
      %p517 = scmp.ne.s32.totalorder %s505, %s506
      %p518 = scmp.eq.s32.totalorder %s39, 3
      %p519 = por %p517, %p518
      %p521 = scmp.ne.s32.totalorder %s506, %s520
      %p522 = scmp.eq.s32.totalorder %s39, 0
      %p523 = por %p521, %p522
      %s524 = ssub.s32 %s33, %s40
      %p525 = scmp.eq.s32.totalorder %s524, 0
      %s527 = sadd.s32 %s526, 1
      %s528 = scalar_select %p525, %s526, %s527
      %p531 = pneg %p525
      %p532 = scmp.eq.s32.totalorder %s33, 3
      %p533 = por %p531, %p532
      %p534 = scmp.ne.s32.totalorder %s526, %s529
      %p535 = scmp.eq.s32.totalorder %s33, 0
      %p536 = por %p534, %p535
      %p537 = scmp.ne.s32.totalorder %s526, %s529
      %p538 = scmp.eq.s32.totalorder %s38, 3
      %p539 = por %p537, %p538
      %p540 = scmp.ne.s32.totalorder %s529, %s530
      %p541 = scmp.eq.s32.totalorder %s38, 0
      %p542 = por %p540, %p541
      %p543 = scmp.ne.s32.totalorder %s529, %s530
      %p544 = scmp.eq.s32.totalorder %s39, 3
      %p545 = por %p543, %p544
      %p547 = scmp.ne.s32.totalorder %s530, %s546
      %p548 = scmp.eq.s32.totalorder %s39, 0
      %p549 = por %p547, %p548
      %s550 = ssub.s32 %s33, %s40
      %p551 = scmp.eq.s32.totalorder %s550, 0
      %s553 = sadd.s32 %s552, 1
      %s554 = scalar_select %p551, %s552, %s553
      %p557 = pneg %p551
      %p558 = scmp.eq.s32.totalorder %s33, 3
      %p559 = por %p557, %p558
      %p560 = scmp.ne.s32.totalorder %s552, %s555
      %p561 = scmp.eq.s32.totalorder %s33, 0
      %p562 = por %p560, %p561
      %p563 = scmp.ne.s32.totalorder %s552, %s555
      %p564 = scmp.eq.s32.totalorder %s38, 3
      %p565 = por %p563, %p564
      %p566 = scmp.ne.s32.totalorder %s555, %s556
      %p567 = scmp.eq.s32.totalorder %s38, 0
      %p568 = por %p566, %p567
      %p569 = scmp.ne.s32.totalorder %s555, %s556
      %p570 = scmp.eq.s32.totalorder %s39, 3
      %p571 = por %p569, %p570
      %p573 = scmp.ne.s32.totalorder %s556, %s572
      %p574 = scmp.eq.s32.totalorder %s39, 0
      %p575 = por %p573, %p574
      %s577 = sadd.s32 %s576, 1
      %p580 = scmp.eq.s32.totalorder %s33, 3
      %p581 = scmp.ne.s32.totalorder %s576, %s578
      %p582 = scmp.eq.s32.totalorder %s33, 0
      %p583 = por %p581, %p582
      %p584 = scmp.ne.s32.totalorder %s576, %s578
      %p585 = scmp.eq.s32.totalorder %s38, 3
      %p586 = por %p584, %p585
      %p587 = scmp.ne.s32.totalorder %s578, %s579
      %p588 = scmp.eq.s32.totalorder %s38, 0
      %p589 = por %p587, %p588
      %p590 = scmp.ne.s32.totalorder %s578, %s579
      %p591 = scmp.eq.s32.totalorder %s39, 3
      %p592 = por %p590, %p591
      %p594 = scmp.ne.s32.totalorder %s579, %s593
      %p595 = scmp.eq.s32.totalorder %s39, 0
      %p596 = por %p594, %p595
      %s598 = sadd.s32 %s597, 1
      %p601 = scmp.eq.s32.totalorder %s33, 3
      %p602 = scmp.ne.s32.totalorder %s597, %s599
      %p603 = scmp.eq.s32.totalorder %s33, 0
      %p604 = por %p602, %p603
      %p605 = scmp.ne.s32.totalorder %s597, %s599
      %p606 = scmp.eq.s32.totalorder %s38, 3
      %p607 = por %p605, %p606
      %p608 = scmp.ne.s32.totalorder %s599, %s600
      %p609 = scmp.eq.s32.totalorder %s38, 0
      %p610 = por %p608, %p609
      %p611 = scmp.ne.s32.totalorder %s599, %s600
      %p612 = scmp.eq.s32.totalorder %s39, 3
      %p613 = por %p611, %p612
      %p615 = scmp.ne.s32.totalorder %s600, %s614
      %p616 = scmp.eq.s32.totalorder %s39, 0
      %p617 = por %p615, %p616
      %p618 = scmp.le.s32.totalorder 1, %s33
      %p619 = scmp.lt.s32.totalorder %s33, 5
      %p620 = pnand %p618, %p619
      %p621 = pneg %p620
      // Predicated region
      $region9: #{densecl_forward.1} parent=5 // pred_check
        _
      $region10: #{densecl_forward.1} parent=5 // pred_check_branch
        %623 = sbr.rel (%p620) target = $region12
      $region11: #{densecl_forward.1} parent=5 // pred_region
        %s624 = ssub.s32 %s33, 1
        // Predicated region
        $region13: #{densecl_forward.1} parent=11 // pred_check
          %p625 = pneg %p54
        $region14: #{densecl_forward.1} parent=11 // pred_check_branch
          %627 = sbr.rel (%p625) target = $region16
        $region15: #{densecl_forward.1} parent=11 // pred_region
          _
        $region16: #{densecl_forward.1} parent=11 // pred_fallthru
          _
        // Predicated region
        $region17: #{densecl_forward.1} parent=11 // pred_check
          %p628 = pneg %p75
        $region18: #{densecl_forward.1} parent=11 // pred_check_branch
          %630 = sbr.rel (%p628) target = $region20
        $region19: #{densecl_forward.1} parent=11 // pred_region
          _
        $region20: #{densecl_forward.1} parent=11 // pred_fallthru
          _
        // Predicated region
        $region21: #{densecl_forward.1} parent=11 // pred_check
          %p631 = pneg %p96
        $region22: #{densecl_forward.1} parent=11 // pred_check_branch
          %633 = sbr.rel (%p631) target = $region24
        $region23: #{densecl_forward.1} parent=11 // pred_region
          _
        $region24: #{densecl_forward.1} parent=11 // pred_fallthru
          _
        // Predicated region
        $region25: #{densecl_forward.1} parent=11 // pred_check
          %p634 = pneg %p117
        $region26: #{densecl_forward.1} parent=11 // pred_check_branch
          %636 = sbr.rel (%p634) target = $region28
        $region27: #{densecl_forward.1} parent=11 // pred_region
          _
        $region28: #{densecl_forward.1} parent=11 // pred_fallthru
          _
        // Predicated region
        $region29: #{densecl_forward.1} parent=11 // pred_check
          %p637 = pneg %p138
        $region30: #{densecl_forward.1} parent=11 // pred_check_branch
          %639 = sbr.rel (%p637) target = $region32
        $region31: #{densecl_forward.1} parent=11 // pred_region
          _
        $region32: #{densecl_forward.1} parent=11 // pred_fallthru
          _
        // Predicated region
        $region33: #{densecl_forward.1} parent=11 // pred_check
          %p640 = pneg %p159
        $region34: #{densecl_forward.1} parent=11 // pred_check_branch
          %642 = sbr.rel (%p640) target = $region36
        $region35: #{densecl_forward.1} parent=11 // pred_region
          _
        $region36: #{densecl_forward.1} parent=11 // pred_fallthru
          _
        // Predicated region
        $region37: #{densecl_forward.1} parent=11 // pred_check
          %p643 = pneg %p180
        $region38: #{densecl_forward.1} parent=11 // pred_check_branch
          %645 = sbr.rel (%p643) target = $region40
        $region39: #{densecl_forward.1} parent=11 // pred_region
          _
        $region40: #{densecl_forward.1} parent=11 // pred_fallthru
          _
        // Predicated region
        $region41: #{densecl_forward.1} parent=11 // pred_check
          %p646 = pneg %p201
        $region42: #{densecl_forward.1} parent=11 // pred_check_branch
          %648 = sbr.rel (%p646) target = $region44
        $region43: #{densecl_forward.1} parent=11 // pred_region
          _
        $region44: #{densecl_forward.1} parent=11 // pred_fallthru
          _
        // Predicated region
        $region45: #{densecl_forward.1} parent=11 // pred_check
          %p649 = pneg %p222
        $region46: #{densecl_forward.1} parent=11 // pred_check_branch
          %651 = sbr.rel (%p649) target = $region48
        $region47: #{densecl_forward.1} parent=11 // pred_region
          _
        $region48: #{densecl_forward.1} parent=11 // pred_fallthru
          _
        // Predicated region
        $region49: #{densecl_forward.1} parent=11 // pred_check
          %p652 = pneg %p243
        $region50: #{densecl_forward.1} parent=11 // pred_check_branch
          %654 = sbr.rel (%p652) target = $region52
        $region51: #{densecl_forward.1} parent=11 // pred_region
          _
        $region52: #{densecl_forward.1} parent=11 // pred_fallthru
          _
        // Predicated region
        $region53: #{densecl_forward.1} parent=11 // pred_check
          %p655 = pneg %p264
        $region54: #{densecl_forward.1} parent=11 // pred_check_branch
          %657 = sbr.rel (%p655) target = $region56
        $region55: #{densecl_forward.1} parent=11 // pred_region
          _
        $region56: #{densecl_forward.1} parent=11 // pred_fallthru
          _
        // Predicated region
        $region57: #{densecl_forward.1} parent=11 // pred_check
          %p658 = pneg %p285
        $region58: #{densecl_forward.1} parent=11 // pred_check_branch
          %660 = sbr.rel (%p658) target = $region60
        $region59: #{densecl_forward.1} parent=11 // pred_region
          _
        $region60: #{densecl_forward.1} parent=11 // pred_fallthru
          _
        // Predicated region
        $region61: #{densecl_forward.1} parent=11 // pred_check
          %p661 = pneg %p306
        $region62: #{densecl_forward.1} parent=11 // pred_check_branch
          %663 = sbr.rel (%p661) target = $region64
        $region63: #{densecl_forward.1} parent=11 // pred_region
          _
        $region64: #{densecl_forward.1} parent=11 // pred_fallthru
          _
        // Predicated region
        $region65: #{densecl_forward.1} parent=11 // pred_check
          %p664 = pneg %p327
        $region66: #{densecl_forward.1} parent=11 // pred_check_branch
          %666 = sbr.rel (%p664) target = $region68
        $region67: #{densecl_forward.1} parent=11 // pred_region
          _
        $region68: #{densecl_forward.1} parent=11 // pred_fallthru
          _
        // Predicated region
        $region69: #{densecl_forward.1} parent=11 // pred_check
          %p667 = pneg %p348
        $region70: #{densecl_forward.1} parent=11 // pred_check_branch
          %669 = sbr.rel (%p667) target = $region72
        $region71: #{densecl_forward.1} parent=11 // pred_region
          _
        $region72: #{densecl_forward.1} parent=11 // pred_fallthru
          _
        // Predicated region
        $region73: #{densecl_forward.1} parent=11 // pred_check
          %p670 = pneg %p369
        $region74: #{densecl_forward.1} parent=11 // pred_check_branch
          %672 = sbr.rel (%p670) target = $region76
        $region75: #{densecl_forward.1} parent=11 // pred_region
          _
        $region76: #{densecl_forward.1} parent=11 // pred_fallthru
          _
        // Predicated region
        $region77: #{densecl_forward.1} parent=11 // pred_check
          %p673 = pneg %p390
        $region78: #{densecl_forward.1} parent=11 // pred_check_branch
          %675 = sbr.rel (%p673) target = $region80
        $region79: #{densecl_forward.1} parent=11 // pred_region
          _
        $region80: #{densecl_forward.1} parent=11 // pred_fallthru
          _
        // Predicated region
        $region81: #{densecl_forward.1} parent=11 // pred_check
          %p676 = pneg %p411
        $region82: #{densecl_forward.1} parent=11 // pred_check_branch
          %678 = sbr.rel (%p676) target = $region84
        $region83: #{densecl_forward.1} parent=11 // pred_region
          _
        $region84: #{densecl_forward.1} parent=11 // pred_fallthru
          _
        // Predicated region
        $region85: #{densecl_forward.1} parent=11 // pred_check
          %p679 = pneg %p432
        $region86: #{densecl_forward.1} parent=11 // pred_check_branch
          %681 = sbr.rel (%p679) target = $region88
        $region87: #{densecl_forward.1} parent=11 // pred_region
          _
        $region88: #{densecl_forward.1} parent=11 // pred_fallthru
          _
        // Predicated region
        $region89: #{densecl_forward.1} parent=11 // pred_check
          %p682 = pneg %p453
        $region90: #{densecl_forward.1} parent=11 // pred_check_branch
          %684 = sbr.rel (%p682) target = $region92
        $region91: #{densecl_forward.1} parent=11 // pred_region
          _
        $region92: #{densecl_forward.1} parent=11 // pred_fallthru
          _
        // Predicated region
        $region93: #{densecl_forward.1} parent=11 // pred_check
          %p685 = pneg %p474
        $region94: #{densecl_forward.1} parent=11 // pred_check_branch
          %687 = sbr.rel (%p685) target = $region96
        $region95: #{densecl_forward.1} parent=11 // pred_region
          _
        $region96: #{densecl_forward.1} parent=11 // pred_fallthru
          _
        // Predicated region
        $region97: #{densecl_forward.1} parent=11 // pred_check
          %p688 = pneg %p495
        $region98: #{densecl_forward.1} parent=11 // pred_check_branch
          %690 = sbr.rel (%p688) target = $region100
        $region99: #{densecl_forward.1} parent=11 // pred_region
          _
        $region100: #{densecl_forward.1} parent=11 // pred_fallthru
          _
        // Predicated region
        $region101: #{densecl_forward.1} parent=11 // pred_check
          %p691 = pneg %p516
        $region102: #{densecl_forward.1} parent=11 // pred_check_branch
          %693 = sbr.rel (%p691) target = $region104
        $region103: #{densecl_forward.1} parent=11 // pred_region
          _
        $region104: #{densecl_forward.1} parent=11 // pred_fallthru
          _
      $region12: #{densecl_forward.1} parent=5 // pred_fallthru
        _
      %p694 = scmp.lt.s32.totalorder %s33, 4
      // Predicated region
      $region105: #{densecl_forward.1} parent=5 // pred_check
        %p695 = pneg %p694
      $region106: #{densecl_forward.1} parent=5 // pred_check_branch
        %697 = sbr.rel (%p695) target = $region108
      $region107: #{densecl_forward.1} parent=5 // pred_region
        // Predicated region
        $region109: #{densecl_forward.1} parent=107 // pred_check
          %p698 = pneg %p536
        $region110: #{densecl_forward.1} parent=107 // pred_check_branch
          %700 = sbr.rel (%p698) target = $region112
        $region111: #{densecl_forward.1} parent=107 // pred_region
          %s701 = sand.u32 %s526, 1
          %s702 = sand.u32 %s526, 1
          %s703 = smul.addr %s702, 8
          %s704 = scalar_lea.vmem [#allocation12], %s703
          %s705 = smul.addr %s33, 4
          %s706 = scalar_lea.vmem %s23, %s705
          // Predicated region
          $region113: #{densecl_forward.1} parent=111 // pred_check
            _
          $region114: #{densecl_forward.1} parent=111 // pred_check_branch
            %708 = sbr.rel (0) target = $region116
          $region115: #{densecl_forward.1} parent=111 // pred_region
            // Predicated region
            $region117: #{densecl_forward.1} parent=115 // pred_check
              _
            $region118: #{densecl_forward.1} parent=115 // pred_check_branch
              %710 = sbr.rel target = $region120
            $region119: #{densecl_forward.1} parent=115 // pred_region
              // Predicated region
              $region132: #{densecl_forward.1} parent=119 // pred_check
                _
              $region133: #{densecl_forward.1} parent=119 // pred_check_branch
                %728 = sbr.rel (0) target = $region135
              $region134: #{densecl_forward.1} parent=119 // pred_region
                loop: start=0, step=1, limit=1
                $region136: #{densecl_forward.1} parent=134 // loop_pre_header
                  _
                $region137: #{densecl_forward.1} parent=134 // loop_header
                  %s730 = sphi 0, %s734
                  %p731 = scmp.ge.s32.totalorder %s730, 1
                  %s735 = sphi %s706, %s706
                  %s736 = sphi %s704, %s704
                $region138: #{densecl_forward.1} parent=134 // loop_header_branch
                  %733 = sbr.rel (%p731) target = $region142
                $region139: #{densecl_forward.1} parent=134 // loop_body
                  _
                $region140: #{densecl_forward.1} parent=134 // loop_footer
                  %s734 = sadd.s32 1, %s730
                $region141: #{densecl_forward.1} parent=134 // loop_footer_branch
                  %729 = sbr.rel target = $region137
                $region142: #{densecl_forward.1} parent=134 // loop_exit
                  _
                %s738 = ssub.s32 16, 1
                loop: start=0, step=1, limit=1
                $region143: #{densecl_forward.1} parent=134 // loop_pre_header
                  _
                $region144: #{densecl_forward.1} parent=134 // loop_header
                  %s740 = sphi 0, %s744
                  %p741 = scmp.ge.s32.totalorder %s740, 1
                  %s745 = sphi %s706, %s706
                  %s746 = sphi %s704, %s704
                $region145: #{densecl_forward.1} parent=134 // loop_header_branch
                  %743 = sbr.rel (%p741) target = $region149
                $region146: #{densecl_forward.1} parent=134 // loop_body
                  %v747 = vld [vmem:[%s745] sm:%s738]
                  %748 = vst [vmem:[%s746] sm:%s738] %v747
                  %v749 = vld [vmem:[%s745 + $0x10] sm:%s738]
                  %750 = vst [vmem:[%s746 + $0x4] sm:%s738] %v749
                $region147: #{densecl_forward.1} parent=134 // loop_footer
                  %s744 = sadd.s32 1, %s740
                $region148: #{densecl_forward.1} parent=134 // loop_footer_branch
                  %739 = sbr.rel target = $region144
                $region149: #{densecl_forward.1} parent=134 // loop_exit
                  _
              $region135: #{densecl_forward.1} parent=119 // pred_fallthru
                _
            $region120: #{densecl_forward.1} parent=115 // pred_fallthru
              _
            // Predicated region
            $region121: #{densecl_forward.1} parent=115 // pred_check
              _
            $region122: #{densecl_forward.1} parent=115 // pred_check_branch
              %712 = sbr.rel (0) target = $region124
            $region123: #{densecl_forward.1} parent=115 // pred_region
              %s714 = ssub.s32 16, 1
              loop: start=0, step=1, limit=1
              $region125: #{densecl_forward.1} parent=123 // loop_pre_header
                _
              $region126: #{densecl_forward.1} parent=123 // loop_header
                %s716 = sphi 0, %s720
                %p717 = scmp.ge.s32.totalorder %s716, 1
                %s721 = sphi %s706, %s706
                %s722 = sphi %s704, %s704
              $region127: #{densecl_forward.1} parent=123 // loop_header_branch
                %719 = sbr.rel (%p717) target = $region131
              $region128: #{densecl_forward.1} parent=123 // loop_body
                %v723 = vld [vmem:[%s721] sm:%s714]
                %724 = vst [vmem:[%s722] sm:%s714] %v723
                %v725 = vld [vmem:[%s721 + $0x10] sm:%s714]
                %726 = vst [vmem:[%s722 + $0x4] sm:%s714] %v725
              $region129: #{densecl_forward.1} parent=123 // loop_footer
                %s720 = sadd.s32 1, %s716
              $region130: #{densecl_forward.1} parent=123 // loop_footer_branch
                %715 = sbr.rel target = $region126
              $region131: #{densecl_forward.1} parent=123 // loop_exit
                _
            $region124: #{densecl_forward.1} parent=115 // pred_fallthru
              _
          $region116: #{densecl_forward.1} parent=111 // pred_fallthru
            _
          %751 = vnop
        $region112: #{densecl_forward.1} parent=107 // pred_fallthru
          _
        // Predicated region
        $region150: #{densecl_forward.1} parent=107 // pred_check
          %p752 = pneg %p562
        $region151: #{densecl_forward.1} parent=107 // pred_check_branch
          %754 = sbr.rel (%p752) target = $region153
        $region152: #{densecl_forward.1} parent=107 // pred_region
          %s755 = sand.u32 %s552, 1
          %s756 = sand.u32 %s552, 1
          %s757 = smul.addr %s756, 8
          %s758 = scalar_lea.vmem [#allocation13], %s757
          %s759 = smul.addr %s33, 4
          %s760 = scalar_lea.vmem %s24, %s759
          // Predicated region
          $region154: #{densecl_forward.1} parent=152 // pred_check
            _
          $region155: #{densecl_forward.1} parent=152 // pred_check_branch
            %762 = sbr.rel (0) target = $region157
          $region156: #{densecl_forward.1} parent=152 // pred_region
            // Predicated region
            $region158: #{densecl_forward.1} parent=156 // pred_check
              _
            $region159: #{densecl_forward.1} parent=156 // pred_check_branch
              %764 = sbr.rel target = $region161
            $region160: #{densecl_forward.1} parent=156 // pred_region
              // Predicated region
              $region173: #{densecl_forward.1} parent=160 // pred_check
                _
              $region174: #{densecl_forward.1} parent=160 // pred_check_branch
                %782 = sbr.rel (0) target = $region176
              $region175: #{densecl_forward.1} parent=160 // pred_region
                loop: start=0, step=1, limit=1
                $region177: #{densecl_forward.1} parent=175 // loop_pre_header
                  _
                $region178: #{densecl_forward.1} parent=175 // loop_header
                  %s784 = sphi 0, %s788
                  %p785 = scmp.ge.s32.totalorder %s784, 1
                  %s789 = sphi %s760, %s760
                  %s790 = sphi %s758, %s758
                $region179: #{densecl_forward.1} parent=175 // loop_header_branch
                  %787 = sbr.rel (%p785) target = $region183
                $region180: #{densecl_forward.1} parent=175 // loop_body
                  _
                $region181: #{densecl_forward.1} parent=175 // loop_footer
                  %s788 = sadd.s32 1, %s784
                $region182: #{densecl_forward.1} parent=175 // loop_footer_branch
                  %783 = sbr.rel target = $region178
                $region183: #{densecl_forward.1} parent=175 // loop_exit
                  _
                %s792 = ssub.s32 16, 1
                loop: start=0, step=1, limit=1
                $region184: #{densecl_forward.1} parent=175 // loop_pre_header
                  _
                $region185: #{densecl_forward.1} parent=175 // loop_header
                  %s794 = sphi 0, %s798
                  %p795 = scmp.ge.s32.totalorder %s794, 1
                  %s799 = sphi %s760, %s760
                  %s800 = sphi %s758, %s758
                $region186: #{densecl_forward.1} parent=175 // loop_header_branch
                  %797 = sbr.rel (%p795) target = $region190
                $region187: #{densecl_forward.1} parent=175 // loop_body
                  %v801 = vld [vmem:[%s799] sm:%s792]
                  %802 = vst [vmem:[%s800] sm:%s792] %v801
                  %v803 = vld [vmem:[%s799 + $0x10] sm:%s792]
                  %804 = vst [vmem:[%s800 + $0x4] sm:%s792] %v803
                $region188: #{densecl_forward.1} parent=175 // loop_footer
                  %s798 = sadd.s32 1, %s794
                $region189: #{densecl_forward.1} parent=175 // loop_footer_branch
                  %793 = sbr.rel target = $region185
                $region190: #{densecl_forward.1} parent=175 // loop_exit
                  _
              $region176: #{densecl_forward.1} parent=160 // pred_fallthru
                _
            $region161: #{densecl_forward.1} parent=156 // pred_fallthru
              _
            // Predicated region
            $region162: #{densecl_forward.1} parent=156 // pred_check
              _
            $region163: #{densecl_forward.1} parent=156 // pred_check_branch
              %766 = sbr.rel (0) target = $region165
            $region164: #{densecl_forward.1} parent=156 // pred_region
              %s768 = ssub.s32 16, 1
              loop: start=0, step=1, limit=1
              $region166: #{densecl_forward.1} parent=164 // loop_pre_header
                _
              $region167: #{densecl_forward.1} parent=164 // loop_header
                %s770 = sphi 0, %s774
                %p771 = scmp.ge.s32.totalorder %s770, 1
                %s775 = sphi %s760, %s760
                %s776 = sphi %s758, %s758
              $region168: #{densecl_forward.1} parent=164 // loop_header_branch
                %773 = sbr.rel (%p771) target = $region172
              $region169: #{densecl_forward.1} parent=164 // loop_body
                %v777 = vld [vmem:[%s775] sm:%s768]
                %778 = vst [vmem:[%s776] sm:%s768] %v777
                %v779 = vld [vmem:[%s775 + $0x10] sm:%s768]
                %780 = vst [vmem:[%s776 + $0x4] sm:%s768] %v779
              $region170: #{densecl_forward.1} parent=164 // loop_footer
                %s774 = sadd.s32 1, %s770
              $region171: #{densecl_forward.1} parent=164 // loop_footer_branch
                %769 = sbr.rel target = $region167
              $region172: #{densecl_forward.1} parent=164 // loop_exit
                _
            $region165: #{densecl_forward.1} parent=156 // pred_fallthru
              _
          $region157: #{densecl_forward.1} parent=152 // pred_fallthru
            _
          %805 = vnop
        $region153: #{densecl_forward.1} parent=107 // pred_fallthru
          _
      $region108: #{densecl_forward.1} parent=5 // pred_fallthru
        _
      %p806 = scmp.le.s32.totalorder 1, %s33
      %p807 = scmp.lt.s32.totalorder %s33, 5
      %p808 = pnand %p806, %p807
      %p809 = pneg %p808
      // Predicated region
      $region191: #{densecl_forward.1} parent=5 // pred_check
        _
      $region192: #{densecl_forward.1} parent=5 // pred_check_branch
        %811 = sbr.rel (%p808) target = $region194
      $region193: #{densecl_forward.1} parent=5 // pred_region
        %s812 = ssub.s32 %s33, 1
        %s813 = sand.u32 %s529, 1
        %s814 = sand.u32 %s529, 1
        %s815 = smul.addr %s814, 8
        %s816 = scalar_lea.vmem [#allocation12], %s815
        // Predicated region
        $region195: #{densecl_forward.1} parent=193 // pred_check
          %p817 = pneg %p542
        $region196: #{densecl_forward.1} parent=193 // pred_check_branch
          %819 = sbr.rel (%p817) target = $region198
        $region197: #{densecl_forward.1} parent=193 // pred_region
          _
        $region198: #{densecl_forward.1} parent=193 // pred_fallthru
          _
        %s820 = sand.u32 %s555, 1
        %s821 = sand.u32 %s555, 1
        %s822 = smul.addr %s821, 8
        %s823 = scalar_lea.vmem [#allocation13], %s822
        // Predicated region
        $region199: #{densecl_forward.1} parent=193 // pred_check
          %p824 = pneg %p568
        $region200: #{densecl_forward.1} parent=193 // pred_check_branch
          %826 = sbr.rel (%p824) target = $region202
        $region201: #{densecl_forward.1} parent=193 // pred_region
          _
        $region202: #{densecl_forward.1} parent=193 // pred_fallthru
          _
        %p827 = pneg %p54
        %p828 = pneg %p51
        %p829 = pneg %p75
        %p830 = pneg %p72
        %p831 = pneg %p96
        %p832 = pneg %p93
        %p833 = pneg %p117
        %p834 = pneg %p114
        %p835 = pneg %p138
        %p836 = pneg %p135
        %p837 = pneg %p159
        %p838 = pneg %p156
        %p839 = pneg %p180
        %p840 = pneg %p177
        %p841 = pneg %p201
        %p842 = pneg %p198
        %p843 = pneg %p222
        %p844 = pneg %p219
        %p845 = pneg %p243
        %p846 = pneg %p240
        %p847 = pneg %p264
        %p848 = pneg %p261
        %p849 = pneg %p285
        %p850 = pneg %p282
        %p851 = pneg %p306
        %p852 = pneg %p303
        %p853 = pneg %p327
        %p854 = pneg %p324
        %p855 = pneg %p348
        %p856 = pneg %p345
        %p857 = pneg %p369
        %p858 = pneg %p366
        %p859 = pneg %p390
        %p860 = pneg %p387
        %p861 = pneg %p411
        %p862 = pneg %p408
        %p863 = pneg %p432
        %p864 = pneg %p429
        %p865 = pneg %p453
        %p866 = pneg %p450
        %p867 = pneg %p474
        %p868 = pneg %p471
        %p869 = pneg %p495
        %p870 = pneg %p492
        %p871 = pneg %p516
        %p872 = pneg %p513
        %s873 = sand.u32 %s529, 1
        %s874 = sand.u32 %s529, 1
        %s875 = smul.addr %s874, 8
        %s876 = scalar_lea.vmem [#allocation12], %s875
        %p877 = pneg %p542
        %p878 = pneg %p539
        %s879 = sand.u32 %s555, 1
        %s880 = sand.u32 %s555, 1
        %s881 = smul.addr %s880, 8
        %s882 = scalar_lea.vmem [#allocation13], %s881
        %p883 = pneg %p568
        %p884 = pneg %p565
        %p885 = pneg %p589
        %p886 = pneg %p586
        %p887 = pneg %p610
        %p888 = pneg %p607
        %p890 = scmp.eq.s32.totalorder %s38, 0
        // Predicated region
        $region203: #{densecl_forward.1} parent=193 // pred_check
          %p891 = pneg %p890
        $region204: #{densecl_forward.1} parent=193 // pred_check_branch
          %893 = sbr.rel (%p891) target = $region206
        $region205: #{densecl_forward.1} parent=193 // pred_region
          %v894 = vld [vmem:[%s3] sm:$0xff]
          %v895 = vld [vmem:[%s4] sm:$0x1]
          %v896 = vld [vmem:[%s5] sm:$0xff]
          %v897 = vld [vmem:[%s5 + $0x8] sm:$0xff]
          %v898 = vld [vmem:[%s5 + $0x10] sm:$0xff]
          %v899 = vld [vmem:[%s5 + $0x18] sm:$0xff]
          %v900 = vld [vmem:[%s6] sm:$0x1]
          %v901 = vld [vmem:[%s7] sm:$0xff]
          %v902 = vld [vmem:[%s7 + $0x8] sm:$0xff]
          %v903 = vld [vmem:[%s7 + $0x10] sm:$0xff]
          %v904 = vld [vmem:[%s7 + $0x18] sm:$0xff]
          %v905 = vld [vmem:[%s8] sm:$0x1]
          %v906 = vld [vmem:[%s9] sm:$0xff]
          %v907 = vld [vmem:[%s9 + $0x8] sm:$0xff]
          %v908 = vld [vmem:[%s9 + $0x10] sm:$0xff]
          %v909 = vld [vmem:[%s9 + $0x18] sm:$0xff]
          %v910 = vld [vmem:[%s10] sm:$0x1]
          %v911 = vld [vmem:[%s11] sm:$0xff]
          %v912 = vld [vmem:[%s11 + $0x8] sm:$0xff]
          %v913 = vld [vmem:[%s11 + $0x10] sm:$0xff]
          %v914 = vld [vmem:[%s11 + $0x18] sm:$0xff]
          %v915 = vld [vmem:[%s12] sm:$0x1]
          %v916 = vld [vmem:[%s0] sm:$0xff]
          %v917 = vld [vmem:[%s0 + $0x8] sm:$0xff]
          %v918 = vld [vmem:[%s0 + $0x10] sm:$0xff]
          %v919 = vld [vmem:[%s0 + $0x18] sm:$0xff]
          %v920 = vld [vmem:[%s0 + $0x20] sm:$0xff]
          %v921 = vld [vmem:[%s0 + $0x28] sm:$0xff]
          %v922 = vld [vmem:[%s0 + $0x30] sm:$0xff]
          %v923 = vld [vmem:[%s0 + $0x38] sm:$0xff]
          %v924 = vld [vmem:[%s0 + $0x40] sm:$0xff]
          %v925 = vld [vmem:[%s0 + $0x48] sm:$0xff]
          %v926 = vld [vmem:[%s0 + $0x50] sm:$0xff]
          %v927 = vld [vmem:[%s0 + $0x58] sm:$0xff]
          %v928 = vld [vmem:[%s0 + $0x60] sm:$0xff]
          %v929 = vld [vmem:[%s0 + $0x68] sm:$0xff]
          %v930 = vld [vmem:[%s0 + $0x70] sm:$0xff]
          %v931 = vld [vmem:[%s0 + $0x78] sm:$0xff]
          %v932 = vld [vmem:[%s0 + $0x80] sm:$0xff]
          %v933 = vld [vmem:[%s0 + $0x88] sm:$0xff]
          %v934 = vld [vmem:[%s0 + $0x90] sm:$0xff]
          %v935 = vld [vmem:[%s0 + $0x98] sm:$0xff]
          %v936 = vld [vmem:[%s0 + $0xa0] sm:$0xff]
          %v937 = vld [vmem:[%s0 + $0xa8] sm:$0xff]
          %v938 = vld [vmem:[%s0 + $0xb0] sm:$0xff]
          %v939 = vld [vmem:[%s0 + $0xb8] sm:$0xff]
          %v940 = vld [vmem:[%s0 + $0xc0] sm:$0xff]
          %v941 = vld [vmem:[%s0 + $0xc8] sm:$0xff]
          %v942 = vld [vmem:[%s0 + $0xd0] sm:$0xff]
          %v943 = vld [vmem:[%s0 + $0xd8] sm:$0xff]
          %v944 = vld [vmem:[%s0 + $0xe0] sm:$0xff]
          %v945 = vld [vmem:[%s0 + $0xe8] sm:$0xff]
          %v946 = vld [vmem:[%s0 + $0xf0] sm:$0xff]
          %v947 = vld [vmem:[%s0 + $0xf8] sm:$0xff]
          %v948 = vld [vmem:[%s0 + $0x100] sm:$0xff]
          %v949 = vld [vmem:[%s0 + $0x108] sm:$0xff]
          %v950 = vld [vmem:[%s0 + $0x110] sm:$0xff]
          %v951 = vld [vmem:[%s0 + $0x118] sm:$0xff]
          %v953 = vlaneseq
          %v954 = vshrl.u32 %v953, 7
          %v955 = vsub.s32 0, %v954
          %v956 = vrot.slane %v895, %v955
          %vm958 = vcmask 64512
          %v960 = vsel %vm958, %v916, 0
          %v963 = vsel %vm958, %v917, 0
          %v966 = vsel %vm958, %v918, 0
          %v969 = vsel %vm958, %v919, 0
          %v972 = vsel %vm958, %v920, 0
          %v975 = vsel %vm958, %v921, 0
          %v978 = vsel %vm958, %v922, 0
          %v981 = vsel %vm958, %v923, 0
          %v984 = vsel %vm958, %v924, 0
          %v987 = vsel %vm958, %v925, 0
          %v990 = vsel %vm958, %v926, 0
          %v993 = vsel %vm958, %v927, 0
          %v996 = vsel %vm958, %v928, 0
          %v999 = vsel %vm958, %v929, 0
          %v1002 = vsel %vm958, %v930, 0
          %v1005 = vsel %vm958, %v931, 0
          %v1008 = vsel %vm958, %v932, 0
          %v1011 = vsel %vm958, %v933, 0
          %v1014 = vsel %vm958, %v934, 0
          %v1017 = vsel %vm958, %v935, 0
          %v1020 = vsel %vm958, %v936, 0
          %v1023 = vsel %vm958, %v937, 0
          %v1026 = vsel %vm958, %v938, 0
          %v1029 = vsel %vm958, %v939, 0
          %v1032 = vsel %vm958, %v940, 0
          %v1035 = vsel %vm958, %v941, 0
          %v1038 = vsel %vm958, %v942, 0
          %v1041 = vsel %vm958, %v943, 0
          %v1044 = vsel %vm958, %v944, 0
          %v1047 = vsel %vm958, %v945, 0
          %v1050 = vsel %vm958, %v946, 0
          %v1053 = vsel %vm958, %v947, 0
          %v1056 = vsel %vm958, %v948, 0
          %v1059 = vsel %vm958, %v949, 0
          %v1062 = vsel %vm958, %v950, 0
          %v1065 = vsel %vm958, %v951, 0
          %1067 = vmatprep.subr.mxu0 0.0
          %1068 = vmatpush1.msra.mxu0 0.0
          %1069 = vmatprep.subr.mxu0 0.0
          %1070 = vmatpush1.msra.mxu0 0.0
          %1071 = vmatprep.subr.mxu0 0.0
          %1072 = vmatpush1.msra.mxu0 0.0
          %1073 = vmatprep.subr.mxu0 0.0
          %1074 = vmatpush1.msra.mxu0 0.0
          %1075 = vmatprep.subr.mxu0 0.0
          %1076 = vmatpush1.msra.mxu0 0.0
          %1077 = vmatprep.subr.mxu0 0.0
          %1078 = vmatpush1.msra.mxu0 0.0
          %1079 = vmatprep.subr.mxu0 0.0
          %1080 = vmatpush1.msra.mxu0 0.0
          %1081 = vmatprep.subr.mxu0 0.0
          %1082 = vmatpush1.msra.mxu0 0.0
          %1083 = vmatprep.subr.mxu0 0.0
          %1084 = vmatpush1.msra.mxu0 0.0
          %1085 = vmatprep.subr.mxu0 0.0
          %1086 = vmatpush1.msra.mxu0 0.0
          %1087 = vmatprep.subr.mxu0 0.0
          %1088 = vmatpush1.msra.mxu0 0.0
          %1089 = vmatprep.subr.mxu0 0.0
          %1090 = vmatpush1.msra.mxu0 0.0
          %1091 = vmatprep.subr.mxu0 0.0
          %1092 = vmatpush1.msra.mxu0 0.0
          %1093 = vmatprep.subr.mxu0 0.0
          %1094 = vmatpush1.msra.mxu0 0.0
          %1095 = vmatprep.subr.mxu0 0.0
          %1096 = vmatpush1.msra.mxu0 0.0
          %1097 = vmatprep.subr.mxu0 0.0
          %1098 = vmatpush1.msra.mxu0 %v894
          %1099 = vmatprep.subr.mxu0 0.0
          %1100 = vmatpush2.msra.mxu0 0.0
          %1101 = vmatprep.subr.mxu0 0.0
          %1102 = vmatpush2.msra.mxu0 0.0
          %1103 = vmatprep.subr.mxu0 0.0
          %1104 = vmatpush2.msra.mxu0 0.0
          %1105 = vmatprep.subr.mxu0 0.0
          %1106 = vmatpush2.msra.mxu0 0.0
          %1107 = vmatprep.subr.mxu0 0.0
          %1108 = vmatpush2.msra.mxu0 0.0
          %1109 = vmatprep.subr.mxu0 0.0
          %1110 = vmatpush2.msra.mxu0 0.0
          %1111 = vmatprep.subr.mxu0 0.0
          %1112 = vmatpush2.msra.mxu0 0.0
          %1113 = vmatprep.subr.mxu0 0.0
          %1114 = vmatpush2.msra.mxu0 0.0
          %1115 = vmatprep.subr.mxu0 0.0
          %1116 = vmatpush2.msra.mxu0 0.0
          %1117 = vmatprep.subr.mxu0 0.0
          %1118 = vmatpush2.msra.mxu0 0.0
          %1119 = vmatprep.subr.mxu0 0.0
          %1120 = vmatpush2.msra.mxu0 0.0
          %1121 = vmatprep.subr.mxu0 0.0
          %1122 = vmatpush2.msra.mxu0 0.0
          %1123 = vmatprep.subr.mxu0 0.0
          %1124 = vmatpush2.msra.mxu0 0.0
          %1125 = vmatprep.subr.mxu0 0.0
          %1126 = vmatpush2.msra.mxu0 0.0
          %1127 = vmatprep.subr.mxu0 0.0
          %1128 = vmatpush2.msra.mxu0 0.0
          %1129 = vmatprep.subr.mxu0 0.0
          %1130 = vmatpush2.msra.mxu0 0.0
          %1131 = vmatprep.mubr.f32.mxu0 0.0
          %1132 = vmatmul.mubr.f32.gmra.mxu0 %v960
          %v1133 = vpop.f32.mrf.mxu0
          %v1134 = vadd.f32 %v956, %v1133
          %v1135 = vpop.f32.mrf.mxu0
          %1136 = vmatprep.mubr.f32.mxu0 0.0
          %1137 = vmatmul.mubr.f32.gmra.mxu0 %v963
          %v1138 = vpop.f32.mrf.mxu0
          %v1139 = vadd.f32 %v956, %v1138
          %v1140 = vpop.f32.mrf.mxu0
          %1141 = vmatprep.mubr.f32.mxu0 0.0
          %1142 = vmatmul.mubr.f32.gmra.mxu0 %v966
          %v1143 = vpop.f32.mrf.mxu0
          %v1144 = vadd.f32 %v956, %v1143
          %v1145 = vpop.f32.mrf.mxu0
          %1146 = vmatprep.mubr.f32.mxu0 0.0
          %1147 = vmatmul.mubr.f32.gmra.mxu0 %v969
          %v1148 = vpop.f32.mrf.mxu0
          %v1149 = vadd.f32 %v956, %v1148
          %v1150 = vpop.f32.mrf.mxu0
          %1151 = vmatprep.mubr.f32.mxu0 0.0
          %1152 = vmatmul.mubr.f32.gmra.mxu0 %v972
          %v1153 = vpop.f32.mrf.mxu0
          %v1154 = vadd.f32 %v956, %v1153
          %v1155 = vpop.f32.mrf.mxu0
          %1156 = vmatprep.mubr.f32.mxu0 0.0
          %1157 = vmatmul.mubr.f32.gmra.mxu0 %v975
          %v1158 = vpop.f32.mrf.mxu0
          %v1159 = vadd.f32 %v956, %v1158
          %v1160 = vpop.f32.mrf.mxu0
          %1161 = vmatprep.mubr.f32.mxu0 0.0
          %1162 = vmatmul.mubr.f32.gmra.mxu0 %v978
          %v1163 = vpop.f32.mrf.mxu0
          %v1164 = vadd.f32 %v956, %v1163
          %v1165 = vpop.f32.mrf.mxu0
          %1166 = vmatprep.mubr.f32.mxu0 0.0
          %1167 = vmatmul.mubr.f32.gmra.mxu0 %v981
          %v1168 = vpop.f32.mrf.mxu0
          %v1169 = vadd.f32 %v956, %v1168
          %v1170 = vpop.f32.mrf.mxu0
          %1171 = vmatprep.mubr.f32.mxu0 0.0
          %1172 = vmatmul.mubr.f32.gmra.mxu0 %v984
          %v1173 = vpop.f32.mrf.mxu0
          %v1174 = vadd.f32 %v956, %v1173
          %v1175 = vpop.f32.mrf.mxu0
          %1176 = vmatprep.mubr.f32.mxu0 0.0
          %1177 = vmatmul.mubr.f32.gmra.mxu0 %v987
          %v1178 = vpop.f32.mrf.mxu0
          %v1179 = vadd.f32 %v956, %v1178
          %v1180 = vpop.f32.mrf.mxu0
          %1181 = vmatprep.mubr.f32.mxu0 0.0
          %1182 = vmatmul.mubr.f32.gmra.mxu0 %v990
          %v1183 = vpop.f32.mrf.mxu0
          %v1184 = vadd.f32 %v956, %v1183
          %v1185 = vpop.f32.mrf.mxu0
          %1186 = vmatprep.mubr.f32.mxu0 0.0
          %1187 = vmatmul.mubr.f32.gmra.mxu0 %v993
          %v1188 = vpop.f32.mrf.mxu0
          %v1189 = vadd.f32 %v956, %v1188
          %v1190 = vpop.f32.mrf.mxu0
          %1191 = vmatprep.mubr.f32.mxu0 0.0
          %1192 = vmatmul.mubr.f32.gmra.mxu0 %v996
          %v1193 = vpop.f32.mrf.mxu0
          %v1194 = vadd.f32 %v956, %v1193
          %v1195 = vpop.f32.mrf.mxu0
          %1196 = vmatprep.mubr.f32.mxu0 0.0
          %1197 = vmatmul.mubr.f32.gmra.mxu0 %v999
          %v1198 = vpop.f32.mrf.mxu0
          %v1199 = vadd.f32 %v956, %v1198
          %v1200 = vpop.f32.mrf.mxu0
          %1201 = vmatprep.mubr.f32.mxu0 0.0
          %1202 = vmatmul.mubr.f32.gmra.mxu0 %v1002
          %v1203 = vpop.f32.mrf.mxu0
          %v1204 = vadd.f32 %v956, %v1203
          %v1205 = vpop.f32.mrf.mxu0
          %1206 = vmatprep.mubr.f32.mxu0 0.0
          %1207 = vmatmul.mubr.f32.gmra.mxu0 %v1005
          %v1208 = vpop.f32.mrf.mxu0
          %v1209 = vadd.f32 %v956, %v1208
          %v1210 = vpop.f32.mrf.mxu0
          %1211 = vmatprep.mubr.f32.mxu0 0.0
          %1212 = vmatmul.mubr.f32.gmra.mxu0 %v1008
          %v1213 = vpop.f32.mrf.mxu0
          %v1214 = vadd.f32 %v956, %v1213
          %v1215 = vpop.f32.mrf.mxu0
          %1216 = vmatprep.mubr.f32.mxu0 0.0
          %1217 = vmatmul.mubr.f32.gmra.mxu0 %v1011
          %v1218 = vpop.f32.mrf.mxu0
          %v1219 = vadd.f32 %v956, %v1218
          %v1220 = vpop.f32.mrf.mxu0
          %1221 = vmatprep.mubr.f32.mxu0 0.0
          %1222 = vmatmul.mubr.f32.gmra.mxu0 %v1014
          %v1223 = vpop.f32.mrf.mxu0
          %v1224 = vadd.f32 %v956, %v1223
          %v1225 = vpop.f32.mrf.mxu0
          %1226 = vmatprep.mubr.f32.mxu0 0.0
          %1227 = vmatmul.mubr.f32.gmra.mxu0 %v1017
          %v1228 = vpop.f32.mrf.mxu0
          %v1229 = vadd.f32 %v956, %v1228
          %v1230 = vpop.f32.mrf.mxu0
          %1231 = vmatprep.mubr.f32.mxu0 0.0
          %1232 = vmatmul.mubr.f32.gmra.mxu0 %v1020
          %v1233 = vpop.f32.mrf.mxu0
          %v1234 = vadd.f32 %v956, %v1233
          %v1235 = vpop.f32.mrf.mxu0
          %1236 = vmatprep.mubr.f32.mxu0 0.0
          %1237 = vmatmul.mubr.f32.gmra.mxu0 %v1023
          %v1238 = vpop.f32.mrf.mxu0
          %v1239 = vadd.f32 %v956, %v1238
          %v1240 = vpop.f32.mrf.mxu0
          %1241 = vmatprep.mubr.f32.mxu0 0.0
          %1242 = vmatmul.mubr.f32.gmra.mxu0 %v1026
          %v1243 = vpop.f32.mrf.mxu0
          %v1244 = vadd.f32 %v956, %v1243
          %v1245 = vpop.f32.mrf.mxu0
          %1246 = vmatprep.mubr.f32.mxu0 0.0
          %1247 = vmatmul.mubr.f32.gmra.mxu0 %v1029
          %v1248 = vpop.f32.mrf.mxu0
          %v1249 = vadd.f32 %v956, %v1248
          %v1250 = vpop.f32.mrf.mxu0
          %1251 = vmatprep.mubr.f32.mxu0 0.0
          %1252 = vmatmul.mubr.f32.gmra.mxu0 %v1032
          %v1253 = vpop.f32.mrf.mxu0
          %v1254 = vadd.f32 %v956, %v1253
          %v1255 = vpop.f32.mrf.mxu0
          %1256 = vmatprep.mubr.f32.mxu0 0.0
          %1257 = vmatmul.mubr.f32.gmra.mxu0 %v1035
          %v1258 = vpop.f32.mrf.mxu0
          %v1259 = vadd.f32 %v956, %v1258
          %v1260 = vpop.f32.mrf.mxu0
          %1261 = vmatprep.mubr.f32.mxu0 0.0
          %1262 = vmatmul.mubr.f32.gmra.mxu0 %v1038
          %v1263 = vpop.f32.mrf.mxu0
          %v1264 = vadd.f32 %v956, %v1263
          %v1265 = vpop.f32.mrf.mxu0
          %1266 = vmatprep.mubr.f32.mxu0 0.0
          %1267 = vmatmul.mubr.f32.gmra.mxu0 %v1041
          %v1268 = vpop.f32.mrf.mxu0
          %v1269 = vadd.f32 %v956, %v1268
          %v1270 = vpop.f32.mrf.mxu0
          %1271 = vmatprep.mubr.f32.mxu0 0.0
          %1272 = vmatmul.mubr.f32.gmra.mxu0 %v1044
          %v1273 = vpop.f32.mrf.mxu0
          %v1274 = vadd.f32 %v956, %v1273
          %v1275 = vpop.f32.mrf.mxu0
          %1276 = vmatprep.mubr.f32.mxu0 0.0
          %1277 = vmatmul.mubr.f32.gmra.mxu0 %v1047
          %v1278 = vpop.f32.mrf.mxu0
          %v1279 = vadd.f32 %v956, %v1278
          %v1280 = vpop.f32.mrf.mxu0
          %1281 = vmatprep.mubr.f32.mxu0 0.0
          %1282 = vmatmul.mubr.f32.gmra.mxu0 %v1050
          %v1283 = vpop.f32.mrf.mxu0
          %v1284 = vadd.f32 %v956, %v1283
          %v1285 = vpop.f32.mrf.mxu0
          %1286 = vmatprep.mubr.f32.mxu0 0.0
          %1287 = vmatmul.mubr.f32.gmra.mxu0 %v1053
          %v1288 = vpop.f32.mrf.mxu0
          %v1289 = vadd.f32 %v956, %v1288
          %v1290 = vpop.f32.mrf.mxu0
          %1291 = vmatprep.mubr.f32.mxu0 0.0
          %1292 = vmatmul.mubr.f32.gmra.mxu0 %v1056
          %v1293 = vpop.f32.mrf.mxu0
          %v1294 = vadd.f32 %v956, %v1293
          %v1295 = vpop.f32.mrf.mxu0
          %1296 = vmatprep.mubr.f32.mxu0 0.0
          %1297 = vmatmul.mubr.f32.gmra.mxu0 %v1059
          %v1298 = vpop.f32.mrf.mxu0
          %v1299 = vadd.f32 %v956, %v1298
          %v1300 = vpop.f32.mrf.mxu0
          %1301 = vmatprep.mubr.f32.mxu0 0.0
          %1302 = vmatmul.mubr.f32.gmra.mxu0 %v1062
          %v1303 = vpop.f32.mrf.mxu0
          %v1304 = vadd.f32 %v956, %v1303
          %v1305 = vpop.f32.mrf.mxu0
          %1306 = vmatprep.mubr.f32.mxu0 0.0
          %1307 = vmatmul.mubr.f32.gmra.mxu0 %v1065
          %v1308 = vpop.f32.mrf.mxu0
          %v1309 = vadd.f32 %v956, %v1308
          %v1310 = vpop.f32.mrf.mxu0
          %1311 = vdwg.mxu0
          %v1312 = vmax.f32 %v1134, 0.0
          %v1313 = vmax.f32 %v1139, 0.0
          %v1314 = vmax.f32 %v1144, 0.0
          %v1315 = vmax.f32 %v1149, 0.0
          %v1316 = vmax.f32 %v1154, 0.0
          %v1317 = vmax.f32 %v1159, 0.0
          %v1318 = vmax.f32 %v1164, 0.0
          %v1319 = vmax.f32 %v1169, 0.0
          %v1320 = vmax.f32 %v1174, 0.0
          %v1321 = vmax.f32 %v1179, 0.0
          %v1322 = vmax.f32 %v1184, 0.0
          %v1323 = vmax.f32 %v1189, 0.0
          %v1324 = vmax.f32 %v1194, 0.0
          %v1325 = vmax.f32 %v1199, 0.0
          %v1326 = vmax.f32 %v1204, 0.0
          %v1327 = vmax.f32 %v1209, 0.0
          %v1328 = vmax.f32 %v1214, 0.0
          %v1329 = vmax.f32 %v1219, 0.0
          %v1330 = vmax.f32 %v1224, 0.0
          %v1331 = vmax.f32 %v1229, 0.0
          %v1332 = vmax.f32 %v1234, 0.0
          %v1333 = vmax.f32 %v1239, 0.0
          %v1334 = vmax.f32 %v1244, 0.0
          %v1335 = vmax.f32 %v1249, 0.0
          %v1336 = vmax.f32 %v1254, 0.0
          %v1337 = vmax.f32 %v1259, 0.0
          %v1338 = vmax.f32 %v1264, 0.0
          %v1339 = vmax.f32 %v1269, 0.0
          %v1340 = vmax.f32 %v1274, 0.0
          %v1341 = vmax.f32 %v1279, 0.0
          %v1342 = vmax.f32 %v1284, 0.0
          %v1343 = vmax.f32 %v1289, 0.0
          %v1344 = vmax.f32 %v1294, 0.0
          %v1345 = vmax.f32 %v1299, 0.0
          %v1346 = vmax.f32 %v1304, 0.0
          %v1347 = vmax.f32 %v1309, 0.0
          %v1348 = vld [vmem:[%s2] sm:$0xff]
          %v1349 = vld [vmem:[%s2 + $0x8] sm:$0xff]
          %v1350 = vld [vmem:[%s2 + $0x10] sm:$0x1]
          %v1351 = vld [vmem:[%s2 + $0x18] sm:$0x1]
          %vm1352 = vcmask 130048
          %v1354 = vsel %vm1352, %v1349, 0
          %v1357 = vsel %vm1352, %v1351, 0
          %1359 = vmatprep.subr.mxu0 0.0
          %1360 = vmatpush1.msra.mxu0 %v1327
          %1361 = vmatprep.subr.mxu0 0.0
          %1362 = vmatpush1.msra.mxu0 %v1326
          %1363 = vmatprep.subr.mxu0 0.0
          %1364 = vmatpush1.msra.mxu0 %v1325
          %1365 = vmatprep.subr.mxu0 0.0
          %1366 = vmatpush1.msra.mxu0 %v1324
          %1367 = vmatprep.subr.mxu0 0.0
          %1368 = vmatpush1.msra.mxu0 %v1323
          %1369 = vmatprep.subr.mxu0 0.0
          %1370 = vmatpush1.msra.mxu0 %v1322
          %1371 = vmatprep.subr.mxu0 0.0
          %1372 = vmatpush1.msra.mxu0 %v1321
          %1373 = vmatprep.subr.mxu0 0.0
          %1374 = vmatpush1.msra.mxu0 %v1320
          %1375 = vmatprep.subr.mxu0 0.0
          %1376 = vmatpush1.msra.mxu0 %v1319
          %1377 = vmatprep.subr.mxu0 0.0
          %1378 = vmatpush1.msra.mxu0 %v1318
          %1379 = vmatprep.subr.mxu0 0.0
          %1380 = vmatpush1.msra.mxu0 %v1317
          %1381 = vmatprep.subr.mxu0 0.0
          %1382 = vmatpush1.msra.mxu0 %v1316
          %1383 = vmatprep.subr.mxu0 0.0
          %1384 = vmatpush1.msra.mxu0 %v1315
          %1385 = vmatprep.subr.mxu0 0.0
          %1386 = vmatpush1.msra.mxu0 %v1314
          %1387 = vmatprep.subr.mxu0 0.0
          %1388 = vmatpush1.msra.mxu0 %v1313
          %1389 = vmatprep.subr.mxu0 0.0
          %1390 = vmatpush1.msra.mxu0 %v1312
          %1391 = vmatprep.subr.mxu0 0.0
          %1392 = vmatpush2.msra.mxu0 0.0
          %1393 = vmatprep.subr.mxu0 0.0
          %1394 = vmatpush2.msra.mxu0 0.0
          %1395 = vmatprep.subr.mxu0 0.0
          %1396 = vmatpush2.msra.mxu0 0.0
          %1397 = vmatprep.subr.mxu0 0.0
          %1398 = vmatpush2.msra.mxu0 0.0
          %1399 = vmatprep.subr.mxu0 0.0
          %1400 = vmatpush2.msra.mxu0 0.0
          %1401 = vmatprep.subr.mxu0 0.0
          %1402 = vmatpush2.msra.mxu0 0.0
          %1403 = vmatprep.subr.mxu0 0.0
          %1404 = vmatpush2.msra.mxu0 0.0
          %1405 = vmatprep.subr.mxu0 0.0
          %1406 = vmatpush2.msra.mxu0 0.0
          %1407 = vmatprep.subr.mxu0 0.0
          %1408 = vmatpush2.msra.mxu0 0.0
          %1409 = vmatprep.subr.mxu0 0.0
          %1410 = vmatpush2.msra.mxu0 0.0
          %1411 = vmatprep.subr.mxu0 0.0
          %1412 = vmatpush2.msra.mxu0 0.0
          %1413 = vmatprep.subr.mxu0 0.0
          %1414 = vmatpush2.msra.mxu0 0.0
          %1415 = vmatprep.subr.mxu0 0.0
          %1416 = vmatpush2.msra.mxu0 0.0
          %1417 = vmatprep.subr.mxu0 0.0
          %1418 = vmatpush2.msra.mxu0 0.0
          %1419 = vmatprep.subr.mxu0 0.0
          %1420 = vmatpush2.msra.mxu0 %v1329
          %1421 = vmatprep.subr.mxu0 0.0
          %1422 = vmatpush2.msra.mxu0 %v1328
          %1423 = vmatprep.mubr.f32.mxu0 %v1354
          %1424 = vmatmul.mubr.f32.gmra.mxu0 %v1348
          %v1425 = vpop.f32.mrf.mxu0
          %v1426 = vadd.f32 0.0, %v1425
          %v1427 = vpop.f32.mrf.mxu0
          %1428 = vmatprep.mubr.f32.mxu0 %v1357
          %1429 = vmatmul.mubr.f32.gmra.mxu0 %v1350
          %v1430 = vpop.f32.mrf.mxu0
          %v1431 = vadd.f32 0.0, %v1430
          %v1432 = vpop.f32.mrf.mxu0
          %1433 = vdwg.mxu0
          %vm1434 = vcmask 261120
          %v1435 = vsel %vm1434, %v1426, 0.0
          %vm1436 = vcmask 253952
          %v1437 = vsel %vm1436, %v1431, 0.0
          %v1438 = vadd.f32 %v1435, %v1437
          %v1439 = vrot.slane %v1438, 4
          %v1440 = vadd.f32 %v1438, %v1439
          %v1441 = vrot.slane %v1440, 2
          %v1442 = vadd.f32 %v1440, %v1441
          %v1443 = vrot.slane %v1442, 1
          %v1444 = vadd.f32 %v1442, %v1443
          %v1445 = vrcp.pop 9.0
          %v1446 = vmul.f32 %v1444, %v1445
          %1447 = vmatprep.subr.mxu0 0.0
          %1448 = vmatpush1.msra.mxu0 %v1345
          %1449 = vmatprep.subr.mxu0 0.0
          %1450 = vmatpush1.msra.mxu0 %v1344
          %1451 = vmatprep.subr.mxu0 0.0
          %1452 = vmatpush1.msra.mxu0 %v1343
          %1453 = vmatprep.subr.mxu0 0.0
          %1454 = vmatpush1.msra.mxu0 %v1342
          %1455 = vmatprep.subr.mxu0 0.0
          %1456 = vmatpush1.msra.mxu0 %v1341
          %1457 = vmatprep.subr.mxu0 0.0
          %1458 = vmatpush1.msra.mxu0 %v1340
          %1459 = vmatprep.subr.mxu0 0.0
          %1460 = vmatpush1.msra.mxu0 %v1339
          %1461 = vmatprep.subr.mxu0 0.0
          %1462 = vmatpush1.msra.mxu0 %v1338
          %1463 = vmatprep.subr.mxu0 0.0
          %1464 = vmatpush1.msra.mxu0 %v1337
          %1465 = vmatprep.subr.mxu0 0.0
          %1466 = vmatpush1.msra.mxu0 %v1336
          %1467 = vmatprep.subr.mxu0 0.0
          %1468 = vmatpush1.msra.mxu0 %v1335
          %1469 = vmatprep.subr.mxu0 0.0
          %1470 = vmatpush1.msra.mxu0 %v1334
          %1471 = vmatprep.subr.mxu0 0.0
          %1472 = vmatpush1.msra.mxu0 %v1333
          %1473 = vmatprep.subr.mxu0 0.0
          %1474 = vmatpush1.msra.mxu0 %v1332
          %1475 = vmatprep.subr.mxu0 0.0
          %1476 = vmatpush1.msra.mxu0 %v1331
          %1477 = vmatprep.subr.mxu0 0.0
          %1478 = vmatpush1.msra.mxu0 %v1330
          %1479 = vmatprep.subr.mxu0 0.0
          %1480 = vmatpush2.msra.mxu0 0.0
          %1481 = vmatprep.subr.mxu0 0.0
          %1482 = vmatpush2.msra.mxu0 0.0
          %1483 = vmatprep.subr.mxu0 0.0
          %1484 = vmatpush2.msra.mxu0 0.0
          %1485 = vmatprep.subr.mxu0 0.0
          %1486 = vmatpush2.msra.mxu0 0.0
          %1487 = vmatprep.subr.mxu0 0.0
          %1488 = vmatpush2.msra.mxu0 0.0
          %1489 = vmatprep.subr.mxu0 0.0
          %1490 = vmatpush2.msra.mxu0 0.0
          %1491 = vmatprep.subr.mxu0 0.0
          %1492 = vmatpush2.msra.mxu0 0.0
          %1493 = vmatprep.subr.mxu0 0.0
          %1494 = vmatpush2.msra.mxu0 0.0
          %1495 = vmatprep.subr.mxu0 0.0
          %1496 = vmatpush2.msra.mxu0 0.0
          %1497 = vmatprep.subr.mxu0 0.0
          %1498 = vmatpush2.msra.mxu0 0.0
          %1499 = vmatprep.subr.mxu0 0.0
          %1500 = vmatpush2.msra.mxu0 0.0
          %1501 = vmatprep.subr.mxu0 0.0
          %1502 = vmatpush2.msra.mxu0 0.0
          %1503 = vmatprep.subr.mxu0 0.0
          %1504 = vmatpush2.msra.mxu0 0.0
          %1505 = vmatprep.subr.mxu0 0.0
          %1506 = vmatpush2.msra.mxu0 0.0
          %1507 = vmatprep.subr.mxu0 0.0
          %1508 = vmatpush2.msra.mxu0 %v1347
          %1509 = vmatprep.subr.mxu0 0.0
          %1510 = vmatpush2.msra.mxu0 %v1346
          %1511 = vmatprep.mubr.f32.mxu0 %v1354
          %1512 = vmatmul.mubr.f32.gmra.mxu0 %v1348
          %v1513 = vpop.f32.mrf.mxu0
          %v1514 = vadd.f32 0.0, %v1513
          %v1515 = vpop.f32.mrf.mxu0
          %1516 = vmatprep.mubr.f32.mxu0 %v1357
          %1517 = vmatmul.mubr.f32.gmra.mxu0 %v1350
          %v1518 = vpop.f32.mrf.mxu0
          %v1519 = vadd.f32 0.0, %v1518
          %v1520 = vpop.f32.mrf.mxu0
          %1521 = vdwg.mxu0
          %v1522 = vsel %vm1434, %v1514, 0.0
          %v1523 = vsel %vm1436, %v1519, 0.0
          %v1524 = vadd.f32 %v1522, %v1523
          %v1525 = vrot.slane %v1524, 4
          %v1526 = vadd.f32 %v1524, %v1525
          %v1527 = vrot.slane %v1526, 2
          %v1528 = vadd.f32 %v1526, %v1527
          %v1529 = vrot.slane %v1528, 1
          %v1530 = vadd.f32 %v1528, %v1529
          %v1531 = vmul.f32 %v1530, %v1445
          %vm1534 = vcmask 1040384
          %v1535 = vrot.slane %v1514, 7
          %v1536 = vrot.slane %v1519, 7
          %v1537 = vsel %vm1534, %v1535, %v1536
          %v1539 = vsel %vm1534, %v1431, %v1535
          %v1540 = vsel %vm1534, %v1446, %v1531
          %v1542 = vlaneseq
          %v1543 = vshrl.u32 %v1542, 7
          %v1544 = vsub.s32 0, %v1543
          %v1545 = vrot.slane %v900, %v1544
          %v1548 = vsel %vm1434, %v1540, 0
          %1550 = vmatprep.subr.mxu0 0.0
          %1551 = vmatpush1.msra.mxu0 0.0
          %1552 = vmatprep.subr.mxu0 0.0
          %1553 = vmatpush1.msra.mxu0 0.0
          %1554 = vmatprep.subr.mxu0 0.0
          %1555 = vmatpush1.msra.mxu0 0.0
          %1556 = vmatprep.subr.mxu0 0.0
          %1557 = vmatpush1.msra.mxu0 0.0
          %1558 = vmatprep.subr.mxu0 0.0
          %1559 = vmatpush1.msra.mxu0 0.0
          %1560 = vmatprep.subr.mxu0 0.0
          %1561 = vmatpush1.msra.mxu0 0.0
          %1562 = vmatprep.subr.mxu0 0.0
          %1563 = vmatpush1.msra.mxu0 0.0
          %1564 = vmatprep.subr.mxu0 0.0
          %1565 = vmatpush1.msra.mxu0 0.0
          %1566 = vmatprep.subr.mxu0 0.0
          %1567 = vmatpush1.msra.mxu0 0.0
          %1568 = vmatprep.subr.mxu0 0.0
          %1569 = vmatpush1.msra.mxu0 0.0
          %1570 = vmatprep.subr.mxu0 0.0
          %1571 = vmatpush1.msra.mxu0 0.0
          %1572 = vmatprep.subr.mxu0 0.0
          %1573 = vmatpush1.msra.mxu0 0.0
          %1574 = vmatprep.subr.mxu0 0.0
          %1575 = vmatpush1.msra.mxu0 %v899
          %1576 = vmatprep.subr.mxu0 0.0
          %1577 = vmatpush1.msra.mxu0 %v898
          %1578 = vmatprep.subr.mxu0 0.0
          %1579 = vmatpush1.msra.mxu0 %v897
          %1580 = vmatprep.subr.mxu0 0.0
          %1581 = vmatpush1.msra.mxu0 %v896
          %1582 = vmatprep.subr.mxu0 0.0
          %1583 = vmatpush2.msra.mxu0 0.0
          %1584 = vmatprep.subr.mxu0 0.0
          %1585 = vmatpush2.msra.mxu0 0.0
          %1586 = vmatprep.subr.mxu0 0.0
          %1587 = vmatpush2.msra.mxu0 0.0
          %1588 = vmatprep.subr.mxu0 0.0
          %1589 = vmatpush2.msra.mxu0 0.0
          %1590 = vmatprep.subr.mxu0 0.0
          %1591 = vmatpush2.msra.mxu0 0.0
          %1592 = vmatprep.subr.mxu0 0.0
          %1593 = vmatpush2.msra.mxu0 0.0
          %1594 = vmatprep.subr.mxu0 0.0
          %1595 = vmatpush2.msra.mxu0 0.0
          %1596 = vmatprep.subr.mxu0 0.0
          %1597 = vmatpush2.msra.mxu0 0.0
          %1598 = vmatprep.subr.mxu0 0.0
          %1599 = vmatpush2.msra.mxu0 0.0
          %1600 = vmatprep.subr.mxu0 0.0
          %1601 = vmatpush2.msra.mxu0 0.0
          %1602 = vmatprep.subr.mxu0 0.0
          %1603 = vmatpush2.msra.mxu0 0.0
          %1604 = vmatprep.subr.mxu0 0.0
          %1605 = vmatpush2.msra.mxu0 0.0
          %1606 = vmatprep.subr.mxu0 0.0
          %1607 = vmatpush2.msra.mxu0 0.0
          %1608 = vmatprep.subr.mxu0 0.0
          %1609 = vmatpush2.msra.mxu0 0.0
          %1610 = vmatprep.subr.mxu0 0.0
          %1611 = vmatpush2.msra.mxu0 0.0
          %1612 = vmatprep.subr.mxu0 0.0
          %1613 = vmatpush2.msra.mxu0 0.0
          %1614 = vmatprep.mubr.f32.mxu0 0.0
          %1615 = vmatmul.mubr.f32.gmra.mxu0 %v1548
          %v1616 = vpop.f32.mrf.mxu0
          %v1617 = vadd.f32 %v1545, %v1616
          %v1618 = vpop.f32.mrf.mxu0
          %1619 = vdwg.mxu0
          %v1620 = vmax.f32 %v1617, 0.0
          %v1622 = vlaneseq
          %v1623 = vshrl.u32 %v1622, 7
          %v1624 = vsub.s32 0, %v1623
          %v1625 = vrot.slane %v905, %v1624
          %v1628 = vsel %vm1434, %v1620, 0
          %1630 = vmatprep.subr.mxu0 0.0
          %1631 = vmatpush1.msra.mxu0 0.0
          %1632 = vmatprep.subr.mxu0 0.0
          %1633 = vmatpush1.msra.mxu0 0.0
          %1634 = vmatprep.subr.mxu0 0.0
          %1635 = vmatpush1.msra.mxu0 0.0
          %1636 = vmatprep.subr.mxu0 0.0
          %1637 = vmatpush1.msra.mxu0 0.0
          %1638 = vmatprep.subr.mxu0 0.0
          %1639 = vmatpush1.msra.mxu0 0.0
          %1640 = vmatprep.subr.mxu0 0.0
          %1641 = vmatpush1.msra.mxu0 0.0
          %1642 = vmatprep.subr.mxu0 0.0
          %1643 = vmatpush1.msra.mxu0 0.0
          %1644 = vmatprep.subr.mxu0 0.0
          %1645 = vmatpush1.msra.mxu0 0.0
          %1646 = vmatprep.subr.mxu0 0.0
          %1647 = vmatpush1.msra.mxu0 0.0
          %1648 = vmatprep.subr.mxu0 0.0
          %1649 = vmatpush1.msra.mxu0 0.0
          %1650 = vmatprep.subr.mxu0 0.0
          %1651 = vmatpush1.msra.mxu0 0.0
          %1652 = vmatprep.subr.mxu0 0.0
          %1653 = vmatpush1.msra.mxu0 0.0
          %1654 = vmatprep.subr.mxu0 0.0
          %1655 = vmatpush1.msra.mxu0 %v904
          %1656 = vmatprep.subr.mxu0 0.0
          %1657 = vmatpush1.msra.mxu0 %v903
          %1658 = vmatprep.subr.mxu0 0.0
          %1659 = vmatpush1.msra.mxu0 %v902
          %1660 = vmatprep.subr.mxu0 0.0
          %1661 = vmatpush1.msra.mxu0 %v901
          %1662 = vmatprep.subr.mxu0 0.0
          %1663 = vmatpush2.msra.mxu0 0.0
          %1664 = vmatprep.subr.mxu0 0.0
          %1665 = vmatpush2.msra.mxu0 0.0
          %1666 = vmatprep.subr.mxu0 0.0
          %1667 = vmatpush2.msra.mxu0 0.0
          %1668 = vmatprep.subr.mxu0 0.0
          %1669 = vmatpush2.msra.mxu0 0.0
          %1670 = vmatprep.subr.mxu0 0.0
          %1671 = vmatpush2.msra.mxu0 0.0
          %1672 = vmatprep.subr.mxu0 0.0
          %1673 = vmatpush2.msra.mxu0 0.0
          %1674 = vmatprep.subr.mxu0 0.0
          %1675 = vmatpush2.msra.mxu0 0.0
          %1676 = vmatprep.subr.mxu0 0.0
          %1677 = vmatpush2.msra.mxu0 0.0
          %1678 = vmatprep.subr.mxu0 0.0
          %1679 = vmatpush2.msra.mxu0 0.0
          %1680 = vmatprep.subr.mxu0 0.0
          %1681 = vmatpush2.msra.mxu0 0.0
          %1682 = vmatprep.subr.mxu0 0.0
          %1683 = vmatpush2.msra.mxu0 0.0
          %1684 = vmatprep.subr.mxu0 0.0
          %1685 = vmatpush2.msra.mxu0 0.0
          %1686 = vmatprep.subr.mxu0 0.0
          %1687 = vmatpush2.msra.mxu0 0.0
          %1688 = vmatprep.subr.mxu0 0.0
          %1689 = vmatpush2.msra.mxu0 0.0
          %1690 = vmatprep.subr.mxu0 0.0
          %1691 = vmatpush2.msra.mxu0 0.0
          %1692 = vmatprep.subr.mxu0 0.0
          %1693 = vmatpush2.msra.mxu0 0.0
          %1694 = vmatprep.mubr.f32.mxu0 0.0
          %1695 = vmatmul.mubr.f32.gmra.mxu0 %v1628
          %v1696 = vpop.f32.mrf.mxu0
          %v1697 = vadd.f32 %v1625, %v1696
          %v1698 = vpop.f32.mrf.mxu0
          %1699 = vdwg.mxu0
          %v1701 = vlaneseq
          %v1702 = vshrl.u32 %v1701, 7
          %v1703 = vsub.s32 0, %v1702
          %v1704 = vrot.slane %v910, %v1703
          %v1707 = vsel %vm1434, %v1426, 0
          %v1710 = vsel %vm1434, %v1539, 0
          %v1712 = vsel %vm1434, %v1537, 0
          %1714 = vmatprep.subr.mxu0 0.0
          %1715 = vmatpush1.msra.mxu0 0.0
          %1716 = vmatprep.subr.mxu0 0.0
          %1717 = vmatpush1.msra.mxu0 0.0
          %1718 = vmatprep.subr.mxu0 0.0
          %1719 = vmatpush1.msra.mxu0 0.0
          %1720 = vmatprep.subr.mxu0 0.0
          %1721 = vmatpush1.msra.mxu0 0.0
          %1722 = vmatprep.subr.mxu0 0.0
          %1723 = vmatpush1.msra.mxu0 0.0
          %1724 = vmatprep.subr.mxu0 0.0
          %1725 = vmatpush1.msra.mxu0 0.0
          %1726 = vmatprep.subr.mxu0 0.0
          %1727 = vmatpush1.msra.mxu0 0.0
          %1728 = vmatprep.subr.mxu0 0.0
          %1729 = vmatpush1.msra.mxu0 0.0
          %1730 = vmatprep.subr.mxu0 0.0
          %1731 = vmatpush1.msra.mxu0 0.0
          %1732 = vmatprep.subr.mxu0 0.0
          %1733 = vmatpush1.msra.mxu0 0.0
          %1734 = vmatprep.subr.mxu0 0.0
          %1735 = vmatpush1.msra.mxu0 0.0
          %1736 = vmatprep.subr.mxu0 0.0
          %1737 = vmatpush1.msra.mxu0 0.0
          %1738 = vmatprep.subr.mxu0 0.0
          %1739 = vmatpush1.msra.mxu0 %v909
          %1740 = vmatprep.subr.mxu0 0.0
          %1741 = vmatpush1.msra.mxu0 %v908
          %1742 = vmatprep.subr.mxu0 0.0
          %1743 = vmatpush1.msra.mxu0 %v907
          %1744 = vmatprep.subr.mxu0 0.0
          %1745 = vmatpush1.msra.mxu0 %v906
          %1746 = vmatprep.subr.mxu0 0.0
          %1747 = vmatpush2.msra.mxu0 0.0
          %1748 = vmatprep.subr.mxu0 0.0
          %1749 = vmatpush2.msra.mxu0 0.0
          %1750 = vmatprep.subr.mxu0 0.0
          %1751 = vmatpush2.msra.mxu0 0.0
          %1752 = vmatprep.subr.mxu0 0.0
          %1753 = vmatpush2.msra.mxu0 0.0
          %1754 = vmatprep.subr.mxu0 0.0
          %1755 = vmatpush2.msra.mxu0 0.0
          %1756 = vmatprep.subr.mxu0 0.0
          %1757 = vmatpush2.msra.mxu0 0.0
          %1758 = vmatprep.subr.mxu0 0.0
          %1759 = vmatpush2.msra.mxu0 0.0
          %1760 = vmatprep.subr.mxu0 0.0
          %1761 = vmatpush2.msra.mxu0 0.0
          %1762 = vmatprep.subr.mxu0 0.0
          %1763 = vmatpush2.msra.mxu0 0.0
          %1764 = vmatprep.subr.mxu0 0.0
          %1765 = vmatpush2.msra.mxu0 0.0
          %1766 = vmatprep.subr.mxu0 0.0
          %1767 = vmatpush2.msra.mxu0 0.0
          %1768 = vmatprep.subr.mxu0 0.0
          %1769 = vmatpush2.msra.mxu0 0.0
          %1770 = vmatprep.subr.mxu0 0.0
          %1771 = vmatpush2.msra.mxu0 0.0
          %1772 = vmatprep.subr.mxu0 0.0
          %1773 = vmatpush2.msra.mxu0 0.0
          %1774 = vmatprep.subr.mxu0 0.0
          %1775 = vmatpush2.msra.mxu0 0.0
          %1776 = vmatprep.subr.mxu0 0.0
          %1777 = vmatpush2.msra.mxu0 0.0
          %1778 = vmatprep.mubr.f32.mxu0 0.0
          %1779 = vmatmul.mubr.f32.gmra.mxu0 %v1707
          %v1780 = vpop.f32.mrf.mxu0
          %v1781 = vadd.f32 %v1704, %v1780
          %v1782 = vpop.f32.mrf.mxu0
          %1783 = vmatprep.mubr.f32.mxu0 0.0
          %1784 = vmatmul.mubr.f32.gmra.mxu0 %v1710
          %v1785 = vpop.f32.mrf.mxu0
          %v1786 = vadd.f32 %v1704, %v1785
          %v1787 = vpop.f32.mrf.mxu0
          %1788 = vmatprep.mubr.f32.mxu0 0.0
          %1789 = vmatmul.mubr.f32.gmra.mxu0 %v1712
          %v1790 = vpop.f32.mrf.mxu0
          %v1791 = vadd.f32 %v1704, %v1790
          %v1792 = vpop.f32.mrf.mxu0
          %1793 = vdwg.mxu0
          %v1794 = vmax.f32 %v1781, 0.0
          %v1795 = vmax.f32 %v1786, 0.0
          %v1796 = vmax.f32 %v1791, 0.0
          %v1798 = vlaneseq
          %v1799 = vshrl.u32 %v1798, 7
          %v1800 = vsub.s32 0, %v1799
          %v1801 = vrot.slane %v915, %v1800
          %v1804 = vsel %vm1434, %v1794, 0
          %v1807 = vsel %vm1434, %v1795, 0
          %v1810 = vsel %vm1434, %v1796, 0
          %1812 = vmatprep.subr.mxu0 0.0
          %1813 = vmatpush1.msra.mxu0 0.0
          %1814 = vmatprep.subr.mxu0 0.0
          %1815 = vmatpush1.msra.mxu0 0.0
          %1816 = vmatprep.subr.mxu0 0.0
          %1817 = vmatpush1.msra.mxu0 0.0
          %1818 = vmatprep.subr.mxu0 0.0
          %1819 = vmatpush1.msra.mxu0 0.0
          %1820 = vmatprep.subr.mxu0 0.0
          %1821 = vmatpush1.msra.mxu0 0.0
          %1822 = vmatprep.subr.mxu0 0.0
          %1823 = vmatpush1.msra.mxu0 0.0
          %1824 = vmatprep.subr.mxu0 0.0
          %1825 = vmatpush1.msra.mxu0 0.0
          %1826 = vmatprep.subr.mxu0 0.0
          %1827 = vmatpush1.msra.mxu0 0.0
          %1828 = vmatprep.subr.mxu0 0.0
          %1829 = vmatpush1.msra.mxu0 0.0
          %1830 = vmatprep.subr.mxu0 0.0
          %1831 = vmatpush1.msra.mxu0 0.0
          %1832 = vmatprep.subr.mxu0 0.0
          %1833 = vmatpush1.msra.mxu0 0.0
          %1834 = vmatprep.subr.mxu0 0.0
          %1835 = vmatpush1.msra.mxu0 0.0
          %1836 = vmatprep.subr.mxu0 0.0
          %1837 = vmatpush1.msra.mxu0 %v914
          %1838 = vmatprep.subr.mxu0 0.0
          %1839 = vmatpush1.msra.mxu0 %v913
          %1840 = vmatprep.subr.mxu0 0.0
          %1841 = vmatpush1.msra.mxu0 %v912
          %1842 = vmatprep.subr.mxu0 0.0
          %1843 = vmatpush1.msra.mxu0 %v911
          %1844 = vmatprep.subr.mxu0 0.0
          %1845 = vmatpush2.msra.mxu0 0.0
          %1846 = vmatprep.subr.mxu0 0.0
          %1847 = vmatpush2.msra.mxu0 0.0
          %1848 = vmatprep.subr.mxu0 0.0
          %1849 = vmatpush2.msra.mxu0 0.0
          %1850 = vmatprep.subr.mxu0 0.0
          %1851 = vmatpush2.msra.mxu0 0.0
          %1852 = vmatprep.subr.mxu0 0.0
          %1853 = vmatpush2.msra.mxu0 0.0
          %1854 = vmatprep.subr.mxu0 0.0
          %1855 = vmatpush2.msra.mxu0 0.0
          %1856 = vmatprep.subr.mxu0 0.0
          %1857 = vmatpush2.msra.mxu0 0.0
          %1858 = vmatprep.subr.mxu0 0.0
          %1859 = vmatpush2.msra.mxu0 0.0
          %1860 = vmatprep.subr.mxu0 0.0
          %1861 = vmatpush2.msra.mxu0 0.0
          %1862 = vmatprep.subr.mxu0 0.0
          %1863 = vmatpush2.msra.mxu0 0.0
          %1864 = vmatprep.subr.mxu0 0.0
          %1865 = vmatpush2.msra.mxu0 0.0
          %1866 = vmatprep.subr.mxu0 0.0
          %1867 = vmatpush2.msra.mxu0 0.0
          %1868 = vmatprep.subr.mxu0 0.0
          %1869 = vmatpush2.msra.mxu0 0.0
          %1870 = vmatprep.subr.mxu0 0.0
          %1871 = vmatpush2.msra.mxu0 0.0
          %1872 = vmatprep.subr.mxu0 0.0
          %1873 = vmatpush2.msra.mxu0 0.0
          %1874 = vmatprep.subr.mxu0 0.0
          %1875 = vmatpush2.msra.mxu0 0.0
          %1876 = vmatprep.mubr.f32.mxu0 0.0
          %1877 = vmatmul.mubr.f32.gmra.mxu0 %v1804
          %v1878 = vpop.f32.mrf.mxu0
          %v1879 = vadd.f32 %v1801, %v1878
          %v1880 = vpop.f32.mrf.mxu0
          %1881 = vmatprep.mubr.f32.mxu0 0.0
          %1882 = vmatmul.mubr.f32.gmra.mxu0 %v1807
          %v1883 = vpop.f32.mrf.mxu0
          %v1884 = vadd.f32 %v1801, %v1883
          %v1885 = vpop.f32.mrf.mxu0
          %1886 = vmatprep.mubr.f32.mxu0 0.0
          %1887 = vmatmul.mubr.f32.gmra.mxu0 %v1810
          %v1888 = vpop.f32.mrf.mxu0
          %v1889 = vadd.f32 %v1801, %v1888
          %v1890 = vpop.f32.mrf.mxu0
          %1891 = vdwg.mxu0
          %v1892 = vmul.f32 %v1697, %v1697
          %vm1893 = vcmask 123904
          %v1894 = vsel %vm1893, %v1892, 0.0
          %1895 = vadd.xlane.f32.xlu0 %v1894
          %v1896 = vpop.xlane.xlu0 %1895
          %v1897 = vmax.f32 %v1896, 1e-24
          %v1898 = vrsqrt.pop %v1897
          %v1899 = vmul.f32 %v1697, %v1898
          %v1900 = vmul.f32 %v1879, %v1879
          %v1901 = vmul.f32 %v1884, %v1884
          %v1902 = vmul.f32 %v1889, %v1889
          %v1903 = vsel %vm1352, %v1900, 0.0
          %1904 = vadd.xlane.f32.xlu0 %v1903
          %v1905 = vpop.xlane.xlu0 %1904
          %v1906 = vsel %vm1352, %v1901, 0.0
          %1907 = vadd.xlane.f32.xlu0 %v1906
          %v1908 = vpop.xlane.xlu0 %1907
          %v1909 = vsel %vm1893, %v1902, 0.0
          %1910 = vadd.xlane.f32.xlu0 %v1909
          %v1911 = vpop.xlane.xlu0 %1910
          %v1912 = vmax.f32 %v1905, 1e-24
          %v1913 = vmax.f32 %v1908, 1e-24
          %v1914 = vmax.f32 %v1911, 1e-24
          %v1915 = vrsqrt.pop %v1912
          %v1916 = vrsqrt.pop %v1913
          %v1917 = vrsqrt.pop %v1914
          %v1918 = vmul.f32 %v1879, %v1915
          %v1919 = vmul.f32 %v1884, %v1916
          %v1920 = vmul.f32 %v1889, %v1917
          %v1921 = vld [vmem:[%s13] sm:$0xff]
          %v1922 = vld [vmem:[%s14] sm:$0x1]
          %v1923 = vld [vmem:[%s15] sm:$0xff]
          %v1924 = vld [vmem:[%s15 + $0x8] sm:$0xff]
          %v1925 = vld [vmem:[%s15 + $0x10] sm:$0xff]
          %v1926 = vld [vmem:[%s15 + $0x18] sm:$0xff]
          %v1927 = vld [vmem:[%s16] sm:$0x1]
          %v1928 = vld [vmem:[%s17] sm:$0xff]
          %v1929 = vld [vmem:[%s17 + $0x8] sm:$0xff]
          %v1930 = vld [vmem:[%s17 + $0x10] sm:$0xff]
          %v1931 = vld [vmem:[%s17 + $0x18] sm:$0xff]
          %v1932 = vld [vmem:[%s18] sm:$0x1]
          %v1933 = vld [vmem:[%s19] sm:$0xff]
          %v1934 = vld [vmem:[%s19 + $0x8] sm:$0xff]
          %v1935 = vld [vmem:[%s19 + $0x10] sm:$0xff]
          %v1936 = vld [vmem:[%s19 + $0x18] sm:$0xff]
          %v1937 = vld [vmem:[%s20] sm:$0x1]
          %v1938 = vld [vmem:[%s21] sm:$0xff]
          %v1939 = vld [vmem:[%s21 + $0x8] sm:$0xff]
          %v1940 = vld [vmem:[%s21 + $0x10] sm:$0xff]
          %v1941 = vld [vmem:[%s21 + $0x18] sm:$0xff]
          %v1942 = vld [vmem:[%s22] sm:$0x1]
          %v1943 = vld [vmem:[%s1] sm:$0xff]
          %v1944 = vld [vmem:[%s1 + $0x8] sm:$0xff]
          %v1945 = vld [vmem:[%s1 + $0x10] sm:$0xff]
          %v1946 = vld [vmem:[%s1 + $0x18] sm:$0xff]
          %v1947 = vld [vmem:[%s1 + $0x20] sm:$0xff]
          %v1948 = vld [vmem:[%s1 + $0x28] sm:$0xff]
          %v1949 = vld [vmem:[%s1 + $0x30] sm:$0xff]
          %v1950 = vld [vmem:[%s1 + $0x38] sm:$0xff]
          %v1951 = vld [vmem:[%s1 + $0x40] sm:$0xff]
          %v1952 = vld [vmem:[%s1 + $0x48] sm:$0xff]
          %v1953 = vld [vmem:[%s1 + $0x50] sm:$0xff]
          %v1954 = vld [vmem:[%s1 + $0x58] sm:$0xff]
          %v1955 = vld [vmem:[%s1 + $0x60] sm:$0xff]
          %v1956 = vld [vmem:[%s1 + $0x68] sm:$0xff]
          %v1957 = vld [vmem:[%s1 + $0x70] sm:$0xff]
          %v1958 = vld [vmem:[%s1 + $0x78] sm:$0xff]
          %v1959 = vld [vmem:[%s1 + $0x80] sm:$0xff]
          %v1960 = vld [vmem:[%s1 + $0x88] sm:$0xff]
          %v1961 = vld [vmem:[%s1 + $0x90] sm:$0xff]
          %v1962 = vld [vmem:[%s1 + $0x98] sm:$0xff]
          %v1963 = vld [vmem:[%s1 + $0xa0] sm:$0xff]
          %v1964 = vld [vmem:[%s1 + $0xa8] sm:$0xff]
          %v1965 = vld [vmem:[%s1 + $0xb0] sm:$0xff]
          %v1966 = vld [vmem:[%s1 + $0xb8] sm:$0xff]
          %v1967 = vld [vmem:[%s1 + $0xc0] sm:$0xff]
          %v1968 = vld [vmem:[%s1 + $0xc8] sm:$0xff]
          %v1969 = vld [vmem:[%s1 + $0xd0] sm:$0xff]
          %v1970 = vld [vmem:[%s1 + $0xd8] sm:$0xff]
          %v1971 = vld [vmem:[%s1 + $0xe0] sm:$0xff]
          %v1972 = vld [vmem:[%s1 + $0xe8] sm:$0xff]
          %v1973 = vld [vmem:[%s1 + $0xf0] sm:$0xff]
          %v1974 = vld [vmem:[%s1 + $0xf8] sm:$0xff]
          %v1975 = vld [vmem:[%s1 + $0x100] sm:$0xff]
          %v1976 = vld [vmem:[%s1 + $0x108] sm:$0xff]
          %v1977 = vld [vmem:[%s1 + $0x110] sm:$0xff]
          %v1978 = vld [vmem:[%s1 + $0x118] sm:$0xff]
          %v1980 = vlaneseq
          %v1981 = vshrl.u32 %v1980, 7
          %v1982 = vsub.s32 0, %v1981
          %v1983 = vrot.slane %v1922, %v1982
          %v1986 = vsel %vm958, %v1943, 0
          %v1989 = vsel %vm958, %v1944, 0
          %v1992 = vsel %vm958, %v1945, 0
          %v1995 = vsel %vm958, %v1946, 0
          %v1998 = vsel %vm958, %v1947, 0
          %v2001 = vsel %vm958, %v1948, 0
          %v2004 = vsel %vm958, %v1949, 0
          %v2007 = vsel %vm958, %v1950, 0
          %v2010 = vsel %vm958, %v1951, 0
          %v2013 = vsel %vm958, %v1952, 0
          %v2016 = vsel %vm958, %v1953, 0
          %v2019 = vsel %vm958, %v1954, 0
          %v2022 = vsel %vm958, %v1955, 0
          %v2025 = vsel %vm958, %v1956, 0
          %v2028 = vsel %vm958, %v1957, 0
          %v2031 = vsel %vm958, %v1958, 0
          %v2034 = vsel %vm958, %v1959, 0
          %v2037 = vsel %vm958, %v1960, 0
          %v2040 = vsel %vm958, %v1961, 0
          %v2043 = vsel %vm958, %v1962, 0
          %v2046 = vsel %vm958, %v1963, 0
          %v2049 = vsel %vm958, %v1964, 0
          %v2052 = vsel %vm958, %v1965, 0
          %v2055 = vsel %vm958, %v1966, 0
          %v2058 = vsel %vm958, %v1967, 0
          %v2061 = vsel %vm958, %v1968, 0
          %v2064 = vsel %vm958, %v1969, 0
          %v2067 = vsel %vm958, %v1970, 0
          %v2070 = vsel %vm958, %v1971, 0
          %v2073 = vsel %vm958, %v1972, 0
          %v2076 = vsel %vm958, %v1973, 0
          %v2079 = vsel %vm958, %v1974, 0
          %v2082 = vsel %vm958, %v1975, 0
          %v2085 = vsel %vm958, %v1976, 0
          %v2088 = vsel %vm958, %v1977, 0
          %v2091 = vsel %vm958, %v1978, 0
          %2093 = vmatprep.subr.mxu0 0.0
          %2094 = vmatpush1.msra.mxu0 0.0
          %2095 = vmatprep.subr.mxu0 0.0
          %2096 = vmatpush1.msra.mxu0 0.0
          %2097 = vmatprep.subr.mxu0 0.0
          %2098 = vmatpush1.msra.mxu0 0.0
          %2099 = vmatprep.subr.mxu0 0.0
          %2100 = vmatpush1.msra.mxu0 0.0
          %2101 = vmatprep.subr.mxu0 0.0
          %2102 = vmatpush1.msra.mxu0 0.0
          %2103 = vmatprep.subr.mxu0 0.0
          %2104 = vmatpush1.msra.mxu0 0.0
          %2105 = vmatprep.subr.mxu0 0.0
          %2106 = vmatpush1.msra.mxu0 0.0
          %2107 = vmatprep.subr.mxu0 0.0
          %2108 = vmatpush1.msra.mxu0 0.0
          %2109 = vmatprep.subr.mxu0 0.0
          %2110 = vmatpush1.msra.mxu0 0.0
          %2111 = vmatprep.subr.mxu0 0.0
          %2112 = vmatpush1.msra.mxu0 0.0
          %2113 = vmatprep.subr.mxu0 0.0
          %2114 = vmatpush1.msra.mxu0 0.0
          %2115 = vmatprep.subr.mxu0 0.0
          %2116 = vmatpush1.msra.mxu0 0.0
          %2117 = vmatprep.subr.mxu0 0.0
          %2118 = vmatpush1.msra.mxu0 0.0
          %2119 = vmatprep.subr.mxu0 0.0
          %2120 = vmatpush1.msra.mxu0 0.0
          %2121 = vmatprep.subr.mxu0 0.0
          %2122 = vmatpush1.msra.mxu0 0.0
          %2123 = vmatprep.subr.mxu0 0.0
          %2124 = vmatpush1.msra.mxu0 %v1921
          %2125 = vmatprep.subr.mxu0 0.0
          %2126 = vmatpush2.msra.mxu0 0.0
          %2127 = vmatprep.subr.mxu0 0.0
          %2128 = vmatpush2.msra.mxu0 0.0
          %2129 = vmatprep.subr.mxu0 0.0
          %2130 = vmatpush2.msra.mxu0 0.0
          %2131 = vmatprep.subr.mxu0 0.0
          %2132 = vmatpush2.msra.mxu0 0.0
          %2133 = vmatprep.subr.mxu0 0.0
          %2134 = vmatpush2.msra.mxu0 0.0
          %2135 = vmatprep.subr.mxu0 0.0
          %2136 = vmatpush2.msra.mxu0 0.0
          %2137 = vmatprep.subr.mxu0 0.0
          %2138 = vmatpush2.msra.mxu0 0.0
          %2139 = vmatprep.subr.mxu0 0.0
          %2140 = vmatpush2.msra.mxu0 0.0
          %2141 = vmatprep.subr.mxu0 0.0
          %2142 = vmatpush2.msra.mxu0 0.0
          %2143 = vmatprep.subr.mxu0 0.0
          %2144 = vmatpush2.msra.mxu0 0.0
          %2145 = vmatprep.subr.mxu0 0.0
          %2146 = vmatpush2.msra.mxu0 0.0
          %2147 = vmatprep.subr.mxu0 0.0
          %2148 = vmatpush2.msra.mxu0 0.0
          %2149 = vmatprep.subr.mxu0 0.0
          %2150 = vmatpush2.msra.mxu0 0.0
          %2151 = vmatprep.subr.mxu0 0.0
          %2152 = vmatpush2.msra.mxu0 0.0
          %2153 = vmatprep.subr.mxu0 0.0
          %2154 = vmatpush2.msra.mxu0 0.0
          %2155 = vmatprep.subr.mxu0 0.0
          %2156 = vmatpush2.msra.mxu0 0.0
          %2157 = vmatprep.mubr.f32.mxu0 0.0
          %2158 = vmatmul.mubr.f32.gmra.mxu0 %v1986
          %v2159 = vpop.f32.mrf.mxu0
          %v2160 = vadd.f32 %v1983, %v2159
          %v2161 = vpop.f32.mrf.mxu0
          %2162 = vmatprep.mubr.f32.mxu0 0.0
          %2163 = vmatmul.mubr.f32.gmra.mxu0 %v1989
          %v2164 = vpop.f32.mrf.mxu0
          %v2165 = vadd.f32 %v1983, %v2164
          %v2166 = vpop.f32.mrf.mxu0
          %2167 = vmatprep.mubr.f32.mxu0 0.0
          %2168 = vmatmul.mubr.f32.gmra.mxu0 %v1992
          %v2169 = vpop.f32.mrf.mxu0
          %v2170 = vadd.f32 %v1983, %v2169
          %v2171 = vpop.f32.mrf.mxu0
          %2172 = vmatprep.mubr.f32.mxu0 0.0
          %2173 = vmatmul.mubr.f32.gmra.mxu0 %v1995
          %v2174 = vpop.f32.mrf.mxu0
          %v2175 = vadd.f32 %v1983, %v2174
          %v2176 = vpop.f32.mrf.mxu0
          %2177 = vmatprep.mubr.f32.mxu0 0.0
          %2178 = vmatmul.mubr.f32.gmra.mxu0 %v1998
          %v2179 = vpop.f32.mrf.mxu0
          %v2180 = vadd.f32 %v1983, %v2179
          %v2181 = vpop.f32.mrf.mxu0
          %2182 = vmatprep.mubr.f32.mxu0 0.0
          %2183 = vmatmul.mubr.f32.gmra.mxu0 %v2001
          %v2184 = vpop.f32.mrf.mxu0
          %v2185 = vadd.f32 %v1983, %v2184
          %v2186 = vpop.f32.mrf.mxu0
          %2187 = vmatprep.mubr.f32.mxu0 0.0
          %2188 = vmatmul.mubr.f32.gmra.mxu0 %v2004
          %v2189 = vpop.f32.mrf.mxu0
          %v2190 = vadd.f32 %v1983, %v2189
          %v2191 = vpop.f32.mrf.mxu0
          %2192 = vmatprep.mubr.f32.mxu0 0.0
          %2193 = vmatmul.mubr.f32.gmra.mxu0 %v2007
          %v2194 = vpop.f32.mrf.mxu0
          %v2195 = vadd.f32 %v1983, %v2194
          %v2196 = vpop.f32.mrf.mxu0
          %2197 = vmatprep.mubr.f32.mxu0 0.0
          %2198 = vmatmul.mubr.f32.gmra.mxu0 %v2010
          %v2199 = vpop.f32.mrf.mxu0
          %v2200 = vadd.f32 %v1983, %v2199
          %v2201 = vpop.f32.mrf.mxu0
          %2202 = vmatprep.mubr.f32.mxu0 0.0
          %2203 = vmatmul.mubr.f32.gmra.mxu0 %v2013
          %v2204 = vpop.f32.mrf.mxu0
          %v2205 = vadd.f32 %v1983, %v2204
          %v2206 = vpop.f32.mrf.mxu0
          %2207 = vmatprep.mubr.f32.mxu0 0.0
          %2208 = vmatmul.mubr.f32.gmra.mxu0 %v2016
          %v2209 = vpop.f32.mrf.mxu0
          %v2210 = vadd.f32 %v1983, %v2209
          %v2211 = vpop.f32.mrf.mxu0
          %2212 = vmatprep.mubr.f32.mxu0 0.0
          %2213 = vmatmul.mubr.f32.gmra.mxu0 %v2019
          %v2214 = vpop.f32.mrf.mxu0
          %v2215 = vadd.f32 %v1983, %v2214
          %v2216 = vpop.f32.mrf.mxu0
          %2217 = vmatprep.mubr.f32.mxu0 0.0
          %2218 = vmatmul.mubr.f32.gmra.mxu0 %v2022
          %v2219 = vpop.f32.mrf.mxu0
          %v2220 = vadd.f32 %v1983, %v2219
          %v2221 = vpop.f32.mrf.mxu0
          %2222 = vmatprep.mubr.f32.mxu0 0.0
          %2223 = vmatmul.mubr.f32.gmra.mxu0 %v2025
          %v2224 = vpop.f32.mrf.mxu0
          %v2225 = vadd.f32 %v1983, %v2224
          %v2226 = vpop.f32.mrf.mxu0
          %2227 = vmatprep.mubr.f32.mxu0 0.0
          %2228 = vmatmul.mubr.f32.gmra.mxu0 %v2028
          %v2229 = vpop.f32.mrf.mxu0
          %v2230 = vadd.f32 %v1983, %v2229
          %v2231 = vpop.f32.mrf.mxu0
          %2232 = vmatprep.mubr.f32.mxu0 0.0
          %2233 = vmatmul.mubr.f32.gmra.mxu0 %v2031
          %v2234 = vpop.f32.mrf.mxu0
          %v2235 = vadd.f32 %v1983, %v2234
          %v2236 = vpop.f32.mrf.mxu0
          %2237 = vmatprep.mubr.f32.mxu0 0.0
          %2238 = vmatmul.mubr.f32.gmra.mxu0 %v2034
          %v2239 = vpop.f32.mrf.mxu0
          %v2240 = vadd.f32 %v1983, %v2239
          %v2241 = vpop.f32.mrf.mxu0
          %2242 = vmatprep.mubr.f32.mxu0 0.0
          %2243 = vmatmul.mubr.f32.gmra.mxu0 %v2037
          %v2244 = vpop.f32.mrf.mxu0
          %v2245 = vadd.f32 %v1983, %v2244
          %v2246 = vpop.f32.mrf.mxu0
          %2247 = vmatprep.mubr.f32.mxu0 0.0
          %2248 = vmatmul.mubr.f32.gmra.mxu0 %v2040
          %v2249 = vpop.f32.mrf.mxu0
          %v2250 = vadd.f32 %v1983, %v2249
          %v2251 = vpop.f32.mrf.mxu0
          %2252 = vmatprep.mubr.f32.mxu0 0.0
          %2253 = vmatmul.mubr.f32.gmra.mxu0 %v2043
          %v2254 = vpop.f32.mrf.mxu0
          %v2255 = vadd.f32 %v1983, %v2254
          %v2256 = vpop.f32.mrf.mxu0
          %2257 = vmatprep.mubr.f32.mxu0 0.0
          %2258 = vmatmul.mubr.f32.gmra.mxu0 %v2046
          %v2259 = vpop.f32.mrf.mxu0
          %v2260 = vadd.f32 %v1983, %v2259
          %v2261 = vpop.f32.mrf.mxu0
          %2262 = vmatprep.mubr.f32.mxu0 0.0
          %2263 = vmatmul.mubr.f32.gmra.mxu0 %v2049
          %v2264 = vpop.f32.mrf.mxu0
          %v2265 = vadd.f32 %v1983, %v2264
          %v2266 = vpop.f32.mrf.mxu0
          %2267 = vmatprep.mubr.f32.mxu0 0.0
          %2268 = vmatmul.mubr.f32.gmra.mxu0 %v2052
          %v2269 = vpop.f32.mrf.mxu0
          %v2270 = vadd.f32 %v1983, %v2269
          %v2271 = vpop.f32.mrf.mxu0
          %2272 = vmatprep.mubr.f32.mxu0 0.0
          %2273 = vmatmul.mubr.f32.gmra.mxu0 %v2055
          %v2274 = vpop.f32.mrf.mxu0
          %v2275 = vadd.f32 %v1983, %v2274
          %v2276 = vpop.f32.mrf.mxu0
          %2277 = vmatprep.mubr.f32.mxu0 0.0
          %2278 = vmatmul.mubr.f32.gmra.mxu0 %v2058
          %v2279 = vpop.f32.mrf.mxu0
          %v2280 = vadd.f32 %v1983, %v2279
          %v2281 = vpop.f32.mrf.mxu0
          %2282 = vmatprep.mubr.f32.mxu0 0.0
          %2283 = vmatmul.mubr.f32.gmra.mxu0 %v2061
          %v2284 = vpop.f32.mrf.mxu0
          %v2285 = vadd.f32 %v1983, %v2284
          %v2286 = vpop.f32.mrf.mxu0
          %2287 = vmatprep.mubr.f32.mxu0 0.0
          %2288 = vmatmul.mubr.f32.gmra.mxu0 %v2064
          %v2289 = vpop.f32.mrf.mxu0
          %v2290 = vadd.f32 %v1983, %v2289
          %v2291 = vpop.f32.mrf.mxu0
          %2292 = vmatprep.mubr.f32.mxu0 0.0
          %2293 = vmatmul.mubr.f32.gmra.mxu0 %v2067
          %v2294 = vpop.f32.mrf.mxu0
          %v2295 = vadd.f32 %v1983, %v2294
          %v2296 = vpop.f32.mrf.mxu0
          %2297 = vmatprep.mubr.f32.mxu0 0.0
          %2298 = vmatmul.mubr.f32.gmra.mxu0 %v2070
          %v2299 = vpop.f32.mrf.mxu0
          %v2300 = vadd.f32 %v1983, %v2299
          %v2301 = vpop.f32.mrf.mxu0
          %2302 = vmatprep.mubr.f32.mxu0 0.0
          %2303 = vmatmul.mubr.f32.gmra.mxu0 %v2073
          %v2304 = vpop.f32.mrf.mxu0
          %v2305 = vadd.f32 %v1983, %v2304
          %v2306 = vpop.f32.mrf.mxu0
          %2307 = vmatprep.mubr.f32.mxu0 0.0
          %2308 = vmatmul.mubr.f32.gmra.mxu0 %v2076
          %v2309 = vpop.f32.mrf.mxu0
          %v2310 = vadd.f32 %v1983, %v2309
          %v2311 = vpop.f32.mrf.mxu0
          %2312 = vmatprep.mubr.f32.mxu0 0.0
          %2313 = vmatmul.mubr.f32.gmra.mxu0 %v2079
          %v2314 = vpop.f32.mrf.mxu0
          %v2315 = vadd.f32 %v1983, %v2314
          %v2316 = vpop.f32.mrf.mxu0
          %2317 = vmatprep.mubr.f32.mxu0 0.0
          %2318 = vmatmul.mubr.f32.gmra.mxu0 %v2082
          %v2319 = vpop.f32.mrf.mxu0
          %v2320 = vadd.f32 %v1983, %v2319
          %v2321 = vpop.f32.mrf.mxu0
          %2322 = vmatprep.mubr.f32.mxu0 0.0
          %2323 = vmatmul.mubr.f32.gmra.mxu0 %v2085
          %v2324 = vpop.f32.mrf.mxu0
          %v2325 = vadd.f32 %v1983, %v2324
          %v2326 = vpop.f32.mrf.mxu0
          %2327 = vmatprep.mubr.f32.mxu0 0.0
          %2328 = vmatmul.mubr.f32.gmra.mxu0 %v2088
          %v2329 = vpop.f32.mrf.mxu0
          %v2330 = vadd.f32 %v1983, %v2329
          %v2331 = vpop.f32.mrf.mxu0
          %2332 = vmatprep.mubr.f32.mxu0 0.0
          %2333 = vmatmul.mubr.f32.gmra.mxu0 %v2091
          %v2334 = vpop.f32.mrf.mxu0
          %v2335 = vadd.f32 %v1983, %v2334
          %v2336 = vpop.f32.mrf.mxu0
          %2337 = vdwg.mxu0
          %v2338 = vmax.f32 %v2160, 0.0
          %v2339 = vmax.f32 %v2165, 0.0
          %v2340 = vmax.f32 %v2170, 0.0
          %v2341 = vmax.f32 %v2175, 0.0
          %v2342 = vmax.f32 %v2180, 0.0
          %v2343 = vmax.f32 %v2185, 0.0
          %v2344 = vmax.f32 %v2190, 0.0
          %v2345 = vmax.f32 %v2195, 0.0
          %v2346 = vmax.f32 %v2200, 0.0
          %v2347 = vmax.f32 %v2205, 0.0
          %v2348 = vmax.f32 %v2210, 0.0
          %v2349 = vmax.f32 %v2215, 0.0
          %v2350 = vmax.f32 %v2220, 0.0
          %v2351 = vmax.f32 %v2225, 0.0
          %v2352 = vmax.f32 %v2230, 0.0
          %v2353 = vmax.f32 %v2235, 0.0
          %v2354 = vmax.f32 %v2240, 0.0
          %v2355 = vmax.f32 %v2245, 0.0
          %v2356 = vmax.f32 %v2250, 0.0
          %v2357 = vmax.f32 %v2255, 0.0
          %v2358 = vmax.f32 %v2260, 0.0
          %v2359 = vmax.f32 %v2265, 0.0
          %v2360 = vmax.f32 %v2270, 0.0
          %v2361 = vmax.f32 %v2275, 0.0
          %v2362 = vmax.f32 %v2280, 0.0
          %v2363 = vmax.f32 %v2285, 0.0
          %v2364 = vmax.f32 %v2290, 0.0
          %v2365 = vmax.f32 %v2295, 0.0
          %v2366 = vmax.f32 %v2300, 0.0
          %v2367 = vmax.f32 %v2305, 0.0
          %v2368 = vmax.f32 %v2310, 0.0
          %v2369 = vmax.f32 %v2315, 0.0
          %v2370 = vmax.f32 %v2320, 0.0
          %v2371 = vmax.f32 %v2325, 0.0
          %v2372 = vmax.f32 %v2330, 0.0
          %v2373 = vmax.f32 %v2335, 0.0
          %2374 = vmatprep.subr.mxu0 0.0
          %2375 = vmatpush1.msra.mxu0 %v2353
          %2376 = vmatprep.subr.mxu0 0.0
          %2377 = vmatpush1.msra.mxu0 %v2352
          %2378 = vmatprep.subr.mxu0 0.0
          %2379 = vmatpush1.msra.mxu0 %v2351
          %2380 = vmatprep.subr.mxu0 0.0
          %2381 = vmatpush1.msra.mxu0 %v2350
          %2382 = vmatprep.subr.mxu0 0.0
          %2383 = vmatpush1.msra.mxu0 %v2349
          %2384 = vmatprep.subr.mxu0 0.0
          %2385 = vmatpush1.msra.mxu0 %v2348
          %2386 = vmatprep.subr.mxu0 0.0
          %2387 = vmatpush1.msra.mxu0 %v2347
          %2388 = vmatprep.subr.mxu0 0.0
          %2389 = vmatpush1.msra.mxu0 %v2346
          %2390 = vmatprep.subr.mxu0 0.0
          %2391 = vmatpush1.msra.mxu0 %v2345
          %2392 = vmatprep.subr.mxu0 0.0
          %2393 = vmatpush1.msra.mxu0 %v2344
          %2394 = vmatprep.subr.mxu0 0.0
          %2395 = vmatpush1.msra.mxu0 %v2343
          %2396 = vmatprep.subr.mxu0 0.0
          %2397 = vmatpush1.msra.mxu0 %v2342
          %2398 = vmatprep.subr.mxu0 0.0
          %2399 = vmatpush1.msra.mxu0 %v2341
          %2400 = vmatprep.subr.mxu0 0.0
          %2401 = vmatpush1.msra.mxu0 %v2340
          %2402 = vmatprep.subr.mxu0 0.0
          %2403 = vmatpush1.msra.mxu0 %v2339
          %2404 = vmatprep.subr.mxu0 0.0
          %2405 = vmatpush1.msra.mxu0 %v2338
          %2406 = vmatprep.subr.mxu0 0.0
          %2407 = vmatpush2.msra.mxu0 0.0
          %2408 = vmatprep.subr.mxu0 0.0
          %2409 = vmatpush2.msra.mxu0 0.0
          %2410 = vmatprep.subr.mxu0 0.0
          %2411 = vmatpush2.msra.mxu0 0.0
          %2412 = vmatprep.subr.mxu0 0.0
          %2413 = vmatpush2.msra.mxu0 0.0
          %2414 = vmatprep.subr.mxu0 0.0
          %2415 = vmatpush2.msra.mxu0 0.0
          %2416 = vmatprep.subr.mxu0 0.0
          %2417 = vmatpush2.msra.mxu0 0.0
          %2418 = vmatprep.subr.mxu0 0.0
          %2419 = vmatpush2.msra.mxu0 0.0
          %2420 = vmatprep.subr.mxu0 0.0
          %2421 = vmatpush2.msra.mxu0 0.0
          %2422 = vmatprep.subr.mxu0 0.0
          %2423 = vmatpush2.msra.mxu0 0.0
          %2424 = vmatprep.subr.mxu0 0.0
          %2425 = vmatpush2.msra.mxu0 0.0
          %2426 = vmatprep.subr.mxu0 0.0
          %2427 = vmatpush2.msra.mxu0 0.0
          %2428 = vmatprep.subr.mxu0 0.0
          %2429 = vmatpush2.msra.mxu0 0.0
          %2430 = vmatprep.subr.mxu0 0.0
          %2431 = vmatpush2.msra.mxu0 0.0
          %2432 = vmatprep.subr.mxu0 0.0
          %2433 = vmatpush2.msra.mxu0 0.0
          %2434 = vmatprep.subr.mxu0 0.0
          %2435 = vmatpush2.msra.mxu0 %v2355
          %2436 = vmatprep.subr.mxu0 0.0
          %2437 = vmatpush2.msra.mxu0 %v2354
          %2438 = vmatprep.mubr.f32.mxu0 %v1354
          %2439 = vmatmul.mubr.f32.gmra.mxu0 %v1348
          %v2440 = vpop.f32.mrf.mxu0
          %v2441 = vadd.f32 0.0, %v2440
          %v2442 = vpop.f32.mrf.mxu0
          %2443 = vmatprep.mubr.f32.mxu0 %v1357
          %2444 = vmatmul.mubr.f32.gmra.mxu0 %v1350
          %v2445 = vpop.f32.mrf.mxu0
          %v2446 = vadd.f32 0.0, %v2445
          %v2447 = vpop.f32.mrf.mxu0
          %2448 = vdwg.mxu0
          %v2449 = vsel %vm1434, %v2441, 0.0
          %v2450 = vsel %vm1436, %v2446, 0.0
          %v2451 = vadd.f32 %v2449, %v2450
          %v2452 = vrot.slane %v2451, 4
          %v2453 = vadd.f32 %v2451, %v2452
          %v2454 = vrot.slane %v2453, 2
          %v2455 = vadd.f32 %v2453, %v2454
          %v2456 = vrot.slane %v2455, 1
          %v2457 = vadd.f32 %v2455, %v2456
          %v2458 = vmul.f32 %v2457, %v1445
          %2459 = vmatprep.subr.mxu0 0.0
          %2460 = vmatpush1.msra.mxu0 %v2371
          %2461 = vmatprep.subr.mxu0 0.0
          %2462 = vmatpush1.msra.mxu0 %v2370
          %2463 = vmatprep.subr.mxu0 0.0
          %2464 = vmatpush1.msra.mxu0 %v2369
          %2465 = vmatprep.subr.mxu0 0.0
          %2466 = vmatpush1.msra.mxu0 %v2368
          %2467 = vmatprep.subr.mxu0 0.0
          %2468 = vmatpush1.msra.mxu0 %v2367
          %2469 = vmatprep.subr.mxu0 0.0
          %2470 = vmatpush1.msra.mxu0 %v2366
          %2471 = vmatprep.subr.mxu0 0.0
          %2472 = vmatpush1.msra.mxu0 %v2365
          %2473 = vmatprep.subr.mxu0 0.0
          %2474 = vmatpush1.msra.mxu0 %v2364
          %2475 = vmatprep.subr.mxu0 0.0
          %2476 = vmatpush1.msra.mxu0 %v2363
          %2477 = vmatprep.subr.mxu0 0.0
          %2478 = vmatpush1.msra.mxu0 %v2362
          %2479 = vmatprep.subr.mxu0 0.0
          %2480 = vmatpush1.msra.mxu0 %v2361
          %2481 = vmatprep.subr.mxu0 0.0
          %2482 = vmatpush1.msra.mxu0 %v2360
          %2483 = vmatprep.subr.mxu0 0.0
          %2484 = vmatpush1.msra.mxu0 %v2359
          %2485 = vmatprep.subr.mxu0 0.0
          %2486 = vmatpush1.msra.mxu0 %v2358
          %2487 = vmatprep.subr.mxu0 0.0
          %2488 = vmatpush1.msra.mxu0 %v2357
          %2489 = vmatprep.subr.mxu0 0.0
          %2490 = vmatpush1.msra.mxu0 %v2356
          %2491 = vmatprep.subr.mxu0 0.0
          %2492 = vmatpush2.msra.mxu0 0.0
          %2493 = vmatprep.subr.mxu0 0.0
          %2494 = vmatpush2.msra.mxu0 0.0
          %2495 = vmatprep.subr.mxu0 0.0
          %2496 = vmatpush2.msra.mxu0 0.0
          %2497 = vmatprep.subr.mxu0 0.0
          %2498 = vmatpush2.msra.mxu0 0.0
          %2499 = vmatprep.subr.mxu0 0.0
          %2500 = vmatpush2.msra.mxu0 0.0
          %2501 = vmatprep.subr.mxu0 0.0
          %2502 = vmatpush2.msra.mxu0 0.0
          %2503 = vmatprep.subr.mxu0 0.0
          %2504 = vmatpush2.msra.mxu0 0.0
          %2505 = vmatprep.subr.mxu0 0.0
          %2506 = vmatpush2.msra.mxu0 0.0
          %2507 = vmatprep.subr.mxu0 0.0
          %2508 = vmatpush2.msra.mxu0 0.0
          %2509 = vmatprep.subr.mxu0 0.0
          %2510 = vmatpush2.msra.mxu0 0.0
          %2511 = vmatprep.subr.mxu0 0.0
          %2512 = vmatpush2.msra.mxu0 0.0
          %2513 = vmatprep.subr.mxu0 0.0
          %2514 = vmatpush2.msra.mxu0 0.0
          %2515 = vmatprep.subr.mxu0 0.0
          %2516 = vmatpush2.msra.mxu0 0.0
          %2517 = vmatprep.subr.mxu0 0.0
          %2518 = vmatpush2.msra.mxu0 0.0
          %2519 = vmatprep.subr.mxu0 0.0
          %2520 = vmatpush2.msra.mxu0 %v2373
          %2521 = vmatprep.subr.mxu0 0.0
          %2522 = vmatpush2.msra.mxu0 %v2372
          %2523 = vmatprep.mubr.f32.mxu0 %v1354
          %2524 = vmatmul.mubr.f32.gmra.mxu0 %v1348
          %v2525 = vpop.f32.mrf.mxu0
          %v2526 = vadd.f32 0.0, %v2525
          %v2527 = vpop.f32.mrf.mxu0
          %2528 = vmatprep.mubr.f32.mxu0 %v1357
          %2529 = vmatmul.mubr.f32.gmra.mxu0 %v1350
          %v2530 = vpop.f32.mrf.mxu0
          %v2531 = vadd.f32 0.0, %v2530
          %v2532 = vpop.f32.mrf.mxu0
          %2533 = vdwg.mxu0
          %v2534 = vsel %vm1434, %v2526, 0.0
          %v2535 = vsel %vm1436, %v2531, 0.0
          %v2536 = vadd.f32 %v2534, %v2535
          %v2537 = vrot.slane %v2536, 4
          %v2538 = vadd.f32 %v2536, %v2537
          %v2539 = vrot.slane %v2538, 2
          %v2540 = vadd.f32 %v2538, %v2539
          %v2541 = vrot.slane %v2540, 1
          %v2542 = vadd.f32 %v2540, %v2541
          %v2543 = vmul.f32 %v2542, %v1445
          %v2546 = vrot.slane %v2526, 7
          %v2547 = vrot.slane %v2531, 7
          %v2548 = vsel %vm1534, %v2546, %v2547
          %v2550 = vsel %vm1534, %v2446, %v2546
          %v2551 = vsel %vm1534, %v2458, %v2543
          %v2553 = vlaneseq
          %v2554 = vshrl.u32 %v2553, 7
          %v2555 = vsub.s32 0, %v2554
          %v2556 = vrot.slane %v1927, %v2555
          %v2559 = vsel %vm1434, %v2551, 0
          %2561 = vmatprep.subr.mxu0 0.0
          %2562 = vmatpush1.msra.mxu0 0.0
          %2563 = vmatprep.subr.mxu0 0.0
          %2564 = vmatpush1.msra.mxu0 0.0
          %2565 = vmatprep.subr.mxu0 0.0
          %2566 = vmatpush1.msra.mxu0 0.0
          %2567 = vmatprep.subr.mxu0 0.0
          %2568 = vmatpush1.msra.mxu0 0.0
          %2569 = vmatprep.subr.mxu0 0.0
          %2570 = vmatpush1.msra.mxu0 0.0
          %2571 = vmatprep.subr.mxu0 0.0
          %2572 = vmatpush1.msra.mxu0 0.0
          %2573 = vmatprep.subr.mxu0 0.0
          %2574 = vmatpush1.msra.mxu0 0.0
          %2575 = vmatprep.subr.mxu0 0.0
          %2576 = vmatpush1.msra.mxu0 0.0
          %2577 = vmatprep.subr.mxu0 0.0
          %2578 = vmatpush1.msra.mxu0 0.0
          %2579 = vmatprep.subr.mxu0 0.0
          %2580 = vmatpush1.msra.mxu0 0.0
          %2581 = vmatprep.subr.mxu0 0.0
          %2582 = vmatpush1.msra.mxu0 0.0
          %2583 = vmatprep.subr.mxu0 0.0
          %2584 = vmatpush1.msra.mxu0 0.0
          %2585 = vmatprep.subr.mxu0 0.0
          %2586 = vmatpush1.msra.mxu0 %v1926
          %2587 = vmatprep.subr.mxu0 0.0
          %2588 = vmatpush1.msra.mxu0 %v1925
          %2589 = vmatprep.subr.mxu0 0.0
          %2590 = vmatpush1.msra.mxu0 %v1924
          %2591 = vmatprep.subr.mxu0 0.0
          %2592 = vmatpush1.msra.mxu0 %v1923
          %2593 = vmatprep.subr.mxu0 0.0
          %2594 = vmatpush2.msra.mxu0 0.0
          %2595 = vmatprep.subr.mxu0 0.0
          %2596 = vmatpush2.msra.mxu0 0.0
          %2597 = vmatprep.subr.mxu0 0.0
          %2598 = vmatpush2.msra.mxu0 0.0
          %2599 = vmatprep.subr.mxu0 0.0
          %2600 = vmatpush2.msra.mxu0 0.0
          %2601 = vmatprep.subr.mxu0 0.0
          %2602 = vmatpush2.msra.mxu0 0.0
          %2603 = vmatprep.subr.mxu0 0.0
          %2604 = vmatpush2.msra.mxu0 0.0
          %2605 = vmatprep.subr.mxu0 0.0
          %2606 = vmatpush2.msra.mxu0 0.0
          %2607 = vmatprep.subr.mxu0 0.0
          %2608 = vmatpush2.msra.mxu0 0.0
          %2609 = vmatprep.subr.mxu0 0.0
          %2610 = vmatpush2.msra.mxu0 0.0
          %2611 = vmatprep.subr.mxu0 0.0
          %2612 = vmatpush2.msra.mxu0 0.0
          %2613 = vmatprep.subr.mxu0 0.0
          %2614 = vmatpush2.msra.mxu0 0.0
          %2615 = vmatprep.subr.mxu0 0.0
          %2616 = vmatpush2.msra.mxu0 0.0
          %2617 = vmatprep.subr.mxu0 0.0
          %2618 = vmatpush2.msra.mxu0 0.0
          %2619 = vmatprep.subr.mxu0 0.0
          %2620 = vmatpush2.msra.mxu0 0.0
          %2621 = vmatprep.subr.mxu0 0.0
          %2622 = vmatpush2.msra.mxu0 0.0
          %2623 = vmatprep.subr.mxu0 0.0
          %2624 = vmatpush2.msra.mxu0 0.0
          %2625 = vmatprep.mubr.f32.mxu0 0.0
          %2626 = vmatmul.mubr.f32.gmra.mxu0 %v2559
          %v2627 = vpop.f32.mrf.mxu0
          %v2628 = vadd.f32 %v2556, %v2627
          %v2629 = vpop.f32.mrf.mxu0
          %2630 = vdwg.mxu0
          %v2631 = vmax.f32 %v2628, 0.0
          %v2633 = vlaneseq
          %v2634 = vshrl.u32 %v2633, 7
          %v2635 = vsub.s32 0, %v2634
          %v2636 = vrot.slane %v1932, %v2635
          %v2639 = vsel %vm1434, %v2631, 0
          %2641 = vmatprep.subr.mxu0 0.0
          %2642 = vmatpush1.msra.mxu0 0.0
          %2643 = vmatprep.subr.mxu0 0.0
          %2644 = vmatpush1.msra.mxu0 0.0
          %2645 = vmatprep.subr.mxu0 0.0
          %2646 = vmatpush1.msra.mxu0 0.0
          %2647 = vmatprep.subr.mxu0 0.0
          %2648 = vmatpush1.msra.mxu0 0.0
          %2649 = vmatprep.subr.mxu0 0.0
          %2650 = vmatpush1.msra.mxu0 0.0
          %2651 = vmatprep.subr.mxu0 0.0
          %2652 = vmatpush1.msra.mxu0 0.0
          %2653 = vmatprep.subr.mxu0 0.0
          %2654 = vmatpush1.msra.mxu0 0.0
          %2655 = vmatprep.subr.mxu0 0.0
          %2656 = vmatpush1.msra.mxu0 0.0
          %2657 = vmatprep.subr.mxu0 0.0
          %2658 = vmatpush1.msra.mxu0 0.0
          %2659 = vmatprep.subr.mxu0 0.0
          %2660 = vmatpush1.msra.mxu0 0.0
          %2661 = vmatprep.subr.mxu0 0.0
          %2662 = vmatpush1.msra.mxu0 0.0
          %2663 = vmatprep.subr.mxu0 0.0
          %2664 = vmatpush1.msra.mxu0 0.0
          %2665 = vmatprep.subr.mxu0 0.0
          %2666 = vmatpush1.msra.mxu0 %v1931
          %2667 = vmatprep.subr.mxu0 0.0
          %2668 = vmatpush1.msra.mxu0 %v1930
          %2669 = vmatprep.subr.mxu0 0.0
          %2670 = vmatpush1.msra.mxu0 %v1929
          %2671 = vmatprep.subr.mxu0 0.0
          %2672 = vmatpush1.msra.mxu0 %v1928
          %2673 = vmatprep.subr.mxu0 0.0
          %2674 = vmatpush2.msra.mxu0 0.0
          %2675 = vmatprep.subr.mxu0 0.0
          %2676 = vmatpush2.msra.mxu0 0.0
          %2677 = vmatprep.subr.mxu0 0.0
          %2678 = vmatpush2.msra.mxu0 0.0
          %2679 = vmatprep.subr.mxu0 0.0
          %2680 = vmatpush2.msra.mxu0 0.0
          %2681 = vmatprep.subr.mxu0 0.0
          %2682 = vmatpush2.msra.mxu0 0.0
          %2683 = vmatprep.subr.mxu0 0.0
          %2684 = vmatpush2.msra.mxu0 0.0
          %2685 = vmatprep.subr.mxu0 0.0
          %2686 = vmatpush2.msra.mxu0 0.0
          %2687 = vmatprep.subr.mxu0 0.0
          %2688 = vmatpush2.msra.mxu0 0.0
          %2689 = vmatprep.subr.mxu0 0.0
          %2690 = vmatpush2.msra.mxu0 0.0
          %2691 = vmatprep.subr.mxu0 0.0
          %2692 = vmatpush2.msra.mxu0 0.0
          %2693 = vmatprep.subr.mxu0 0.0
          %2694 = vmatpush2.msra.mxu0 0.0
          %2695 = vmatprep.subr.mxu0 0.0
          %2696 = vmatpush2.msra.mxu0 0.0
          %2697 = vmatprep.subr.mxu0 0.0
          %2698 = vmatpush2.msra.mxu0 0.0
          %2699 = vmatprep.subr.mxu0 0.0
          %2700 = vmatpush2.msra.mxu0 0.0
          %2701 = vmatprep.subr.mxu0 0.0
          %2702 = vmatpush2.msra.mxu0 0.0
          %2703 = vmatprep.subr.mxu0 0.0
          %2704 = vmatpush2.msra.mxu0 0.0
          %2705 = vmatprep.mubr.f32.mxu0 0.0
          %2706 = vmatmul.mubr.f32.gmra.mxu0 %v2639
          %v2707 = vpop.f32.mrf.mxu0
          %v2708 = vadd.f32 %v2636, %v2707
          %v2709 = vpop.f32.mrf.mxu0
          %2710 = vdwg.mxu0
          %v2712 = vlaneseq
          %v2713 = vshrl.u32 %v2712, 7
          %v2714 = vsub.s32 0, %v2713
          %v2715 = vrot.slane %v1937, %v2714
          %v2718 = vsel %vm1434, %v2441, 0
          %v2721 = vsel %vm1434, %v2550, 0
          %v2723 = vsel %vm1434, %v2548, 0
          %2725 = vmatprep.subr.mxu0 0.0
          %2726 = vmatpush1.msra.mxu0 0.0
          %2727 = vmatprep.subr.mxu0 0.0
          %2728 = vmatpush1.msra.mxu0 0.0
          %2729 = vmatprep.subr.mxu0 0.0
          %2730 = vmatpush1.msra.mxu0 0.0
          %2731 = vmatprep.subr.mxu0 0.0
          %2732 = vmatpush1.msra.mxu0 0.0
          %2733 = vmatprep.subr.mxu0 0.0
          %2734 = vmatpush1.msra.mxu0 0.0
          %2735 = vmatprep.subr.mxu0 0.0
          %2736 = vmatpush1.msra.mxu0 0.0
          %2737 = vmatprep.subr.mxu0 0.0
          %2738 = vmatpush1.msra.mxu0 0.0
          %2739 = vmatprep.subr.mxu0 0.0
          %2740 = vmatpush1.msra.mxu0 0.0
          %2741 = vmatprep.subr.mxu0 0.0
          %2742 = vmatpush1.msra.mxu0 0.0
          %2743 = vmatprep.subr.mxu0 0.0
          %2744 = vmatpush1.msra.mxu0 0.0
          %2745 = vmatprep.subr.mxu0 0.0
          %2746 = vmatpush1.msra.mxu0 0.0
          %2747 = vmatprep.subr.mxu0 0.0
          %2748 = vmatpush1.msra.mxu0 0.0
          %2749 = vmatprep.subr.mxu0 0.0
          %2750 = vmatpush1.msra.mxu0 %v1936
          %2751 = vmatprep.subr.mxu0 0.0
          %2752 = vmatpush1.msra.mxu0 %v1935
          %2753 = vmatprep.subr.mxu0 0.0
          %2754 = vmatpush1.msra.mxu0 %v1934
          %2755 = vmatprep.subr.mxu0 0.0
          %2756 = vmatpush1.msra.mxu0 %v1933
          %2757 = vmatprep.subr.mxu0 0.0
          %2758 = vmatpush2.msra.mxu0 0.0
          %2759 = vmatprep.subr.mxu0 0.0
          %2760 = vmatpush2.msra.mxu0 0.0
          %2761 = vmatprep.subr.mxu0 0.0
          %2762 = vmatpush2.msra.mxu0 0.0
          %2763 = vmatprep.subr.mxu0 0.0
          %2764 = vmatpush2.msra.mxu0 0.0
          %2765 = vmatprep.subr.mxu0 0.0
          %2766 = vmatpush2.msra.mxu0 0.0
          %2767 = vmatprep.subr.mxu0 0.0
          %2768 = vmatpush2.msra.mxu0 0.0
          %2769 = vmatprep.subr.mxu0 0.0
          %2770 = vmatpush2.msra.mxu0 0.0
          %2771 = vmatprep.subr.mxu0 0.0
          %2772 = vmatpush2.msra.mxu0 0.0
          %2773 = vmatprep.subr.mxu0 0.0
          %2774 = vmatpush2.msra.mxu0 0.0
          %2775 = vmatprep.subr.mxu0 0.0
          %2776 = vmatpush2.msra.mxu0 0.0
          %2777 = vmatprep.subr.mxu0 0.0
          %2778 = vmatpush2.msra.mxu0 0.0
          %2779 = vmatprep.subr.mxu0 0.0
          %2780 = vmatpush2.msra.mxu0 0.0
          %2781 = vmatprep.subr.mxu0 0.0
          %2782 = vmatpush2.msra.mxu0 0.0
          %2783 = vmatprep.subr.mxu0 0.0
          %2784 = vmatpush2.msra.mxu0 0.0
          %2785 = vmatprep.subr.mxu0 0.0
          %2786 = vmatpush2.msra.mxu0 0.0
          %2787 = vmatprep.subr.mxu0 0.0
          %2788 = vmatpush2.msra.mxu0 0.0
          %2789 = vmatprep.mubr.f32.mxu0 0.0
          %2790 = vmatmul.mubr.f32.gmra.mxu0 %v2718
          %v2791 = vpop.f32.mrf.mxu0
          %v2792 = vadd.f32 %v2715, %v2791
          %v2793 = vpop.f32.mrf.mxu0
          %2794 = vmatprep.mubr.f32.mxu0 0.0
          %2795 = vmatmul.mubr.f32.gmra.mxu0 %v2721
          %v2796 = vpop.f32.mrf.mxu0
          %v2797 = vadd.f32 %v2715, %v2796
          %v2798 = vpop.f32.mrf.mxu0
          %2799 = vmatprep.mubr.f32.mxu0 0.0
          %2800 = vmatmul.mubr.f32.gmra.mxu0 %v2723
          %v2801 = vpop.f32.mrf.mxu0
          %v2802 = vadd.f32 %v2715, %v2801
          %v2803 = vpop.f32.mrf.mxu0
          %2804 = vdwg.mxu0
          %v2805 = vmax.f32 %v2792, 0.0
          %v2806 = vmax.f32 %v2797, 0.0
          %v2807 = vmax.f32 %v2802, 0.0
          %v2809 = vlaneseq
          %v2810 = vshrl.u32 %v2809, 7
          %v2811 = vsub.s32 0, %v2810
          %v2812 = vrot.slane %v1942, %v2811
          %v2815 = vsel %vm1434, %v2805, 0
          %v2818 = vsel %vm1434, %v2806, 0
          %v2821 = vsel %vm1434, %v2807, 0
          %2823 = vmatprep.subr.mxu0 0.0
          %2824 = vmatpush1.msra.mxu0 0.0
          %2825 = vmatprep.subr.mxu0 0.0
          %2826 = vmatpush1.msra.mxu0 0.0
          %2827 = vmatprep.subr.mxu0 0.0
          %2828 = vmatpush1.msra.mxu0 0.0
          %2829 = vmatprep.subr.mxu0 0.0
          %2830 = vmatpush1.msra.mxu0 0.0
          %2831 = vmatprep.subr.mxu0 0.0
          %2832 = vmatpush1.msra.mxu0 0.0
          %2833 = vmatprep.subr.mxu0 0.0
          %2834 = vmatpush1.msra.mxu0 0.0
          %2835 = vmatprep.subr.mxu0 0.0
          %2836 = vmatpush1.msra.mxu0 0.0
          %2837 = vmatprep.subr.mxu0 0.0
          %2838 = vmatpush1.msra.mxu0 0.0
          %2839 = vmatprep.subr.mxu0 0.0
          %2840 = vmatpush1.msra.mxu0 0.0
          %2841 = vmatprep.subr.mxu0 0.0
          %2842 = vmatpush1.msra.mxu0 0.0
          %2843 = vmatprep.subr.mxu0 0.0
          %2844 = vmatpush1.msra.mxu0 0.0
          %2845 = vmatprep.subr.mxu0 0.0
          %2846 = vmatpush1.msra.mxu0 0.0
          %2847 = vmatprep.subr.mxu0 0.0
          %2848 = vmatpush1.msra.mxu0 %v1941
          %2849 = vmatprep.subr.mxu0 0.0
          %2850 = vmatpush1.msra.mxu0 %v1940
          %2851 = vmatprep.subr.mxu0 0.0
          %2852 = vmatpush1.msra.mxu0 %v1939
          %2853 = vmatprep.subr.mxu0 0.0
          %2854 = vmatpush1.msra.mxu0 %v1938
          %2855 = vmatprep.subr.mxu0 0.0
          %2856 = vmatpush2.msra.mxu0 0.0
          %2857 = vmatprep.subr.mxu0 0.0
          %2858 = vmatpush2.msra.mxu0 0.0
          %2859 = vmatprep.subr.mxu0 0.0
          %2860 = vmatpush2.msra.mxu0 0.0
          %2861 = vmatprep.subr.mxu0 0.0
          %2862 = vmatpush2.msra.mxu0 0.0
          %2863 = vmatprep.subr.mxu0 0.0
          %2864 = vmatpush2.msra.mxu0 0.0
          %2865 = vmatprep.subr.mxu0 0.0
          %2866 = vmatpush2.msra.mxu0 0.0
          %2867 = vmatprep.subr.mxu0 0.0
          %2868 = vmatpush2.msra.mxu0 0.0
          %2869 = vmatprep.subr.mxu0 0.0
          %2870 = vmatpush2.msra.mxu0 0.0
          %2871 = vmatprep.subr.mxu0 0.0
          %2872 = vmatpush2.msra.mxu0 0.0
          %2873 = vmatprep.subr.mxu0 0.0
          %2874 = vmatpush2.msra.mxu0 0.0
          %2875 = vmatprep.subr.mxu0 0.0
          %2876 = vmatpush2.msra.mxu0 0.0
          %2877 = vmatprep.subr.mxu0 0.0
          %2878 = vmatpush2.msra.mxu0 0.0
          %2879 = vmatprep.subr.mxu0 0.0
          %2880 = vmatpush2.msra.mxu0 0.0
          %2881 = vmatprep.subr.mxu0 0.0
          %2882 = vmatpush2.msra.mxu0 0.0
          %2883 = vmatprep.subr.mxu0 0.0
          %2884 = vmatpush2.msra.mxu0 0.0
          %2885 = vmatprep.subr.mxu0 0.0
          %2886 = vmatpush2.msra.mxu0 0.0
          %2887 = vmatprep.mubr.f32.mxu0 0.0
          %2888 = vmatmul.mubr.f32.gmra.mxu0 %v2815
          %v2889 = vpop.f32.mrf.mxu0
          %v2890 = vadd.f32 %v2812, %v2889
          %v2891 = vpop.f32.mrf.mxu0
          %2892 = vmatprep.mubr.f32.mxu0 0.0
          %2893 = vmatmul.mubr.f32.gmra.mxu0 %v2818
          %v2894 = vpop.f32.mrf.mxu0
          %v2895 = vadd.f32 %v2812, %v2894
          %v2896 = vpop.f32.mrf.mxu0
          %2897 = vmatprep.mubr.f32.mxu0 0.0
          %2898 = vmatmul.mubr.f32.gmra.mxu0 %v2821
          %v2899 = vpop.f32.mrf.mxu0
          %v2900 = vadd.f32 %v2812, %v2899
          %v2901 = vpop.f32.mrf.mxu0
          %2902 = vdwg.mxu0
          %v2903 = vsel %vm1352, %v2890, 0.0
          %2904 = vadd.xlane.f32.xlu0 %v2903
          %v2905 = vpop.xlane.xlu0 %2904
          %vm2906 = vcmask 122880
          %v2907 = vsel %vm2906, %v2895, 0.0
          %2908 = vadd.xlane.f32.xlu0 %v2907
          %v2909 = vpop.xlane.xlu0 %2908
          %v2910 = vrcp.pop 16.0
          %v2911 = vmul.f32 %v2905, %v2910
          %v2912 = vmul.f32 %v2909, %v2910
          %v2913 = vsel %vm1534, %v2912, 0.0
          %v2914 = vadd.f32 %v2911, %v2913
          %v2915 = vrot.slane %v2914, 4
          %v2916 = vadd.f32 %v2914, %v2915
          %v2917 = vrot.slane %v2916, 2
          %v2918 = vadd.f32 %v2916, %v2917
          %v2919 = vrot.slane %v2918, 1
          %v2920 = vadd.f32 %v2918, %v2919
          %v2921 = vmul.f32 %v2920, %v1445
          %vm2922 = vcmask 130049
          %v2923 = vsel %vm2922, %v2895, 0.0
          %2924 = vadd.xlane.f32.xlu0 %v2923
          %v2925 = vpop.xlane.xlu0 %2924
          %v2926 = vsel %vm1893, %v2900, 0.0
          %2927 = vadd.xlane.f32.xlu0 %v2926
          %v2928 = vpop.xlane.xlu0 %2927
          %v2929 = vmul.f32 %v2925, %v2910
          %v2930 = vmul.f32 %v2928, %v2910
          %vm2933 = vcmask 1046528
          %v2934 = vrot.slane %v2929, 1
          %v2935 = vrot.slane %v2930, 1
          %v2936 = vsel %vm2933, %v2934, %v2935
          %v2939 = vsel %vm1534, %v2935, 0.0
          %v2940 = vadd.f32 %v2936, %v2939
          %v2941 = vrot.slane %v2940, 4
          %v2942 = vadd.f32 %v2940, %v2941
          %v2943 = vrot.slane %v2942, 2
          %v2944 = vadd.f32 %v2942, %v2943
          %v2945 = vrot.slane %v2944, 1
          %v2946 = vadd.f32 %v2944, %v2945
          %v2947 = vmul.f32 %v2946, %v1445
          %v2948 = vsel %vm1534, %v2921, %v2947
          %v2949 = vmul.f32 %v2708, %v2708
          %v2950 = vsel %vm1893, %v2949, 0.0
          %2951 = vadd.xlane.f32.xlu0 %v2950
          %v2952 = vpop.xlane.xlu0 %2951
          %v2953 = vmax.f32 %v2952, 1e-24
          %v2954 = vrsqrt.pop %v2953
          %v2955 = vmul.f32 %v2708, %v2954
          %v2956 = vmul.f32 %v2890, %v2890
          %v2957 = vmul.f32 %v2895, %v2895
          %v2958 = vmul.f32 %v2900, %v2900
          %v2959 = vsel %vm1352, %v2956, 0.0
          %2960 = vadd.xlane.f32.xlu0 %v2959
          %v2961 = vpop.xlane.xlu0 %2960
          %v2962 = vsel %vm1352, %v2957, 0.0
          %2963 = vadd.xlane.f32.xlu0 %v2962
          %v2964 = vpop.xlane.xlu0 %2963
          %v2965 = vsel %vm1893, %v2958, 0.0
          %2966 = vadd.xlane.f32.xlu0 %v2965
          %v2967 = vpop.xlane.xlu0 %2966
          %v2968 = vmax.f32 %v2961, 1e-24
          %v2969 = vmax.f32 %v2964, 1e-24
          %v2970 = vmax.f32 %v2967, 1e-24
          %v2971 = vrsqrt.pop %v2968
          %v2972 = vrsqrt.pop %v2969
          %v2973 = vrsqrt.pop %v2970
          %v2974 = vmul.f32 %v2890, %v2971
          %v2975 = vmul.f32 %v2895, %v2972
          %v2976 = vmul.f32 %v2900, %v2973
          %v2977 = vmul.f32 %v2948, %v2948
          %v2978 = vmax.f32 %v2977, 1e-24
          %v2979 = vrsqrt.pop %v2978
          %v2980 = vmul.f32 %v2948, %v2979
          %v2981 = vmul.f32 %v1899, %v2955
          %v2982 = vsel %vm1893, %v2981, 0.0
          %2983 = vadd.xlane.f32.xlu0 %v2982
          %v2984 = vpop.xlane.xlu0 %2983
          %v2985 = vmul.f32 %v2984, 14.285714
          %v2987 = vsel %vm1352, %v1918, 0
          %v2990 = vsel %vm1352, %v1919, 0
          %v2993 = vsel %vm1352, %v2974, 0
          %v2996 = vsel %vm1352, %v2975, 0
          %2998 = vmatprep.subr.mxu0 0.0
          %2999 = vmatpush1.xpose.msra.mxu0 0.0
          %3000 = vmatprep.subr.mxu0 0.0
          %3001 = vmatpush1.xpose.msra.mxu0 0.0
          %3002 = vmatprep.subr.mxu0 0.0
          %3003 = vmatpush1.xpose.msra.mxu0 0.0
          %3004 = vmatprep.subr.mxu0 0.0
          %3005 = vmatpush1.xpose.msra.mxu0 0.0
          %3006 = vmatprep.subr.mxu0 0.0
          %3007 = vmatpush1.xpose.msra.mxu0 0.0
          %3008 = vmatprep.subr.mxu0 0.0
          %3009 = vmatpush1.xpose.msra.mxu0 0.0
          %3010 = vmatprep.subr.mxu0 0.0
          %3011 = vmatpush1.xpose.msra.mxu0 0.0
          %3012 = vmatprep.subr.mxu0 0.0
          %3013 = vmatpush1.xpose.msra.mxu0 0.0
          %3014 = vmatprep.subr.mxu0 0.0
          %3015 = vmatpush1.xpose.msra.mxu0 0.0
          %3016 = vmatprep.subr.mxu0 0.0
          %3017 = vmatpush1.xpose.msra.mxu0 0.0
          %3018 = vmatprep.subr.mxu0 0.0
          %3019 = vmatpush1.xpose.msra.mxu0 0.0
          %3020 = vmatprep.subr.mxu0 0.0
          %3021 = vmatpush1.xpose.msra.mxu0 0.0
          %3022 = vmatprep.subr.mxu0 0.0
          %3023 = vmatpush1.xpose.msra.mxu0 0.0
          %3024 = vmatprep.subr.mxu0 0.0
          %3025 = vmatpush1.xpose.msra.mxu0 0.0
          %3026 = vmatprep.subr.mxu0 0.0
          %3027 = vmatpush1.xpose.msra.mxu0 %v2996
          %3028 = vmatprep.subr.mxu0 0.0
          %3029 = vmatpush1.xpose.msra.mxu0 %v2993
          %3030 = vmatprep.subr.mxu0 0.0
          %3031 = vmatpush2.xpose.msra.mxu0 0.0
          %3032 = vmatprep.subr.mxu0 0.0
          %3033 = vmatpush2.xpose.msra.mxu0 0.0
          %3034 = vmatprep.subr.mxu0 0.0
          %3035 = vmatpush2.xpose.msra.mxu0 0.0
          %3036 = vmatprep.subr.mxu0 0.0
          %3037 = vmatpush2.xpose.msra.mxu0 0.0
          %3038 = vmatprep.subr.mxu0 0.0
          %3039 = vmatpush2.xpose.msra.mxu0 0.0
          %3040 = vmatprep.subr.mxu0 0.0
          %3041 = vmatpush2.xpose.msra.mxu0 0.0
          %3042 = vmatprep.subr.mxu0 0.0
          %3043 = vmatpush2.xpose.msra.mxu0 0.0
          %3044 = vmatprep.subr.mxu0 0.0
          %3045 = vmatpush2.xpose.msra.mxu0 0.0
          %3046 = vmatprep.subr.mxu0 0.0
          %3047 = vmatpush2.xpose.msra.mxu0 0.0
          %3048 = vmatprep.subr.mxu0 0.0
          %3049 = vmatpush2.xpose.msra.mxu0 0.0
          %3050 = vmatprep.subr.mxu0 0.0
          %3051 = vmatpush2.xpose.msra.mxu0 0.0
          %3052 = vmatprep.subr.mxu0 0.0
          %3053 = vmatpush2.xpose.msra.mxu0 0.0
          %3054 = vmatprep.subr.mxu0 0.0
          %3055 = vmatpush2.xpose.msra.mxu0 0.0
          %3056 = vmatprep.subr.mxu0 0.0
          %3057 = vmatpush2.xpose.msra.mxu0 0.0
          %3058 = vmatprep.subr.mxu0 0.0
          %3059 = vmatpush2.xpose.msra.mxu0 0.0
          %3060 = vmatprep.subr.mxu0 0.0
          %3061 = vmatpush2.xpose.msra.mxu0 0.0
          %3062 = vmatprep.mubr.f32.mxu0 0.0
          %3063 = vmatmul.mubr.f32.gmra.mxu0 %v2987
          %v3064 = vpop.f32.mrf.mxu0
          %v3065 = vadd.f32 0.0, %v3064
          %v3066 = vpop.f32.mrf.mxu0
          %3067 = vmatprep.mubr.f32.mxu0 0.0
          %3068 = vmatmul.mubr.f32.gmra.mxu0 %v2990
          %v3069 = vpop.f32.mrf.mxu0
          %v3070 = vadd.f32 0.0, %v3069
          %v3071 = vpop.f32.mrf.mxu0
          %3072 = vdwg.mxu0
          %vm3073 = vcmask 72704
          %v3074 = vsel %vm3073, %v3065, -inf
          %3075 = vmax.xlane.f32.xlu0 %v3074
          %v3076 = vpop.xlane.xlu0 %3075
          %vm3077 = vcmask 65536
          %v3078 = vsel %vm3077, %v3070, -inf
          %3079 = vmax.xlane.f32.xlu0 %v3078
          %v3080 = vpop.xlane.xlu0 %3079
          %v3082 = vrot.slane %v1919, 1
          %v3083 = vrot.slane %v1920, 1
          %v3084 = vsel %vm2933, %v3082, %v3083
          %v3086 = vrot.slane %v2975, 1
          %v3087 = vrot.slane %v2976, 1
          %v3088 = vsel %vm2933, %v3086, %v3087
          %v3089 = vsel %vm1352, %v3084, 0
          %v3091 = vsel %vm1352, %v3083, 0
          %v3093 = vsel %vm1352, %v3088, 0
          %v3095 = vsel %vm1352, %v3087, 0
          %3097 = vmatprep.subr.mxu0 0.0
          %3098 = vmatpush1.xpose.msra.mxu0 0.0
          %3099 = vmatprep.subr.mxu0 0.0
          %3100 = vmatpush1.xpose.msra.mxu0 0.0
          %3101 = vmatprep.subr.mxu0 0.0
          %3102 = vmatpush1.xpose.msra.mxu0 0.0
          %3103 = vmatprep.subr.mxu0 0.0
          %3104 = vmatpush1.xpose.msra.mxu0 0.0
          %3105 = vmatprep.subr.mxu0 0.0
          %3106 = vmatpush1.xpose.msra.mxu0 0.0
          %3107 = vmatprep.subr.mxu0 0.0
          %3108 = vmatpush1.xpose.msra.mxu0 0.0
          %3109 = vmatprep.subr.mxu0 0.0
          %3110 = vmatpush1.xpose.msra.mxu0 0.0
          %3111 = vmatprep.subr.mxu0 0.0
          %3112 = vmatpush1.xpose.msra.mxu0 0.0
          %3113 = vmatprep.subr.mxu0 0.0
          %3114 = vmatpush1.xpose.msra.mxu0 0.0
          %3115 = vmatprep.subr.mxu0 0.0
          %3116 = vmatpush1.xpose.msra.mxu0 0.0
          %3117 = vmatprep.subr.mxu0 0.0
          %3118 = vmatpush1.xpose.msra.mxu0 0.0
          %3119 = vmatprep.subr.mxu0 0.0
          %3120 = vmatpush1.xpose.msra.mxu0 0.0
          %3121 = vmatprep.subr.mxu0 0.0
          %3122 = vmatpush1.xpose.msra.mxu0 0.0
          %3123 = vmatprep.subr.mxu0 0.0
          %3124 = vmatpush1.xpose.msra.mxu0 0.0
          %3125 = vmatprep.subr.mxu0 0.0
          %3126 = vmatpush1.xpose.msra.mxu0 %v3095
          %3127 = vmatprep.subr.mxu0 0.0
          %3128 = vmatpush1.xpose.msra.mxu0 %v3093
          %3129 = vmatprep.subr.mxu0 0.0
          %3130 = vmatpush2.xpose.msra.mxu0 0.0
          %3131 = vmatprep.subr.mxu0 0.0
          %3132 = vmatpush2.xpose.msra.mxu0 0.0
          %3133 = vmatprep.subr.mxu0 0.0
          %3134 = vmatpush2.xpose.msra.mxu0 0.0
          %3135 = vmatprep.subr.mxu0 0.0
          %3136 = vmatpush2.xpose.msra.mxu0 0.0
          %3137 = vmatprep.subr.mxu0 0.0
          %3138 = vmatpush2.xpose.msra.mxu0 0.0
          %3139 = vmatprep.subr.mxu0 0.0
          %3140 = vmatpush2.xpose.msra.mxu0 0.0
          %3141 = vmatprep.subr.mxu0 0.0
          %3142 = vmatpush2.xpose.msra.mxu0 0.0
          %3143 = vmatprep.subr.mxu0 0.0
          %3144 = vmatpush2.xpose.msra.mxu0 0.0
          %3145 = vmatprep.subr.mxu0 0.0
          %3146 = vmatpush2.xpose.msra.mxu0 0.0
          %3147 = vmatprep.subr.mxu0 0.0
          %3148 = vmatpush2.xpose.msra.mxu0 0.0
          %3149 = vmatprep.subr.mxu0 0.0
          %3150 = vmatpush2.xpose.msra.mxu0 0.0
          %3151 = vmatprep.subr.mxu0 0.0
          %3152 = vmatpush2.xpose.msra.mxu0 0.0
          %3153 = vmatprep.subr.mxu0 0.0
          %3154 = vmatpush2.xpose.msra.mxu0 0.0
          %3155 = vmatprep.subr.mxu0 0.0
          %3156 = vmatpush2.xpose.msra.mxu0 0.0
          %3157 = vmatprep.subr.mxu0 0.0
          %3158 = vmatpush2.xpose.msra.mxu0 0.0
          %3159 = vmatprep.subr.mxu0 0.0
          %3160 = vmatpush2.xpose.msra.mxu0 0.0
          %3161 = vmatprep.mubr.f32.mxu0 0.0
          %3162 = vmatmul.mubr.f32.gmra.mxu0 %v3089
          %v3163 = vpop.f32.mrf.mxu0
          %v3164 = vadd.f32 0.0, %v3163
          %v3165 = vpop.f32.mrf.mxu0
          %3166 = vmatprep.mubr.f32.mxu0 0.0
          %3167 = vmatmul.mubr.f32.gmra.mxu0 %v3091
          %v3168 = vpop.f32.mrf.mxu0
          %v3169 = vadd.f32 0.0, %v3168
          %v3170 = vpop.f32.mrf.mxu0
          %3171 = vdwg.mxu0
          %v3172 = vsel %vm3073, %v3164, -inf
          %3173 = vmax.xlane.f32.xlu0 %v3172
          %v3174 = vpop.xlane.xlu0 %3173
          %v3175 = vsel %vm3077, %v3169, -inf
          %3176 = vmax.xlane.f32.xlu0 %v3175
          %v3177 = vpop.xlane.xlu0 %3176
          %v3180 = vrot.slane %v3174, 7
          %v3181 = vrot.slane %v3177, 7
          %v3182 = vsel %vm1534, %v3180, %v3181
          %v3185 = vsel %vm1534, %v3080, %v3180
          %v3186 = vmul.f32 %v3076, 14.285714
          %v3187 = vmul.f32 %v3185, 14.285714
          %v3188 = vmul.f32 %v3182, 14.285714
          %3189 = vst.msk [vmem:[#allocation2] sm:$0x3] %vm1893, %v1899
          %3190 = vst.msk [vmem:[#allocation3] sm:$0xff] %vm1352, %v1918
          %3191 = vst.msk [vmem:[#allocation3 + $0x8] sm:$0xff] %vm1352, %v1919
          %3192 = vst.msk [vmem:[#allocation3 + $0x10] sm:$0x3] %vm1893, %v1920
          %3193 = vst.msk [vmem:[#allocation4] sm:$0x3] %vm1893, %v2955
          %vm3194 = vcmask 1024
          %3195 = vst.msk [vmem:[#allocation5] sm:$0x3] %vm3194, %v2980
          %3196 = vst.msk [vmem:[#allocation6] sm:$0x3] %vm3194, %v2985
          %vm3197 = vcmask 7168
          %3198 = vst.msk [vmem:[#allocation7] sm:$0xff] %vm3197, %v3186
          %3199 = vst.msk [vmem:[#allocation7 + $0x8] sm:$0xff] %vm3197, %v3187
          %3200 = vst.msk [vmem:[#allocation7 + $0x10] sm:$0x3] %vm3194, %v3188
          %3201 = vst.msk [vmem:[#allocation8] sm:$0x3] %vm3194, %v2985
          %3202 = vst.msk [vmem:[#allocation9] sm:$0x3] %vm3194, 1.0
          %3203 = vst.msk [vmem:[#allocation10] sm:$0xff] %vm3197, %v3186
          %3204 = vst.msk [vmem:[#allocation10 + $0x8] sm:$0xff] %vm3197, %v3187
          %3205 = vst.msk [vmem:[#allocation10 + $0x10] sm:$0x3] %vm3194, %v3188
          %3206 = vst.msk [vmem:[#allocation11] sm:$0xff] %vm3197, 1.0
          %3207 = vst.msk [vmem:[#allocation11 + $0x8] sm:$0xff] %vm3197, 1.0
          %3208 = vst.msk [vmem:[#allocation11 + $0x10] sm:$0x3] %vm3194, 1.0
        $region206: #{densecl_forward.1} parent=193 // pred_fallthru
          _
        %v3209 = vld [vmem:[#allocation2] sm:$0x3]
        %v3210 = vpack.c.bf16 %v3209, %v3209
        %v3211 = vld [vmem:[%s816] sm:$0xf]
        %v3212 = vld [vmem:[%s816 + $0x4] sm:$0xf]
        %v3215 = vunpack.c.l.b16 %v3211
        %v3216 = vunpack.c.l.b16 %v3212
        %v3217 = vpack.c.b16 %v3216, %v3215
        %vm3219 = vcmask 130048
        %v3221 = vsel %vm3219, %v3210, 0
        %3223 = vmatprep.subr.bf16.mxu0 0
        %3224 = vmatpush1.bf16.msra.mxu0 0
        %3225 = vmatprep.subr.bf16.mxu0 0
        %3226 = vmatpush1.bf16.msra.mxu0 0
        %3227 = vmatprep.subr.bf16.mxu0 0
        %3228 = vmatpush1.bf16.msra.mxu0 0
        %3229 = vmatprep.subr.bf16.mxu0 0
        %3230 = vmatpush1.bf16.msra.mxu0 0
        %3231 = vmatprep.subr.bf16.mxu0 0
        %3232 = vmatpush1.bf16.msra.mxu0 0
        %3233 = vmatprep.subr.bf16.mxu0 0
        %3234 = vmatpush1.bf16.msra.mxu0 0
        %3235 = vmatprep.subr.bf16.mxu0 0
        %3236 = vmatpush1.bf16.msra.mxu0 0
        %3237 = vmatprep.subr.bf16.mxu0 0
        %3238 = vmatpush1.bf16.msra.mxu0 %v3217
        %3239 = vmatprep.subr.bf16.mxu0 0
        %3240 = vmatpush2.bf16.msra.mxu0 0
        %3241 = vmatprep.subr.bf16.mxu0 0
        %3242 = vmatpush2.bf16.msra.mxu0 0
        %3243 = vmatprep.subr.bf16.mxu0 0
        %3244 = vmatpush2.bf16.msra.mxu0 0
        %3245 = vmatprep.subr.bf16.mxu0 0
        %3246 = vmatpush2.bf16.msra.mxu0 0
        %3247 = vmatprep.subr.bf16.mxu0 0
        %3248 = vmatpush2.bf16.msra.mxu0 0
        %3249 = vmatprep.subr.bf16.mxu0 0
        %3250 = vmatpush2.bf16.msra.mxu0 0
        %3251 = vmatprep.subr.bf16.mxu0 0
        %3252 = vmatpush2.bf16.msra.mxu0 0
        %3253 = vmatprep.subr.bf16.mxu0 0
        %3254 = vmatpush2.bf16.msra.mxu0 0
        %3255 = vmatprep.mubr.bf16.mxu0 0
        %3256 = vmatmul.mubr.bf16.gmra.mxu0 %v3221
        %v3257 = vpop.f32.mrf.mxu0
        %v3258 = vadd.f32 0.0, %v3257
        %v3259 = vpop.f32.mrf.mxu0
        %v3260 = vpop.f32.mrf.mxu0
        %v3261 = vpop.f32.mrf.mxu0
        %3262 = vdwg.mxu0
        %v3263 = vmul.f32 %v3258, 14.285714
        %v3264 = vld [vmem:[#allocation8] sm:$0x3]
        %vm3265 = vcmask 1041408
        %v3266 = vsel %vm3265, %v3263, -inf
        %3267 = vmax.xlane.f32.xlu0 %v3266
        %v3268 = vpop.xlane.xlu0 %3267
        %v3269 = vmax.f32 %v3264, %v3268
        %v3270 = vld [vmem:[#allocation9] sm:$0x3]
        %v3271 = vsub.f32 %v3264, %v3269
        %v3272 = vmul.f32 %v3271, 1.442695
        %v3273 = vpow.pop %v3272
        %v3274 = vmul.f32 %v3270, %v3273
        %3276 = vset.pattern.permute.xlu0 0
        %3277 = vperm.xlu0 %3276, %v3269
        %v3278 = vpop.permute.xlu0 %3277
        %v3280 = vsub.f32 %v3263, %v3278
        %v3281 = vmul.f32 %v3280, 1.442695
        %v3282 = vpow.pop %v3281
        %v3283 = vsel %vm3265, %v3282, 0.0
        %3284 = vadd.xlane.f32.xlu0 %v3283
        %v3285 = vpop.xlane.xlu0 %3284
        %v3286 = vadd.f32 %v3274, %v3285
        %vm3287 = vcmask 1024
        %3288 = vst.msk [vmem:[#allocation9] sm:$0x3] %vm3287, %v3286
        %3289 = vst.msk [vmem:[#allocation8] sm:$0x3] %vm3287, %v3269
        %v3290 = vld [vmem:[#allocation3] sm:$0xff]
        %v3291 = vld [vmem:[#allocation3 + $0x8] sm:$0xff]
        %v3292 = vld [vmem:[#allocation3 + $0x10] sm:$0x3]
        %v3293 = vpack.c.bf16 %v3291, %v3290
        %v3294 = vpack.c.bf16 %v3292, %v3292
        %v3295 = vld [vmem:[%s823] sm:$0xf]
        %v3296 = vld [vmem:[%s823 + $0x4] sm:$0xf]
        %v3299 = vunpack.c.l.b16 %v3295
        %v3300 = vunpack.c.l.b16 %v3296
        %v3301 = vpack.c.b16 %v3300, %v3299
        %v3304 = vsel %vm3219, %v3293, 0
        %v3307 = vsel %vm3219, %v3294, 0
        %3309 = vmatprep.subr.bf16.mxu0 0
        %3310 = vmatpush1.bf16.msra.mxu0 0
        %3311 = vmatprep.subr.bf16.mxu0 0
        %3312 = vmatpush1.bf16.msra.mxu0 0
        %3313 = vmatprep.subr.bf16.mxu0 0
        %3314 = vmatpush1.bf16.msra.mxu0 0
        %3315 = vmatprep.subr.bf16.mxu0 0
        %3316 = vmatpush1.bf16.msra.mxu0 0
        %3317 = vmatprep.subr.bf16.mxu0 0
        %3318 = vmatpush1.bf16.msra.mxu0 0
        %3319 = vmatprep.subr.bf16.mxu0 0
        %3320 = vmatpush1.bf16.msra.mxu0 0
        %3321 = vmatprep.subr.bf16.mxu0 0
        %3322 = vmatpush1.bf16.msra.mxu0 0
        %3323 = vmatprep.subr.bf16.mxu0 0
        %3324 = vmatpush1.bf16.msra.mxu0 %v3301
        %3325 = vmatprep.subr.bf16.mxu0 0
        %3326 = vmatpush2.bf16.msra.mxu0 0
        %3327 = vmatprep.subr.bf16.mxu0 0
        %3328 = vmatpush2.bf16.msra.mxu0 0
        %3329 = vmatprep.subr.bf16.mxu0 0
        %3330 = vmatpush2.bf16.msra.mxu0 0
        %3331 = vmatprep.subr.bf16.mxu0 0
        %3332 = vmatpush2.bf16.msra.mxu0 0
        %3333 = vmatprep.subr.bf16.mxu0 0
        %3334 = vmatpush2.bf16.msra.mxu0 0
        %3335 = vmatprep.subr.bf16.mxu0 0
        %3336 = vmatpush2.bf16.msra.mxu0 0
        %3337 = vmatprep.subr.bf16.mxu0 0
        %3338 = vmatpush2.bf16.msra.mxu0 0
        %3339 = vmatprep.subr.bf16.mxu0 0
        %3340 = vmatpush2.bf16.msra.mxu0 0
        %3341 = vmatprep.mubr.bf16.mxu0 0
        %3342 = vmatmul.mubr.bf16.gmra.mxu0 %v3304
        %v3343 = vpop.f32.mrf.mxu0
        %v3344 = vadd.f32 0.0, %v3343
        %v3345 = vpop.f32.mrf.mxu0
        %v3346 = vpop.f32.mrf.mxu0
        %v3347 = vadd.f32 0.0, %v3346
        %v3348 = vpop.f32.mrf.mxu0
        %3349 = vmatprep.mubr.bf16.mxu0 0
        %3350 = vmatmul.mubr.bf16.gmra.mxu0 %v3307
        %v3351 = vpop.f32.mrf.mxu0
        %v3352 = vadd.f32 0.0, %v3351
        %v3353 = vpop.f32.mrf.mxu0
        %v3354 = vpop.f32.mrf.mxu0
        %v3355 = vpop.f32.mrf.mxu0
        %3356 = vdwg.mxu0
        %v3357 = vmul.f32 %v3344, 14.285714
        %v3358 = vmul.f32 %v3347, 14.285714
        %v3359 = vmul.f32 %v3352, 14.285714
        %v3360 = vld [vmem:[#allocation10] sm:$0xff]
        %v3361 = vld [vmem:[#allocation10 + $0x8] sm:$0xff]
        %v3362 = vld [vmem:[#allocation10 + $0x10] sm:$0x3]
        %3363 = vmax.xlane.f32.xlu0 %v3357
        %v3364 = vpop.xlane.xlu0 %3363
        %3365 = vmax.xlane.f32.xlu0 %v3358
        %v3366 = vpop.xlane.xlu0 %3365
        %v3367 = vsel %vm3265, %v3359, -inf
        %3368 = vmax.xlane.f32.xlu0 %v3367
        %v3369 = vpop.xlane.xlu0 %3368
        %v3370 = vmax.f32 %v3360, %v3364
        %v3371 = vmax.f32 %v3361, %v3366
        %v3372 = vmax.f32 %v3362, %v3369
        %v3373 = vld [vmem:[#allocation11] sm:$0xff]
        %v3374 = vld [vmem:[#allocation11 + $0x8] sm:$0xff]
        %v3375 = vld [vmem:[#allocation11 + $0x10] sm:$0x3]
        %v3376 = vsub.f32 %v3360, %v3370
        %v3377 = vsub.f32 %v3361, %v3371
        %v3378 = vsub.f32 %v3362, %v3372
        %v3379 = vmul.f32 %v3376, 1.442695
        %v3380 = vpow.pop %v3379
        %v3381 = vmul.f32 %v3377, 1.442695
        %v3382 = vpow.pop %v3381
        %v3383 = vmul.f32 %v3378, 1.442695
        %v3384 = vpow.pop %v3383
        %v3385 = vmul.f32 %v3373, %v3380
        %v3386 = vmul.f32 %v3374, %v3382
        %v3387 = vmul.f32 %v3375, %v3384
        %3389 = vset.pattern.permute.xlu0 0
        %3390 = vperm.xlu0 %3389, %v3370
        %v3391 = vpop.permute.xlu0 %3390
        %3394 = vset.pattern.permute.xlu0 0
        %3395 = vperm.xlu0 %3394, %v3371
        %v3396 = vpop.permute.xlu0 %3395
        %3399 = vset.pattern.permute.xlu0 0
        %3400 = vperm.xlu0 %3399, %v3372
        %v3401 = vpop.permute.xlu0 %3400
        %v3403 = vsub.f32 %v3357, %v3391
        %v3404 = vsub.f32 %v3358, %v3396
        %v3405 = vsub.f32 %v3359, %v3401
        %v3406 = vmul.f32 %v3403, 1.442695
        %v3407 = vpow.pop %v3406
        %v3408 = vmul.f32 %v3404, 1.442695
        %v3409 = vpow.pop %v3408
        %v3410 = vmul.f32 %v3405, 1.442695
        %v3411 = vpow.pop %v3410
        %3412 = vadd.xlane.f32.xlu0 %v3407
        %v3413 = vpop.xlane.xlu0 %3412
        %3414 = vadd.xlane.f32.xlu0 %v3409
        %v3415 = vpop.xlane.xlu0 %3414
        %v3416 = vsel %vm3265, %v3411, 0.0
        %3417 = vadd.xlane.f32.xlu0 %v3416
        %v3418 = vpop.xlane.xlu0 %3417
        %v3419 = vadd.f32 %v3385, %v3413
        %v3420 = vadd.f32 %v3386, %v3415
        %v3421 = vadd.f32 %v3387, %v3418
        %vm3422 = vcmask 7168
        %3423 = vst.msk [vmem:[#allocation11] sm:$0xff] %vm3422, %v3419
        %3424 = vst.msk [vmem:[#allocation11 + $0x8] sm:$0xff] %vm3422, %v3420
        %3425 = vst.msk [vmem:[#allocation11 + $0x10] sm:$0x3] %vm3287, %v3421
        %3426 = vst.msk [vmem:[#allocation10] sm:$0xff] %vm3422, %v3370
        %3427 = vst.msk [vmem:[#allocation10 + $0x8] sm:$0xff] %vm3422, %v3371
        %3428 = vst.msk [vmem:[#allocation10 + $0x10] sm:$0x3] %vm3287, %v3372
        %p3429 = scmp.eq.s32.totalorder %s38, 3
        // Predicated region
        $region207: #{densecl_forward.1} parent=193 // pred_check
          %p3430 = pneg %p3429
        $region208: #{densecl_forward.1} parent=193 // pred_check_branch
          %3432 = sbr.rel (%p3430) target = $region210
        $region209: #{densecl_forward.1} parent=193 // pred_region
          %v3433 = vld [vmem:[#allocation8] sm:$0x3]
          %v3434 = vld [vmem:[#allocation9] sm:$0x3]
          %v3435 = vlog2.pop %v3434
          %v3436 = vmul.f32 %v3435, 0.6931472
          %v3437 = vadd.f32 %v3433, %v3436
          %v3438 = vld [vmem:[#allocation6] sm:$0x3]
          %v3439 = vsub.f32 %v3437, %v3438
          %v3440 = vsel %vm3287, %v3439, 0.0
          %v3441 = vrot.slane %v3440, 4
          %v3442 = vadd.f32 %v3440, %v3441
          %v3443 = vrot.slane %v3442, 2
          %v3444 = vadd.f32 %v3442, %v3443
          %v3445 = vrot.slane %v3444, 1
          %v3446 = vadd.f32 %v3444, %v3445
          %v3447 = vmul.f32 %v3446, 0.5
          %v3448 = vld [vmem:[#allocation10] sm:$0xff]
          %v3449 = vld [vmem:[#allocation10 + $0x8] sm:$0xff]
          %v3450 = vld [vmem:[#allocation10 + $0x10] sm:$0x3]
          %v3451 = vld [vmem:[#allocation11] sm:$0xff]
          %v3452 = vld [vmem:[#allocation11 + $0x8] sm:$0xff]
          %v3453 = vld [vmem:[#allocation11 + $0x10] sm:$0x3]
          %v3454 = vlog2.pop %v3451
          %v3455 = vmul.f32 %v3454, 0.6931472
          %v3456 = vlog2.pop %v3452
          %v3457 = vmul.f32 %v3456, 0.6931472
          %v3458 = vlog2.pop %v3453
          %v3459 = vmul.f32 %v3458, 0.6931472
          %v3460 = vadd.f32 %v3448, %v3455
          %v3461 = vadd.f32 %v3449, %v3457
          %v3462 = vadd.f32 %v3450, %v3459
          %v3463 = vld [vmem:[#allocation7] sm:$0xff]
          %v3464 = vld [vmem:[#allocation7 + $0x8] sm:$0xff]
          %v3465 = vld [vmem:[#allocation7 + $0x10] sm:$0x3]
          %v3466 = vsub.f32 %v3460, %v3463
          %v3467 = vsub.f32 %v3461, %v3464
          %v3468 = vsub.f32 %v3462, %v3465
          %v3469 = vsel %vm3422, %v3466, 0.0
          %v3470 = vsel %vm3422, %v3467, 0.0
          %v3471 = vadd.f32 %v3469, %v3470
          %v3472 = vsel %vm3287, %v3468, 0.0
          %v3473 = vadd.f32 %v3471, %v3472
          %v3474 = vrot.slane %v3473, 4
          %v3475 = vadd.f32 %v3473, %v3474
          %v3476 = vrot.slane %v3475, 2
          %v3477 = vadd.f32 %v3475, %v3476
          %v3478 = vrot.slane %v3477, 1
          %v3479 = vadd.f32 %v3477, %v3478
          %v3480 = vmul.f32 %v3479, 0.055555556
          %v3481 = vmul.f32 %v3447, 0.5
          %v3482 = vmul.f32 %v3480, 0.5
          %v3483 = vadd.f32 %v3481, %v3482
          %v3484 = vlaneseq
          %v3485 = vand.u32 %v3484, 127
          %vm3486 = vcmp.eq.s32.totalorder %v3485, 0
          %3488 = vset.pattern.permute.xlu0 0
          %3489 = vperm.xlu0 %3488, %v3483
          %v3490 = vpop.permute.xlu0 %3489
          %v3492 = vsel %vm3486, %v3490, 0.0
          %vm3493 = vcmp.eq.s32.totalorder %v3485, 1
          %3495 = vset.pattern.permute.xlu0 0
          %3496 = vperm.xlu0 %3495, %v3447
          %v3497 = vpop.permute.xlu0 %3496
          %v3499 = vsel %vm3493, %v3497, 0.0
          %v3500 = vadd.f32 %v3492, %v3499
          %vm3501 = vcmp.eq.s32.totalorder %v3485, 2
          %3503 = vset.pattern.permute.xlu0 0
          %3504 = vperm.xlu0 %3503, %v3480
          %v3505 = vpop.permute.xlu0 %3504
          %v3507 = vsel %vm3501, %v3505, 0.0
          %v3508 = vadd.f32 %v3500, %v3507
          %3509 = vst [vmem:[%s25] sm:$0x1] %v3508
          %v3510 = vlaneseq
          %v3511 = vshrl.u32 %v3510, 7
          %v3512 = vadd.s32 %v3511, 8
          %vm3513 = vcmp.eq.s32.totalorder %v3511, %v3485
          %vm3514 = vcmp.eq.s32.totalorder %v3512, %v3485
          %v3515 = vsel %vm3513, 1, 0
          %v3516 = vsel %vm3514, 1, 0
          %v3517 = vcvt.s32.f32 %v3515
          %v3518 = vcvt.s32.f32 %v3516
          %v3519 = vld [vmem:[#allocation4] sm:$0x3]
          %v3521 = vsel %vm3219, %v3517, 0
          %v3524 = vsel %vm3219, %v3518, 0
          %v3527 = vsel %vm3219, %v3519, 0
          %3529 = vmatprep.subr.mxu0 0.0
          %3530 = vmatpush1.xpose.msra.mxu0 0.0
          %3531 = vmatprep.subr.mxu0 0.0
          %3532 = vmatpush1.xpose.msra.mxu0 0.0
          %3533 = vmatprep.subr.mxu0 0.0
          %3534 = vmatpush1.xpose.msra.mxu0 0.0
          %3535 = vmatprep.subr.mxu0 0.0
          %3536 = vmatpush1.xpose.msra.mxu0 0.0
          %3537 = vmatprep.subr.mxu0 0.0
          %3538 = vmatpush1.xpose.msra.mxu0 0.0
          %3539 = vmatprep.subr.mxu0 0.0
          %3540 = vmatpush1.xpose.msra.mxu0 0.0
          %3541 = vmatprep.subr.mxu0 0.0
          %3542 = vmatpush1.xpose.msra.mxu0 0.0
          %3543 = vmatprep.subr.mxu0 0.0
          %3544 = vmatpush1.xpose.msra.mxu0 0.0
          %3545 = vmatprep.subr.mxu0 0.0
          %3546 = vmatpush1.xpose.msra.mxu0 0.0
          %3547 = vmatprep.subr.mxu0 0.0
          %3548 = vmatpush1.xpose.msra.mxu0 0.0
          %3549 = vmatprep.subr.mxu0 0.0
          %3550 = vmatpush1.xpose.msra.mxu0 0.0
          %3551 = vmatprep.subr.mxu0 0.0
          %3552 = vmatpush1.xpose.msra.mxu0 0.0
          %3553 = vmatprep.subr.mxu0 0.0
          %3554 = vmatpush1.xpose.msra.mxu0 0.0
          %3555 = vmatprep.subr.mxu0 0.0
          %3556 = vmatpush1.xpose.msra.mxu0 0.0
          %3557 = vmatprep.subr.mxu0 0.0
          %3558 = vmatpush1.xpose.msra.mxu0 0.0
          %3559 = vmatprep.subr.mxu0 0.0
          %3560 = vmatpush1.xpose.msra.mxu0 %v3527
          %3561 = vmatprep.subr.mxu0 0.0
          %3562 = vmatpush2.xpose.msra.mxu0 0.0
          %3563 = vmatprep.subr.mxu0 0.0
          %3564 = vmatpush2.xpose.msra.mxu0 0.0
          %3565 = vmatprep.subr.mxu0 0.0
          %3566 = vmatpush2.xpose.msra.mxu0 0.0
          %3567 = vmatprep.subr.mxu0 0.0
          %3568 = vmatpush2.xpose.msra.mxu0 0.0
          %3569 = vmatprep.subr.mxu0 0.0
          %3570 = vmatpush2.xpose.msra.mxu0 0.0
          %3571 = vmatprep.subr.mxu0 0.0
          %3572 = vmatpush2.xpose.msra.mxu0 0.0
          %3573 = vmatprep.subr.mxu0 0.0
          %3574 = vmatpush2.xpose.msra.mxu0 0.0
          %3575 = vmatprep.subr.mxu0 0.0
          %3576 = vmatpush2.xpose.msra.mxu0 0.0
          %3577 = vmatprep.subr.mxu0 0.0
          %3578 = vmatpush2.xpose.msra.mxu0 0.0
          %3579 = vmatprep.subr.mxu0 0.0
          %3580 = vmatpush2.xpose.msra.mxu0 0.0
          %3581 = vmatprep.subr.mxu0 0.0
          %3582 = vmatpush2.xpose.msra.mxu0 0.0
          %3583 = vmatprep.subr.mxu0 0.0
          %3584 = vmatpush2.xpose.msra.mxu0 0.0
          %3585 = vmatprep.subr.mxu0 0.0
          %3586 = vmatpush2.xpose.msra.mxu0 0.0
          %3587 = vmatprep.subr.mxu0 0.0
          %3588 = vmatpush2.xpose.msra.mxu0 0.0
          %3589 = vmatprep.subr.mxu0 0.0
          %3590 = vmatpush2.xpose.msra.mxu0 0.0
          %3591 = vmatprep.subr.mxu0 0.0
          %3592 = vmatpush2.xpose.msra.mxu0 0.0
          %3593 = vmatprep.mubr.f32.mxu0 0.0
          %3594 = vmatmul.mubr.f32.gmra.mxu0 %v3521
          %v3595 = vpop.f32.mrf.mxu0
          %v3596 = vadd.f32 0.0, %v3595
          %v3597 = vpop.f32.mrf.mxu0
          %3598 = vmatprep.mubr.f32.mxu0 0.0
          %3599 = vmatmul.mubr.f32.gmra.mxu0 %v3524
          %v3600 = vpop.f32.mrf.mxu0
          %v3601 = vadd.f32 0.0, %v3600
          %v3602 = vpop.f32.mrf.mxu0
          %3603 = vdwg.mxu0
          %v3604 = vld [vmem:[#allocation5] sm:$0x3]
          %3606 = vset.pattern.permute.xlu0 0
          %3607 = vperm.xlu0 %3606, %v3604
          %v3608 = vpop.permute.xlu0 %3607
          %v3609 = vsel %vm3219, %v3608, 0
          %3611 = vmatprep.subr.mxu0 0.0
          %3612 = vmatpush1.xpose.msra.mxu0 0.0
          %3613 = vmatprep.subr.mxu0 0.0
          %3614 = vmatpush1.xpose.msra.mxu0 0.0
          %3615 = vmatprep.subr.mxu0 0.0
          %3616 = vmatpush1.xpose.msra.mxu0 0.0
          %3617 = vmatprep.subr.mxu0 0.0
          %3618 = vmatpush1.xpose.msra.mxu0 0.0
          %3619 = vmatprep.subr.mxu0 0.0
          %3620 = vmatpush1.xpose.msra.mxu0 0.0
          %3621 = vmatprep.subr.mxu0 0.0
          %3622 = vmatpush1.xpose.msra.mxu0 0.0
          %3623 = vmatprep.subr.mxu0 0.0
          %3624 = vmatpush1.xpose.msra.mxu0 0.0
          %3625 = vmatprep.subr.mxu0 0.0
          %3626 = vmatpush1.xpose.msra.mxu0 0.0
          %3627 = vmatprep.subr.mxu0 0.0
          %3628 = vmatpush1.xpose.msra.mxu0 0.0
          %3629 = vmatprep.subr.mxu0 0.0
          %3630 = vmatpush1.xpose.msra.mxu0 0.0
          %3631 = vmatprep.subr.mxu0 0.0
          %3632 = vmatpush1.xpose.msra.mxu0 0.0
          %3633 = vmatprep.subr.mxu0 0.0
          %3634 = vmatpush1.xpose.msra.mxu0 0.0
          %3635 = vmatprep.subr.mxu0 0.0
          %3636 = vmatpush1.xpose.msra.mxu0 0.0
          %3637 = vmatprep.subr.mxu0 0.0
          %3638 = vmatpush1.xpose.msra.mxu0 0.0
          %3639 = vmatprep.subr.mxu0 0.0
          %3640 = vmatpush1.xpose.msra.mxu0 0.0
          %3641 = vmatprep.subr.mxu0 0.0
          %3642 = vmatpush1.xpose.msra.mxu0 %v3609
          %3643 = vmatprep.subr.mxu0 0.0
          %3644 = vmatpush2.xpose.msra.mxu0 0.0
          %3645 = vmatprep.subr.mxu0 0.0
          %3646 = vmatpush2.xpose.msra.mxu0 0.0
          %3647 = vmatprep.subr.mxu0 0.0
          %3648 = vmatpush2.xpose.msra.mxu0 0.0
          %3649 = vmatprep.subr.mxu0 0.0
          %3650 = vmatpush2.xpose.msra.mxu0 0.0
          %3651 = vmatprep.subr.mxu0 0.0
          %3652 = vmatpush2.xpose.msra.mxu0 0.0
          %3653 = vmatprep.subr.mxu0 0.0
          %3654 = vmatpush2.xpose.msra.mxu0 0.0
          %3655 = vmatprep.subr.mxu0 0.0
          %3656 = vmatpush2.xpose.msra.mxu0 0.0
          %3657 = vmatprep.subr.mxu0 0.0
          %3658 = vmatpush2.xpose.msra.mxu0 0.0
          %3659 = vmatprep.subr.mxu0 0.0
          %3660 = vmatpush2.xpose.msra.mxu0 0.0
          %3661 = vmatprep.subr.mxu0 0.0
          %3662 = vmatpush2.xpose.msra.mxu0 0.0
          %3663 = vmatprep.subr.mxu0 0.0
          %3664 = vmatpush2.xpose.msra.mxu0 0.0
          %3665 = vmatprep.subr.mxu0 0.0
          %3666 = vmatpush2.xpose.msra.mxu0 0.0
          %3667 = vmatprep.subr.mxu0 0.0
          %3668 = vmatpush2.xpose.msra.mxu0 0.0
          %3669 = vmatprep.subr.mxu0 0.0
          %3670 = vmatpush2.xpose.msra.mxu0 0.0
          %3671 = vmatprep.subr.mxu0 0.0
          %3672 = vmatpush2.xpose.msra.mxu0 0.0
          %3673 = vmatprep.subr.mxu0 0.0
          %3674 = vmatpush2.xpose.msra.mxu0 0.0
          %3675 = vmatprep.mubr.f32.mxu0 0.0
          %3676 = vmatmul.mubr.f32.gmra.mxu0 %v3521
          %v3677 = vpop.f32.mrf.mxu0
          %v3678 = vadd.f32 0.0, %v3677
          %v3679 = vpop.f32.mrf.mxu0
          %3680 = vmatprep.mubr.f32.mxu0 0.0
          %3681 = vmatmul.mubr.f32.gmra.mxu0 %v3524
          %v3682 = vpop.f32.mrf.mxu0
          %v3683 = vadd.f32 0.0, %v3682
          %v3684 = vpop.f32.mrf.mxu0
          %3685 = vdwg.mxu0
          %3686 = vst [vmem:[%s26] sm:$0xff] 0.0
          %3687 = vst [vmem:[%s26 + $0x8] sm:$0xff] 0.0
          %vm3688 = vcmask 15360
          %3689 = vst.msk [vmem:[%s26] sm:$0xff] %vm3688, %v3596
          %3690 = vst.msk [vmem:[%s26 + $0x8] sm:$0xff] %vm3688, %v3601
          %3693 = vrot.lane.b32.xlu0 %v3678, 2
          %v3694 = vpop.permute.xlu0 %3693
          %3695 = vrot.lane.b32.xlu0 %v3683, 2
          %v3696 = vpop.permute.xlu0 %3695
          %vm3699 = vcmask 31760
          %3700 = vst.msk [vmem:[%s26] sm:$0xff] %vm3699, %v3694
          %3701 = vst.msk [vmem:[%s26 + $0x8] sm:$0xff] %vm3699, %v3696
        $region210: #{densecl_forward.1} parent=193 // pred_fallthru
          _
        // Predicated region
        $region211: #{densecl_forward.1} parent=193 // pred_check
          %p3702 = pneg %p586
        $region212: #{densecl_forward.1} parent=193 // pred_check_branch
          %3704 = sbr.rel (%p3702) target = $region214
        $region213: #{densecl_forward.1} parent=193 // pred_region
          _
        $region214: #{densecl_forward.1} parent=193 // pred_fallthru
          _
        // Predicated region
        $region215: #{densecl_forward.1} parent=193 // pred_check
          %p3705 = pneg %p607
        $region216: #{densecl_forward.1} parent=193 // pred_check_branch
          %3707 = sbr.rel (%p3705) target = $region218
        $region217: #{densecl_forward.1} parent=193 // pred_region
          _
        $region218: #{densecl_forward.1} parent=193 // pred_fallthru
          _
        // Predicated region
        $region219: #{densecl_forward.1} parent=193 // pred_check
          %p3708 = pneg %p586
        $region220: #{densecl_forward.1} parent=193 // pred_check_branch
          %3710 = sbr.rel (%p3708) target = $region222
        $region221: #{densecl_forward.1} parent=193 // pred_region
          _
        $region222: #{densecl_forward.1} parent=193 // pred_fallthru
          _
        // Predicated region
        $region223: #{densecl_forward.1} parent=193 // pred_check
          %p3711 = pneg %p607
        $region224: #{densecl_forward.1} parent=193 // pred_check_branch
          %3713 = sbr.rel (%p3711) target = $region226
        $region225: #{densecl_forward.1} parent=193 // pred_region
          _
        $region226: #{densecl_forward.1} parent=193 // pred_fallthru
          _
      $region194: #{densecl_forward.1} parent=5 // pred_fallthru
        _
      %p3714 = scmp.le.s32.totalorder 2, %s33
      // Predicated region
      $region227: #{densecl_forward.1} parent=5 // pred_check
        %p3715 = pneg %p3714
      $region228: #{densecl_forward.1} parent=5 // pred_check_branch
        %3717 = sbr.rel (%p3715) target = $region230
      $region229: #{densecl_forward.1} parent=5 // pred_region
        %s3718 = ssub.s32 %s33, 2
      $region230: #{densecl_forward.1} parent=5 // pred_fallthru
        _
    $region6: #{densecl_forward.1} parent=1 // loop_footer
      %s37 = sadd.s32 1, %s33
    $region7: #{densecl_forward.1} parent=1 // loop_footer_branch
      %32 = sbr.rel target = $region3
    $region8: #{densecl_forward.1} parent=1 // loop_exit
      _

</llo_original>
